<compile_context>
chip_gen: v7x
topology: tpu7x:2x2x1
jax: 0.10.0
libtpu: 0.0.40
codegen_flags: <defaults>
</compile_context>

<pallas_src>
import jax
import jax.numpy as jnp
from jax import lax
from jax.experimental import pallas as pl
from jax.experimental.pallas import tpu as pltpu


def episodic_memory_kernel(
    frames_ref, q_ref, m_ref,
    z1qm_ref, z1abs_ref,          # bf16 (2H, H) each: z1 rows for [f*q|f*m] and [|f-q| | |f-m|]
    fw_ref,                       # bf16 (H, 2H) fused fact-side (Wr | W)
    cw_ref,                       # f32  (H, 2H) fused C-side    (Ur | U)
    nmm_ref, nmc_ref, nmq_ref,    # f32  (H, H) next_mem splits for [m | C | q]
    bias_ref,                     # f32  (5, 2H) packed: z1_b | (z2_w, z2_b) | fb | cb | nm_b
    out_ref,
    fact_scr,                     # VMEM (T, B, 2H) f32: hoisted fact-side pre-activations
):
    f32 = jnp.float32
    bf16 = jnp.bfloat16
    B, T, H = frames_ref.shape
    BT = B * T

    frames = frames_ref[...]                       # (B, T, H) bf16
    q = q_ref[...]                                 # (B, H) f32
    m = m_ref[...]                                 # (B, H) f32
    qb = q.astype(bf16)[:, None, :]                # (B, 1, H) bf16
    mb = m.astype(bf16)[:, None, :]

    # interaction terms in bf16 (halves temp VMEM, feeds the MXU at full rate)
    fq = (frames * qb).reshape(BT, H)
    fm = (frames * mb).reshape(BT, H)
    aq = jnp.abs(frames - qb).reshape(BT, H)
    am = jnp.abs(frames - mb).reshape(BT, H)

    # packed small operands
    z1_b = bias_ref[0:1, :H]
    z2_w = bias_ref[1:2, :H]
    z2_b = bias_ref[1:2, H:H + 1]                  # (1, 1)
    fb = bias_ref[2:3, :]                          # (1, 2H) = [wr_b + ur_b | w_b]
    cb = bias_ref[3:4, :]                          # (1, 2H) = [0 | u_b]
    nm_b = bias_ref[4:5, :H]

    # ---- make_interaction: z1 as two K=2H matmuls (f32 accumulation) ----------
    pre = (
        jnp.dot(jnp.concatenate([fq, fm], axis=1), z1qm_ref[...],
                preferred_element_type=f32)
        + jnp.dot(jnp.concatenate([aq, am], axis=1), z1abs_ref[...],
                  preferred_element_type=f32)
        + z1_b
    )                                              # (BT, H) f32
    g1 = jnp.tanh(pre)
    # z2 is Linear(H, 1): elementwise mul + lane reduction
    logits = jnp.sum(g1 * z2_w, axis=1).reshape(B, T) + z2_b
    mx = jnp.max(logits, axis=1, keepdims=True)
    e = jnp.exp(logits - mx)
    G = e / jnp.sum(e, axis=1, keepdims=True)      # (B, T) softmax over T (f32)

    # ---- AttentionGRU: fact-side matmul hoisted, staged in (T, B, 2H) order ---
    f2d = frames.reshape(BT, H)                    # bf16
    fact_pre = jnp.dot(f2d, fw_ref[...], preferred_element_type=f32) + fb
    fact_scr[...] = jnp.transpose(fact_pre.reshape(B, T, 2 * H), (1, 0, 2))

    cw = cw_ref[...]                               # (H, 2H) f32
    t_iota = lax.broadcasted_iota(jnp.int32, (1, T), 1)

    two_chain = (B % 2 == 0) and (B >= 2)
    nB = B // 2 if two_chain else B
    cbB = jnp.broadcast_to(cb, (nB, 2 * H))        # hoisted bias broadcast
    zeroC = jnp.zeros((nB, H), f32)

    def cell(fp, cp, g, C):
        r = jax.nn.sigmoid(fp[:, :H] + cp[:, :H])
        h_t = jnp.tanh(fp[:, H:] + r * cp[:, H:])
        return g * h_t + (1.0 - g) * C

    def gate_at(sid):
        # (B, 1) gate at step sid via masked lane-reduce (no per-step staging)
        return jnp.sum(jnp.where(t_iota == sid, G, 0.0), axis=1, keepdims=True)

    unroll = T if T <= 8 else 2

    if two_chain:
        # Two independent half-batch chains: MXU push of one chain overlaps the
        # EUP (sigmoid/tanh) latency of the other.
        def gru_step(sid, carry):
            C0, C1 = carry
            fp = fact_scr[sid]                     # (B, 2H) contiguous read
            g = gate_at(sid)
            cp0 = jnp.dot(C0, cw, preferred_element_type=f32) + cbB
            cp1 = jnp.dot(C1, cw, preferred_element_type=f32) + cbB
            C0n = cell(fp[:nB], cp0, g[:nB], C0)
            C1n = cell(fp[nB:], cp1, g[nB:], C1)
            return (C0n, C1n)

        C0, C1 = lax.fori_loop(0, T, gru_step, (zeroC, zeroC), unroll=unroll)
        C = jnp.concatenate([C0, C1], axis=0)
    else:
        def gru_step(sid, C):
            fp = fact_scr[sid]
            g = gate_at(sid)
            cp = jnp.dot(C, cw, preferred_element_type=f32) + cbB
            return cell(fp, cp, g, C)

        C = lax.fori_loop(0, T, gru_step, zeroC, unroll=unroll)

    # ---- memory update: next_mem as three (H,H) matmuls + relu ----------------
    nm = jnp.maximum(
        jnp.dot(m, nmm_ref[...], preferred_element_type=f32)
        + jnp.dot(C, nmc_ref[...], preferred_element_type=f32)
        + jnp.dot(q, nmq_ref[...], preferred_element_type=f32)
        + nm_b,
        0.0,
    )
    out_ref[...] = nm.astype(out_ref.dtype)


def init_params(key, hidden_size):
    """Deterministic init matching init_weights(): N(0, 0.02) weights, zero bias."""
    H = hidden_size
    std = 0.02
    ks = jax.random.split(key, 7)

    def lin_w(k, fan_in, fan_out):
        # stored as (in, out) = PyTorch weight.T
        return jax.random.normal(k, (fan_in, fan_out), jnp.float32) * std

    zeros = lambda *s: jnp.zeros(s, jnp.float32)
    return {
        "z1_w": lin_w(ks[0], 4 * H, H), "z1_b": zeros(1, H),
        "z2_w": lin_w(ks[1], 1, H),     "z2_b": zeros(1, 1),   # z2: Linear(H,1) kept as (1,H) row
        "wr_w": lin_w(ks[2], H, H),     "wr_b": zeros(1, H),
        "ur_w": lin_w(ks[3], H, H),     "ur_b": zeros(1, H),
        "w_w":  lin_w(ks[4], H, H),     "w_b":  zeros(1, H),
        "u_w":  lin_w(ks[5], H, H),     "u_b":  zeros(1, H),
        "nm_w": lin_w(ks[6], 3 * H, H), "nm_b": zeros(1, H),
    }


def _vmem_capacity_bytes():
    try:
        return int(pltpu.get_tpu_info().vmem_capacity_bytes)
    except Exception:
        return 64 << 20  # conservative default (v7x per-TensorCore VMEM)


def _pick_batch_tile(B, T, H):
    """VMEM-budget-aware batch tile; returns (b_tile, padded_B, vmem_limit_bytes)."""
    cap = _vmem_capacity_bytes()
    vmem_limit = int(min(cap * 3 // 4, 112 << 20))
    budget = vmem_limit * 2 // 3
    # rough per-batch-row bytes: bf16 frames block (double-buffered) + f32 fact_scr
    # + bf16 interaction temps + f32 pre/g1/fact_pre temps + misc
    per_row = 44 * T * H + 256 * H + 4096
    cap_rows = max(1, budget // per_row)
    if B >= 16:
        # keep >= 2 grid steps so ("parallel",) can shard batch across v7x's 2 TCs
        cap_rows = min(cap_rows, max(16, (B // 2) // 16 * 16))
    if B <= cap_rows:
        return B, B, vmem_limit
    b_tile = max(16, (int(cap_rows) // 16) * 16)
    Bp = ((B + b_tile - 1) // b_tile) * b_tile
    return b_tile, Bp, vmem_limit


def _fuse_params(p, H):
    z1 = p["z1_w"]     # (4H, H): rows ordered [f*q | f*m | |f-q| | |f-m|]
    nm = p["nm_w"]     # (3H, H): rows ordered [m | C | q]
    bias_pack = jnp.zeros((5, 2 * H), jnp.float32)
    bias_pack = bias_pack.at[0, :H].set(p["z1_b"][0])
    bias_pack = bias_pack.at[1, :H].set(p["z2_w"][0])
    bias_pack = bias_pack.at[1, H].set(p["z2_b"][0, 0])
    bias_pack = bias_pack.at[2, :H].set(p["wr_b"][0] + p["ur_b"][0])
    bias_pack = bias_pack.at[2, H:].set(p["w_b"][0])
    bias_pack = bias_pack.at[3, H:].set(p["u_b"][0])
    bias_pack = bias_pack.at[4, :H].set(p["nm_b"][0])
    bf16 = jnp.bfloat16
    return dict(
        z1_qm=z1[: 2 * H].astype(bf16),
        z1_abs=z1[2 * H:].astype(bf16),
        fw=jnp.concatenate([p["wr_w"], p["w_w"]], axis=1).astype(bf16),   # (H, 2H)
        cw=jnp.concatenate([p["ur_w"], p["u_w"]], axis=1),                # (H, 2H) f32
        nm_m=nm[:H], nm_c=nm[H:2 * H], nm_q=nm[2 * H:],
        bias=bias_pack,
    )


@jax.jit
def episodic_memory(frames, questions, prevM, params):
    B, T, H = frames.shape
    q = questions.reshape(B, H).astype(jnp.float32)
    m = prevM.reshape(B, H).astype(jnp.float32)
    fp = _fuse_params(params, H)

    b_tile, Bp, vmem_limit = _pick_batch_tile(B, T, H)

    frames_b = frames.astype(jnp.bfloat16)
    if Bp != B:
        frames_b = jnp.pad(frames_b, ((0, Bp - B), (0, 0), (0, 0)))
        q = jnp.pad(q, ((0, Bp - B), (0, 0)))
        m = jnp.pad(m, ((0, Bp - B), (0, 0)))

    weights = (fp["z1_qm"], fp["z1_abs"], fp["fw"], fp["cw"],
               fp["nm_m"], fp["nm_c"], fp["nm_q"], fp["bias"])

    grid = (Bp // b_tile,)
    rep = lambda i: (0, 0)
    in_specs = (
        [pl.BlockSpec((b_tile, T, H), lambda i: (i, 0, 0)),
         pl.BlockSpec((b_tile, H), lambda i: (i, 0)),
         pl.BlockSpec((b_tile, H), lambda i: (i, 0))]
        + [pl.BlockSpec(w.shape, rep) for w in weights]
    )
    out_spec = pl.BlockSpec((b_tile, H), lambda i: (i, 0))

    out2d = pl.pallas_call(
        episodic_memory_kernel,
        out_shape=jax.ShapeDtypeStruct((Bp, H), jnp.float32),
        grid_spec=pltpu.PrefetchScalarGridSpec(
            num_scalar_prefetch=0,
            grid=grid,
            in_specs=in_specs,
            out_specs=out_spec,
            scratch_shapes=[
                pltpu.VMEM((T, b_tile, 2 * H), jnp.float32),  # hoisted fact-side pre-acts
            ],
        ),
        compiler_params=pltpu.CompilerParams(
            dimension_semantics=("parallel",),
            vmem_limit_bytes=vmem_limit,
        ),
    )(frames_b, q, m, *weights)
    return out2d[:B, None, :]                      # (B, 1, H)


def episodic_memory_ref(frames, questions, prevM, p):
    """Pure-JAX f32 reference mirroring the PyTorch forward exactly."""
    B, T, H = frames.shape
    q = questions.reshape(B, H)
    m = prevM.reshape(B, H)
    qe, me = q[:, None, :], m[:, None, :]
    z = jnp.concatenate(
        [frames * qe, frames * me, jnp.abs(frames - qe), jnp.abs(frames - me)],
        axis=2,
    ).reshape(B * T, 4 * H)
    g1 = jnp.tanh(z @ p["z1_w"] + p["z1_b"])
    logits = (g1 * p["z2_w"]).sum(1) + p["z2_b"][0, 0]
    G = jax.nn.softmax(logits.reshape(B, T), axis=1)
    C = jnp.zeros((B, H), jnp.float32)
    for sid in range(T):
        fact = frames[:, sid, :]
        g = G[:, sid][:, None]
        r = jax.nn.sigmoid(fact @ p["wr_w"] + p["wr_b"] + C @ p["ur_w"] + p["ur_b"])
        h_t = jnp.tanh(fact @ p["w_w"] + p["w_b"] + r * (C @ p["u_w"] + p["u_b"]))
        C = g * h_t + (1.0 - g) * C
    concat = jnp.concatenate([m, C, q], axis=1)
    return jax.nn.relu(concat @ p["nm_w"] + p["nm_b"])[:, None, :]


if __name__ == "__main__":
    B, T, H = 2, 8, 32
    key = jax.random.PRNGKey(0)
    k_f, k_q, k_m, k_p = jax.random.split(key, 4)

    frames = jax.random.normal(k_f, (B, T, H), jnp.float32)
    questions = jax.random.normal(k_q, (B, H), jnp.float32)      # (B, H)
    prevM = jax.random.normal(k_m, (B, 1, H), jnp.float32)       # (B, 1, H)
    params = init_params(k_p, H)

    out = jax.block_until_ready(episodic_memory(frames, questions, prevM, params))
    ref = episodic_memory_ref(frames, questions, prevM, params)

    assert out.shape == (B, 1, H)
    # bf16 MXU operands (frames / z1 / Wr|W) with f32 accumulation -> relaxed tolerance
    assert jnp.allclose(out, ref, atol=1e-2, rtol=1e-2), "mismatch vs JAX reference"

    print("KERNEL_OK")
</pallas_src>

<mosaic_0001>
module attributes {stable_mosaic.version = 11 : i64} {
  func.func @episodic_memory_kernel(%arg0: i32, %arg1: memref<2x8x32xbf16, #tpu.memory_space<vmem>>, %arg2: memref<2x32xf32, #tpu.memory_space<vmem>>, %arg3: memref<2x32xf32, #tpu.memory_space<vmem>>, %arg4: memref<64x32xbf16, #tpu.memory_space<vmem>>, %arg5: memref<64x32xbf16, #tpu.memory_space<vmem>>, %arg6: memref<32x64xbf16, #tpu.memory_space<vmem>>, %arg7: memref<32x64xf32, #tpu.memory_space<vmem>>, %arg8: memref<32x32xf32, #tpu.memory_space<vmem>>, %arg9: memref<32x32xf32, #tpu.memory_space<vmem>>, %arg10: memref<32x32xf32, #tpu.memory_space<vmem>>, %arg11: memref<5x64xf32, #tpu.memory_space<vmem>>, %arg12: memref<2x32xf32, #tpu.memory_space<vmem>>, %arg13: memref<8x2x64xf32, #tpu.memory_space<vmem>>) attributes {dimension_semantics = [#tpu.dimension_semantics<parallel>], iteration_bounds = array<i64: 1>, scalar_prefetch = 0 : i64, scratch_operands = 1 : i64, tpu.core_type = #tpu.core_type<tc>, window_params = [{transform_indices = @transform_0, window_bounds = array<i64: 2, 8, 32>}, {transform_indices = @transform_1, window_bounds = array<i64: 2, 32>}, {transform_indices = @transform_2, window_bounds = array<i64: 2, 32>}, {pipeline_mode = #tpu.pipeline_mode<synchronous>, transform_indices = @transform_3, window_bounds = array<i64: 64, 32>}, {pipeline_mode = #tpu.pipeline_mode<synchronous>, transform_indices = @transform_4, window_bounds = array<i64: 64, 32>}, {pipeline_mode = #tpu.pipeline_mode<synchronous>, transform_indices = @transform_5, window_bounds = array<i64: 32, 64>}, {pipeline_mode = #tpu.pipeline_mode<synchronous>, transform_indices = @transform_6, window_bounds = array<i64: 32, 64>}, {pipeline_mode = #tpu.pipeline_mode<synchronous>, transform_indices = @transform_7, window_bounds = array<i64: 32, 32>}, {pipeline_mode = #tpu.pipeline_mode<synchronous>, transform_indices = @transform_8, window_bounds = array<i64: 32, 32>}, {pipeline_mode = #tpu.pipeline_mode<synchronous>, transform_indices = @transform_9, window_bounds = array<i64: 32, 32>}, {pipeline_mode = #tpu.pipeline_mode<synchronous>, transform_indices = @transform_10, window_bounds = array<i64: 5, 64>}, {transform_indices = @transform_11, window_bounds = array<i64: 2, 32>}]} {
    %c0 = arith.constant 0 : index
    %c0_0 = arith.constant 0 : index
    %c0_1 = arith.constant 0 : index
    %0 = vector.load %arg1[%c0, %c0_0, %c0_1] : memref<2x8x32xbf16, #tpu.memory_space<vmem>>, vector<2x8x32xbf16>
    %c0_2 = arith.constant 0 : index
    %c0_3 = arith.constant 0 : index
    %1 = vector.load %arg2[%c0_2, %c0_3] : memref<2x32xf32, #tpu.memory_space<vmem>>, vector<2x32xf32>
    %c0_4 = arith.constant 0 : index
    %c0_5 = arith.constant 0 : index
    %2 = vector.load %arg3[%c0_4, %c0_5] : memref<2x32xf32, #tpu.memory_space<vmem>>, vector<2x32xf32>
    %3 = arith.truncf %1 : vector<2x32xf32> to vector<2x32xbf16>
    %4 = vector.shape_cast %3 : vector<2x32xbf16> to vector<2x1x32xbf16>
    %5 = arith.truncf %2 : vector<2x32xf32> to vector<2x32xbf16>
    %6 = vector.shape_cast %5 : vector<2x32xbf16> to vector<2x1x32xbf16>
    %7 = vector.broadcast %4 : vector<2x1x32xbf16> to vector<2x8x32xbf16>
    %8 = arith.mulf %0, %7 : vector<2x8x32xbf16>
    %9 = vector.shape_cast %8 : vector<2x8x32xbf16> to vector<16x32xbf16>
    %10 = vector.broadcast %6 : vector<2x1x32xbf16> to vector<2x8x32xbf16>
    %11 = arith.mulf %0, %10 : vector<2x8x32xbf16>
    %12 = vector.shape_cast %11 : vector<2x8x32xbf16> to vector<16x32xbf16>
    %13 = vector.broadcast %4 : vector<2x1x32xbf16> to vector<2x8x32xbf16>
    %14 = arith.subf %0, %13 : vector<2x8x32xbf16>
    %15 = math.absf %14 : vector<2x8x32xbf16>
    %16 = vector.shape_cast %15 : vector<2x8x32xbf16> to vector<16x32xbf16>
    %17 = vector.broadcast %6 : vector<2x1x32xbf16> to vector<2x8x32xbf16>
    %18 = arith.subf %0, %17 : vector<2x8x32xbf16>
    %19 = math.absf %18 : vector<2x8x32xbf16>
    %20 = vector.shape_cast %19 : vector<2x8x32xbf16> to vector<16x32xbf16>
    %c0_6 = arith.constant 0 : index
    %c0_7 = arith.constant 0 : index
    %21 = vector.load %arg11[%c0_6, %c0_7] : memref<5x64xf32, #tpu.memory_space<vmem>>, vector<1x32xf32>
    %c1 = arith.constant 1 : index
    %c0_8 = arith.constant 0 : index
    %22 = vector.load %arg11[%c1, %c0_8] : memref<5x64xf32, #tpu.memory_space<vmem>>, vector<1x32xf32>
    %c1_9 = arith.constant 1 : index
    %c32 = arith.constant 32 : index
    %23 = vector.load %arg11[%c1_9, %c32] : memref<5x64xf32, #tpu.memory_space<vmem>>, vector<1x1xf32>
    %c2 = arith.constant 2 : index
    %c0_10 = arith.constant 0 : index
    %24 = vector.load %arg11[%c2, %c0_10] : memref<5x64xf32, #tpu.memory_space<vmem>>, vector<1x64xf32>
    %c3 = arith.constant 3 : index
    %c0_11 = arith.constant 0 : index
    %25 = vector.load %arg11[%c3, %c0_11] : memref<5x64xf32, #tpu.memory_space<vmem>>, vector<1x64xf32>
    %c4 = arith.constant 4 : index
    %c0_12 = arith.constant 0 : index
    %26 = vector.load %arg11[%c4, %c0_12] : memref<5x64xf32, #tpu.memory_space<vmem>>, vector<1x32xf32>
    %27 = tpu.concatenate %9, %12 in 1 : vector<16x32xbf16>, vector<16x32xbf16> -> vector<16x64xbf16>
    %c0_13 = arith.constant 0 : index
    %c0_14 = arith.constant 0 : index
    %28 = vector.load %arg4[%c0_13, %c0_14] : memref<64x32xbf16, #tpu.memory_space<vmem>>, vector<64x32xbf16>
    %cst = arith.constant dense<0.000000e+00> : vector<16x32xf32>
    %29 = tpu.matmul %27, %28, %cst {dimension_numbers = #tpu.dot_dimension_numbers<[1], [0], [0], [1], [0, 0, 1, 1], [], []>} : vector<16x64xbf16>, vector<64x32xbf16>, vector<16x32xf32> -> vector<16x32xf32>
    %30 = tpu.concatenate %16, %20 in 1 : vector<16x32xbf16>, vector<16x32xbf16> -> vector<16x64xbf16>
    %c0_15 = arith.constant 0 : index
    %c0_16 = arith.constant 0 : index
    %31 = vector.load %arg5[%c0_15, %c0_16] : memref<64x32xbf16, #tpu.memory_space<vmem>>, vector<64x32xbf16>
    %cst_17 = arith.constant dense<0.000000e+00> : vector<16x32xf32>
    %32 = tpu.matmul %30, %31, %cst_17 {dimension_numbers = #tpu.dot_dimension_numbers<[1], [0], [0], [1], [0, 0, 1, 1], [], []>} : vector<16x64xbf16>, vector<64x32xbf16>, vector<16x32xf32> -> vector<16x32xf32>
    %33 = arith.addf %29, %32 : vector<16x32xf32>
    %34 = vector.broadcast %21 : vector<1x32xf32> to vector<16x32xf32>
    %35 = arith.addf %33, %34 : vector<16x32xf32>
    %36 = math.tanh %35 : vector<16x32xf32>
    %37 = vector.broadcast %22 : vector<1x32xf32> to vector<16x32xf32>
    %38 = arith.mulf %36, %37 : vector<16x32xf32>
    %cst_18 = arith.constant dense<0.000000e+00> : vector<16xf32>
    %39 = vector.multi_reduction <add>, %38, %cst_18 [1] : vector<16x32xf32> to vector<16xf32>
    %40 = vector.shape_cast %39 : vector<16xf32> to vector<2x8xf32>
    %41 = vector.broadcast %23 : vector<1x1xf32> to vector<2x8xf32>
    %42 = arith.addf %40, %41 : vector<2x8xf32>
    %cst_19 = arith.constant dense<0xFF800000> : vector<2xf32>
    %43 = vector.multi_reduction <maximumf>, %42, %cst_19 [1] : vector<2x8xf32> to vector<2xf32>
    %44 = vector.shape_cast %43 : vector<2xf32> to vector<2x1xf32>
    %45 = vector.broadcast %44 : vector<2x1xf32> to vector<2x8xf32>
    %46 = arith.subf %42, %45 : vector<2x8xf32>
    %47 = math.exp %46 : vector<2x8xf32>
    %cst_20 = arith.constant dense<0.000000e+00> : vector<2xf32>
    %48 = vector.multi_reduction <add>, %47, %cst_20 [1] : vector<2x8xf32> to vector<2xf32>
    %49 = vector.shape_cast %48 : vector<2xf32> to vector<2x1xf32>
    %50 = vector.broadcast %49 : vector<2x1xf32> to vector<2x8xf32>
    %51 = arith.divf %47, %50 : vector<2x8xf32>
    %52 = vector.shape_cast %0 : vector<2x8x32xbf16> to vector<16x32xbf16>
    %c0_21 = arith.constant 0 : index
    %c0_22 = arith.constant 0 : index
    %53 = vector.load %arg6[%c0_21, %c0_22] : memref<32x64xbf16, #tpu.memory_space<vmem>>, vector<32x64xbf16>
    %cst_23 = arith.constant dense<0.000000e+00> : vector<16x64xf32>
    %54 = tpu.matmul %52, %53, %cst_23 {dimension_numbers = #tpu.dot_dimension_numbers<[1], [0], [0], [1], [0, 0, 1, 1], [], []>} : vector<16x32xbf16>, vector<32x64xbf16>, vector<16x64xf32> -> vector<16x64xf32>
    %55 = vector.broadcast %24 : vector<1x64xf32> to vector<16x64xf32>
    %56 = arith.addf %54, %55 : vector<16x64xf32>
    %57 = vector.shape_cast %56 : vector<16x64xf32> to vector<2x8x64xf32>
    %58 = tpu.transpose %57, [1, 0, 2] : vector<2x8x64xf32> -> vector<8x2x64xf32>
    %c0_24 = arith.constant 0 : index
    %c0_25 = arith.constant 0 : index
    %c0_26 = arith.constant 0 : index
    %59 = vector.load %arg13[%c0_24, %c0_25, %c0_26] : memref<8x2x64xf32, #tpu.memory_space<vmem>>, vector<8x2x64xf32>
    tpu.vector_store %arg13[%c0_24, %c0_25, %c0_26], %58 {strides = array<i32>} : memref<8x2x64xf32, #tpu.memory_space<vmem>>, vector<8x2x64xf32>,
    %c0_27 = arith.constant 0 : index
    %c0_28 = arith.constant 0 : index
    %60 = vector.load %arg7[%c0_27, %c0_28] : memref<32x64xf32, #tpu.memory_space<vmem>>, vector<32x64xf32>
    %61 = tpu.iota {dimensions = array<i32: 1>} : vector<1x8xi32>
    %cst_29 = arith.constant 0.000000e+00 : f32
    %62 = vector.broadcast %cst_29 : f32 to vector<1x32xf32>
    %c0_i32 = arith.constant 0 : i32
    %63 = arith.index_cast %c0_i32 : i32 to index
    %c0_30 = arith.constant 0 : index
    %c0_31 = arith.constant 0 : index
    %64 = vector.load %arg13[%63, %c0_30, %c0_31] : memref<8x2x64xf32, #tpu.memory_space<vmem>>, vector<1x2x64xf32>
    %65 = vector.shape_cast %64 : vector<1x2x64xf32> to vector<2x64xf32>
    %66 = vector.broadcast %c0_i32 : i32 to vector<1x8xi32>
    %67 = arith.cmpi eq, %61, %66 : vector<1x8xi32>
    %cst_32 = arith.constant 0.000000e+00 : f32
    %68 = vector.shape_cast %67 : vector<1x8xi1> to vector<1x8xi1>
    %69 = vector.broadcast %68 : vector<1x8xi1> to vector<2x8xi1>
    %70 = vector.broadcast %cst_32 : f32 to vector<2x8xf32>
    %71 = arith.select %69, %51, %70 : vector<2x8xi1>, vector<2x8xf32>
    %cst_33 = arith.constant dense<0.000000e+00> : vector<2xf32>
    %72 = vector.multi_reduction <add>, %71, %cst_33 [1] : vector<2x8xf32> to vector<2xf32>
    %73 = vector.shape_cast %72 : vector<2xf32> to vector<2x1xf32>
    %cst_34 = arith.constant dense<0.000000e+00> : vector<1x64xf32>
    %74 = tpu.matmul %62, %60, %cst_34 {dimension_numbers = #tpu.dot_dimension_numbers<[1], [0], [0], [1], [0, 0, 1, 1], [], []>} : vector<1x32xf32>, vector<32x64xf32>, vector<1x64xf32> -> vector<1x64xf32>
    %75 = arith.addf %74, %25 : vector<1x64xf32>
    %cst_35 = arith.constant dense<0.000000e+00> : vector<1x64xf32>
    %76 = tpu.matmul %62, %60, %cst_35 {dimension_numbers = #tpu.dot_dimension_numbers<[1], [0], [0], [1], [0, 0, 1, 1], [], []>} : vector<1x32xf32>, vector<32x64xf32>, vector<1x64xf32> -> vector<1x64xf32>
    %77 = arith.addf %76, %25 : vector<1x64xf32>
    %78 = vector.extract_strided_slice %65 {offsets = [0, 0], sizes = [1, 64], strides = [1, 1]} : vector<2x64xf32> to vector<1x64xf32>
    %79 = vector.extract_strided_slice %73 {offsets = [0, 0], sizes = [1, 1], strides = [1, 1]} : vector<2x1xf32> to vector<1x1xf32>
    %80 = vector.extract_strided_slice %78 {offsets = [0, 0], sizes = [1, 32], strides = [1, 1]} : vector<1x64xf32> to vector<1x32xf32>
    %81 = vector.extract_strided_slice %75 {offsets = [0, 0], sizes = [1, 32], strides = [1, 1]} : vector<1x64xf32> to vector<1x32xf32>
    %82 = arith.addf %80, %81 : vector<1x32xf32>
    %83 = arith.negf %82 : vector<1x32xf32>
    %84 = math.exp %83 : vector<1x32xf32>
    %cst_36 = arith.constant 1.000000e+00 : f32
    %85 = vector.broadcast %cst_36 : f32 to vector<1x32xf32>
    %86 = arith.addf %85, %84 : vector<1x32xf32>
    %87 = arith.divf %85, %86 : vector<1x32xf32>
    %88 = vector.extract_strided_slice %78 {offsets = [0, 32], sizes = [1, 32], strides = [1, 1]} : vector<1x64xf32> to vector<1x32xf32>
    %89 = vector.extract_strided_slice %75 {offsets = [0, 32], sizes = [1, 32], strides = [1, 1]} : vector<1x64xf32> to vector<1x32xf32>
    %90 = arith.mulf %87, %89 : vector<1x32xf32>
    %91 = arith.addf %88, %90 : vector<1x32xf32>
    %92 = math.tanh %91 : vector<1x32xf32>
    %93 = vector.broadcast %79 : vector<1x1xf32> to vector<1x32xf32>
    %94 = arith.mulf %93, %92 : vector<1x32xf32>
    %cst_37 = arith.constant 1.000000e+00 : f32
    %95 = vector.broadcast %cst_37 : f32 to vector<1x1xf32>
    %96 = arith.subf %95, %79 : vector<1x1xf32>
    %97 = vector.broadcast %96 : vector<1x1xf32> to vector<1x32xf32>
    %98 = arith.mulf %97, %62 : vector<1x32xf32>
    %99 = arith.addf %94, %98 : vector<1x32xf32>
    %100 = vector.extract_strided_slice %65 {offsets = [1, 0], sizes = [1, 64], strides = [1, 1]} : vector<2x64xf32> to vector<1x64xf32>
    %101 = vector.extract_strided_slice %73 {offsets = [1, 0], sizes = [1, 1], strides = [1, 1]} : vector<2x1xf32> to vector<1x1xf32>
    %102 = vector.extract_strided_slice %100 {offsets = [0, 0], sizes = [1, 32], strides = [1, 1]} : vector<1x64xf32> to vector<1x32xf32>
    %103 = vector.extract_strided_slice %77 {offsets = [0, 0], sizes = [1, 32], strides = [1, 1]} : vector<1x64xf32> to vector<1x32xf32>
    %104 = arith.addf %102, %103 : vector<1x32xf32>
    %105 = arith.negf %104 : vector<1x32xf32>
    %106 = math.exp %105 : vector<1x32xf32>
    %cst_38 = arith.constant 1.000000e+00 : f32
    %107 = vector.broadcast %cst_38 : f32 to vector<1x32xf32>
    %108 = arith.addf %107, %106 : vector<1x32xf32>
    %109 = arith.divf %107, %108 : vector<1x32xf32>
    %110 = vector.extract_strided_slice %100 {offsets = [0, 32], sizes = [1, 32], strides = [1, 1]} : vector<1x64xf32> to vector<1x32xf32>
    %111 = vector.extract_strided_slice %77 {offsets = [0, 32], sizes = [1, 32], strides = [1, 1]} : vector<1x64xf32> to vector<1x32xf32>
    %112 = arith.mulf %109, %111 : vector<1x32xf32>
    %113 = arith.addf %110, %112 : vector<1x32xf32>
    %114 = math.tanh %113 : vector<1x32xf32>
    %115 = vector.broadcast %101 : vector<1x1xf32> to vector<1x32xf32>
    %116 = arith.mulf %115, %114 : vector<1x32xf32>
    %cst_39 = arith.constant 1.000000e+00 : f32
    %117 = vector.broadcast %cst_39 : f32 to vector<1x1xf32>
    %118 = arith.subf %117, %101 : vector<1x1xf32>
    %119 = vector.broadcast %118 : vector<1x1xf32> to vector<1x32xf32>
    %120 = arith.mulf %119, %62 : vector<1x32xf32>
    %121 = arith.addf %116, %120 : vector<1x32xf32>
    %c1_i32 = arith.constant 1 : i32
    %122 = arith.index_cast %c1_i32 : i32 to index
    %c0_40 = arith.constant 0 : index
    %c0_41 = arith.constant 0 : index
    %123 = vector.load %arg13[%122, %c0_40, %c0_41] : memref<8x2x64xf32, #tpu.memory_space<vmem>>, vector<1x2x64xf32>
    %124 = vector.shape_cast %123 : vector<1x2x64xf32> to vector<2x64xf32>
    %125 = vector.broadcast %c1_i32 : i32 to vector<1x8xi32>
    %126 = arith.cmpi eq, %61, %125 : vector<1x8xi32>
    %cst_42 = arith.constant 0.000000e+00 : f32
    %127 = vector.shape_cast %126 : vector<1x8xi1> to vector<1x8xi1>
    %128 = vector.broadcast %127 : vector<1x8xi1> to vector<2x8xi1>
    %129 = vector.broadcast %cst_42 : f32 to vector<2x8xf32>
    %130 = arith.select %128, %51, %129 : vector<2x8xi1>, vector<2x8xf32>
    %cst_43 = arith.constant dense<0.000000e+00> : vector<2xf32>
    %131 = vector.multi_reduction <add>, %130, %cst_43 [1] : vector<2x8xf32> to vector<2xf32>
    %132 = vector.shape_cast %131 : vector<2xf32> to vector<2x1xf32>
    %cst_44 = arith.constant dense<0.000000e+00> : vector<1x64xf32>
    %133 = tpu.matmul %99, %60, %cst_44 {dimension_numbers = #tpu.dot_dimension_numbers<[1], [0], [0], [1], [0, 0, 1, 1], [], []>} : vector<1x32xf32>, vector<32x64xf32>, vector<1x64xf32> -> vector<1x64xf32>
    %134 = arith.addf %133, %25 : vector<1x64xf32>
    %cst_45 = arith.constant dense<0.000000e+00> : vector<1x64xf32>
    %135 = tpu.matmul %121, %60, %cst_45 {dimension_numbers = #tpu.dot_dimension_numbers<[1], [0], [0], [1], [0, 0, 1, 1], [], []>} : vector<1x32xf32>, vector<32x64xf32>, vector<1x64xf32> -> vector<1x64xf32>
    %136 = arith.addf %135, %25 : vector<1x64xf32>
    %137 = vector.extract_strided_slice %124 {offsets = [0, 0], sizes = [1, 64], strides = [1, 1]} : vector<2x64xf32> to vector<1x64xf32>
    %138 = vector.extract_strided_slice %132 {offsets = [0, 0], sizes = [1, 1], strides = [1, 1]} : vector<2x1xf32> to vector<1x1xf32>
    %139 = vector.extract_strided_slice %137 {offsets = [0, 0], sizes = [1, 32], strides = [1, 1]} : vector<1x64xf32> to vector<1x32xf32>
    %140 = vector.extract_strided_slice %134 {offsets = [0, 0], sizes = [1, 32], strides = [1, 1]} : vector<1x64xf32> to vector<1x32xf32>
    %141 = arith.addf %139, %140 : vector<1x32xf32>
    %142 = arith.negf %141 : vector<1x32xf32>
    %143 = math.exp %142 : vector<1x32xf32>
    %cst_46 = arith.constant 1.000000e+00 : f32
    %144 = vector.broadcast %cst_46 : f32 to vector<1x32xf32>
    %145 = arith.addf %144, %143 : vector<1x32xf32>
    %146 = arith.divf %144, %145 : vector<1x32xf32>
    %147 = vector.extract_strided_slice %137 {offsets = [0, 32], sizes = [1, 32], strides = [1, 1]} : vector<1x64xf32> to vector<1x32xf32>
    %148 = vector.extract_strided_slice %134 {offsets = [0, 32], sizes = [1, 32], strides = [1, 1]} : vector<1x64xf32> to vector<1x32xf32>
    %149 = arith.mulf %146, %148 : vector<1x32xf32>
    %150 = arith.addf %147, %149 : vector<1x32xf32>
    %151 = math.tanh %150 : vector<1x32xf32>
    %152 = vector.broadcast %138 : vector<1x1xf32> to vector<1x32xf32>
    %153 = arith.mulf %152, %151 : vector<1x32xf32>
    %cst_47 = arith.constant 1.000000e+00 : f32
    %154 = vector.broadcast %cst_47 : f32 to vector<1x1xf32>
    %155 = arith.subf %154, %138 : vector<1x1xf32>
    %156 = vector.broadcast %155 : vector<1x1xf32> to vector<1x32xf32>
    %157 = arith.mulf %156, %99 : vector<1x32xf32>
    %158 = arith.addf %153, %157 : vector<1x32xf32>
    %159 = vector.extract_strided_slice %124 {offsets = [1, 0], sizes = [1, 64], strides = [1, 1]} : vector<2x64xf32> to vector<1x64xf32>
    %160 = vector.extract_strided_slice %132 {offsets = [1, 0], sizes = [1, 1], strides = [1, 1]} : vector<2x1xf32> to vector<1x1xf32>
    %161 = vector.extract_strided_slice %159 {offsets = [0, 0], sizes = [1, 32], strides = [1, 1]} : vector<1x64xf32> to vector<1x32xf32>
    %162 = vector.extract_strided_slice %136 {offsets = [0, 0], sizes = [1, 32], strides = [1, 1]} : vector<1x64xf32> to vector<1x32xf32>
    %163 = arith.addf %161, %162 : vector<1x32xf32>
    %164 = arith.negf %163 : vector<1x32xf32>
    %165 = math.exp %164 : vector<1x32xf32>
    %cst_48 = arith.constant 1.000000e+00 : f32
    %166 = vector.broadcast %cst_48 : f32 to vector<1x32xf32>
    %167 = arith.addf %166, %165 : vector<1x32xf32>
    %168 = arith.divf %166, %167 : vector<1x32xf32>
    %169 = vector.extract_strided_slice %159 {offsets = [0, 32], sizes = [1, 32], strides = [1, 1]} : vector<1x64xf32> to vector<1x32xf32>
    %170 = vector.extract_strided_slice %136 {offsets = [0, 32], sizes = [1, 32], strides = [1, 1]} : vector<1x64xf32> to vector<1x32xf32>
    %171 = arith.mulf %168, %170 : vector<1x32xf32>
    %172 = arith.addf %169, %171 : vector<1x32xf32>
    %173 = math.tanh %172 : vector<1x32xf32>
    %174 = vector.broadcast %160 : vector<1x1xf32> to vector<1x32xf32>
    %175 = arith.mulf %174, %173 : vector<1x32xf32>
    %cst_49 = arith.constant 1.000000e+00 : f32
    %176 = vector.broadcast %cst_49 : f32 to vector<1x1xf32>
    %177 = arith.subf %176, %160 : vector<1x1xf32>
    %178 = vector.broadcast %177 : vector<1x1xf32> to vector<1x32xf32>
    %179 = arith.mulf %178, %121 : vector<1x32xf32>
    %180 = arith.addf %175, %179 : vector<1x32xf32>
    %c2_i32 = arith.constant 2 : i32
    %181 = arith.index_cast %c2_i32 : i32 to index
    %c0_50 = arith.constant 0 : index
    %c0_51 = arith.constant 0 : index
    %182 = vector.load %arg13[%181, %c0_50, %c0_51] : memref<8x2x64xf32, #tpu.memory_space<vmem>>, vector<1x2x64xf32>
    %183 = vector.shape_cast %182 : vector<1x2x64xf32> to vector<2x64xf32>
    %184 = vector.broadcast %c2_i32 : i32 to vector<1x8xi32>
    %185 = arith.cmpi eq, %61, %184 : vector<1x8xi32>
    %cst_52 = arith.constant 0.000000e+00 : f32
    %186 = vector.shape_cast %185 : vector<1x8xi1> to vector<1x8xi1>
    %187 = vector.broadcast %186 : vector<1x8xi1> to vector<2x8xi1>
    %188 = vector.broadcast %cst_52 : f32 to vector<2x8xf32>
    %189 = arith.select %187, %51, %188 : vector<2x8xi1>, vector<2x8xf32>
    %cst_53 = arith.constant dense<0.000000e+00> : vector<2xf32>
    %190 = vector.multi_reduction <add>, %189, %cst_53 [1] : vector<2x8xf32> to vector<2xf32>
    %191 = vector.shape_cast %190 : vector<2xf32> to vector<2x1xf32>
    %cst_54 = arith.constant dense<0.000000e+00> : vector<1x64xf32>
    %192 = tpu.matmul %158, %60, %cst_54 {dimension_numbers = #tpu.dot_dimension_numbers<[1], [0], [0], [1], [0, 0, 1, 1], [], []>} : vector<1x32xf32>, vector<32x64xf32>, vector<1x64xf32> -> vector<1x64xf32>
    %193 = arith.addf %192, %25 : vector<1x64xf32>
    %cst_55 = arith.constant dense<0.000000e+00> : vector<1x64xf32>
    %194 = tpu.matmul %180, %60, %cst_55 {dimension_numbers = #tpu.dot_dimension_numbers<[1], [0], [0], [1], [0, 0, 1, 1], [], []>} : vector<1x32xf32>, vector<32x64xf32>, vector<1x64xf32> -> vector<1x64xf32>
    %195 = arith.addf %194, %25 : vector<1x64xf32>
    %196 = vector.extract_strided_slice %183 {offsets = [0, 0], sizes = [1, 64], strides = [1, 1]} : vector<2x64xf32> to vector<1x64xf32>
    %197 = vector.extract_strided_slice %191 {offsets = [0, 0], sizes = [1, 1], strides = [1, 1]} : vector<2x1xf32> to vector<1x1xf32>
    %198 = vector.extract_strided_slice %196 {offsets = [0, 0], sizes = [1, 32], strides = [1, 1]} : vector<1x64xf32> to vector<1x32xf32>
    %199 = vector.extract_strided_slice %193 {offsets = [0, 0], sizes = [1, 32], strides = [1, 1]} : vector<1x64xf32> to vector<1x32xf32>
    %200 = arith.addf %198, %199 : vector<1x32xf32>
    %201 = arith.negf %200 : vector<1x32xf32>
    %202 = math.exp %201 : vector<1x32xf32>
    %cst_56 = arith.constant 1.000000e+00 : f32
    %203 = vector.broadcast %cst_56 : f32 to vector<1x32xf32>
    %204 = arith.addf %203, %202 : vector<1x32xf32>
    %205 = arith.divf %203, %204 : vector<1x32xf32>
    %206 = vector.extract_strided_slice %196 {offsets = [0, 32], sizes = [1, 32], strides = [1, 1]} : vector<1x64xf32> to vector<1x32xf32>
    %207 = vector.extract_strided_slice %193 {offsets = [0, 32], sizes = [1, 32], strides = [1, 1]} : vector<1x64xf32> to vector<1x32xf32>
    %208 = arith.mulf %205, %207 : vector<1x32xf32>
    %209 = arith.addf %206, %208 : vector<1x32xf32>
    %210 = math.tanh %209 : vector<1x32xf32>
    %211 = vector.broadcast %197 : vector<1x1xf32> to vector<1x32xf32>
    %212 = arith.mulf %211, %210 : vector<1x32xf32>
    %cst_57 = arith.constant 1.000000e+00 : f32
    %213 = vector.broadcast %cst_57 : f32 to vector<1x1xf32>
    %214 = arith.subf %213, %197 : vector<1x1xf32>
    %215 = vector.broadcast %214 : vector<1x1xf32> to vector<1x32xf32>
    %216 = arith.mulf %215, %158 : vector<1x32xf32>
    %217 = arith.addf %212, %216 : vector<1x32xf32>
    %218 = vector.extract_strided_slice %183 {offsets = [1, 0], sizes = [1, 64], strides = [1, 1]} : vector<2x64xf32> to vector<1x64xf32>
    %219 = vector.extract_strided_slice %191 {offsets = [1, 0], sizes = [1, 1], strides = [1, 1]} : vector<2x1xf32> to vector<1x1xf32>
    %220 = vector.extract_strided_slice %218 {offsets = [0, 0], sizes = [1, 32], strides = [1, 1]} : vector<1x64xf32> to vector<1x32xf32>
    %221 = vector.extract_strided_slice %195 {offsets = [0, 0], sizes = [1, 32], strides = [1, 1]} : vector<1x64xf32> to vector<1x32xf32>
    %222 = arith.addf %220, %221 : vector<1x32xf32>
    %223 = arith.negf %222 : vector<1x32xf32>
    %224 = math.exp %223 : vector<1x32xf32>
    %cst_58 = arith.constant 1.000000e+00 : f32
    %225 = vector.broadcast %cst_58 : f32 to vector<1x32xf32>
    %226 = arith.addf %225, %224 : vector<1x32xf32>
    %227 = arith.divf %225, %226 : vector<1x32xf32>
    %228 = vector.extract_strided_slice %218 {offsets = [0, 32], sizes = [1, 32], strides = [1, 1]} : vector<1x64xf32> to vector<1x32xf32>
    %229 = vector.extract_strided_slice %195 {offsets = [0, 32], sizes = [1, 32], strides = [1, 1]} : vector<1x64xf32> to vector<1x32xf32>
    %230 = arith.mulf %227, %229 : vector<1x32xf32>
    %231 = arith.addf %228, %230 : vector<1x32xf32>
    %232 = math.tanh %231 : vector<1x32xf32>
    %233 = vector.broadcast %219 : vector<1x1xf32> to vector<1x32xf32>
    %234 = arith.mulf %233, %232 : vector<1x32xf32>
    %cst_59 = arith.constant 1.000000e+00 : f32
    %235 = vector.broadcast %cst_59 : f32 to vector<1x1xf32>
    %236 = arith.subf %235, %219 : vector<1x1xf32>
    %237 = vector.broadcast %236 : vector<1x1xf32> to vector<1x32xf32>
    %238 = arith.mulf %237, %180 : vector<1x32xf32>
    %239 = arith.addf %234, %238 : vector<1x32xf32>
    %c3_i32 = arith.constant 3 : i32
    %240 = arith.index_cast %c3_i32 : i32 to index
    %c0_60 = arith.constant 0 : index
    %c0_61 = arith.constant 0 : index
    %241 = vector.load %arg13[%240, %c0_60, %c0_61] : memref<8x2x64xf32, #tpu.memory_space<vmem>>, vector<1x2x64xf32>
    %242 = vector.shape_cast %241 : vector<1x2x64xf32> to vector<2x64xf32>
    %243 = vector.broadcast %c3_i32 : i32 to vector<1x8xi32>
    %244 = arith.cmpi eq, %61, %243 : vector<1x8xi32>
    %cst_62 = arith.constant 0.000000e+00 : f32
    %245 = vector.shape_cast %244 : vector<1x8xi1> to vector<1x8xi1>
    %246 = vector.broadcast %245 : vector<1x8xi1> to vector<2x8xi1>
    %247 = vector.broadcast %cst_62 : f32 to vector<2x8xf32>
    %248 = arith.select %246, %51, %247 : vector<2x8xi1>, vector<2x8xf32>
    %cst_63 = arith.constant dense<0.000000e+00> : vector<2xf32>
    %249 = vector.multi_reduction <add>, %248, %cst_63 [1] : vector<2x8xf32> to vector<2xf32>
    %250 = vector.shape_cast %249 : vector<2xf32> to vector<2x1xf32>
    %cst_64 = arith.constant dense<0.000000e+00> : vector<1x64xf32>
    %251 = tpu.matmul %217, %60, %cst_64 {dimension_numbers = #tpu.dot_dimension_numbers<[1], [0], [0], [1], [0, 0, 1, 1], [], []>} : vector<1x32xf32>, vector<32x64xf32>, vector<1x64xf32> -> vector<1x64xf32>
    %252 = arith.addf %251, %25 : vector<1x64xf32>
    %cst_65 = arith.constant dense<0.000000e+00> : vector<1x64xf32>
    %253 = tpu.matmul %239, %60, %cst_65 {dimension_numbers = #tpu.dot_dimension_numbers<[1], [0], [0], [1], [0, 0, 1, 1], [], []>} : vector<1x32xf32>, vector<32x64xf32>, vector<1x64xf32> -> vector<1x64xf32>
    %254 = arith.addf %253, %25 : vector<1x64xf32>
    %255 = vector.extract_strided_slice %242 {offsets = [0, 0], sizes = [1, 64], strides = [1, 1]} : vector<2x64xf32> to vector<1x64xf32>
    %256 = vector.extract_strided_slice %250 {offsets = [0, 0], sizes = [1, 1], strides = [1, 1]} : vector<2x1xf32> to vector<1x1xf32>
    %257 = vector.extract_strided_slice %255 {offsets = [0, 0], sizes = [1, 32], strides = [1, 1]} : vector<1x64xf32> to vector<1x32xf32>
    %258 = vector.extract_strided_slice %252 {offsets = [0, 0], sizes = [1, 32], strides = [1, 1]} : vector<1x64xf32> to vector<1x32xf32>
    %259 = arith.addf %257, %258 : vector<1x32xf32>
    %260 = arith.negf %259 : vector<1x32xf32>
    %261 = math.exp %260 : vector<1x32xf32>
    %cst_66 = arith.constant 1.000000e+00 : f32
    %262 = vector.broadcast %cst_66 : f32 to vector<1x32xf32>
    %263 = arith.addf %262, %261 : vector<1x32xf32>
    %264 = arith.divf %262, %263 : vector<1x32xf32>
    %265 = vector.extract_strided_slice %255 {offsets = [0, 32], sizes = [1, 32], strides = [1, 1]} : vector<1x64xf32> to vector<1x32xf32>
    %266 = vector.extract_strided_slice %252 {offsets = [0, 32], sizes = [1, 32], strides = [1, 1]} : vector<1x64xf32> to vector<1x32xf32>
    %267 = arith.mulf %264, %266 : vector<1x32xf32>
    %268 = arith.addf %265, %267 : vector<1x32xf32>
    %269 = math.tanh %268 : vector<1x32xf32>
    %270 = vector.broadcast %256 : vector<1x1xf32> to vector<1x32xf32>
    %271 = arith.mulf %270, %269 : vector<1x32xf32>
    %cst_67 = arith.constant 1.000000e+00 : f32
    %272 = vector.broadcast %cst_67 : f32 to vector<1x1xf32>
    %273 = arith.subf %272, %256 : vector<1x1xf32>
    %274 = vector.broadcast %273 : vector<1x1xf32> to vector<1x32xf32>
    %275 = arith.mulf %274, %217 : vector<1x32xf32>
    %276 = arith.addf %271, %275 : vector<1x32xf32>
    %277 = vector.extract_strided_slice %242 {offsets = [1, 0], sizes = [1, 64], strides = [1, 1]} : vector<2x64xf32> to vector<1x64xf32>
    %278 = vector.extract_strided_slice %250 {offsets = [1, 0], sizes = [1, 1], strides = [1, 1]} : vector<2x1xf32> to vector<1x1xf32>
    %279 = vector.extract_strided_slice %277 {offsets = [0, 0], sizes = [1, 32], strides = [1, 1]} : vector<1x64xf32> to vector<1x32xf32>
    %280 = vector.extract_strided_slice %254 {offsets = [0, 0], sizes = [1, 32], strides = [1, 1]} : vector<1x64xf32> to vector<1x32xf32>
    %281 = arith.addf %279, %280 : vector<1x32xf32>
    %282 = arith.negf %281 : vector<1x32xf32>
    %283 = math.exp %282 : vector<1x32xf32>
    %cst_68 = arith.constant 1.000000e+00 : f32
    %284 = vector.broadcast %cst_68 : f32 to vector<1x32xf32>
    %285 = arith.addf %284, %283 : vector<1x32xf32>
    %286 = arith.divf %284, %285 : vector<1x32xf32>
    %287 = vector.extract_strided_slice %277 {offsets = [0, 32], sizes = [1, 32], strides = [1, 1]} : vector<1x64xf32> to vector<1x32xf32>
    %288 = vector.extract_strided_slice %254 {offsets = [0, 32], sizes = [1, 32], strides = [1, 1]} : vector<1x64xf32> to vector<1x32xf32>
    %289 = arith.mulf %286, %288 : vector<1x32xf32>
    %290 = arith.addf %287, %289 : vector<1x32xf32>
    %291 = math.tanh %290 : vector<1x32xf32>
    %292 = vector.broadcast %278 : vector<1x1xf32> to vector<1x32xf32>
    %293 = arith.mulf %292, %291 : vector<1x32xf32>
    %cst_69 = arith.constant 1.000000e+00 : f32
    %294 = vector.broadcast %cst_69 : f32 to vector<1x1xf32>
    %295 = arith.subf %294, %278 : vector<1x1xf32>
    %296 = vector.broadcast %295 : vector<1x1xf32> to vector<1x32xf32>
    %297 = arith.mulf %296, %239 : vector<1x32xf32>
    %298 = arith.addf %293, %297 : vector<1x32xf32>
    %c4_i32 = arith.constant 4 : i32
    %299 = arith.index_cast %c4_i32 : i32 to index
    %c0_70 = arith.constant 0 : index
    %c0_71 = arith.constant 0 : index
    %300 = vector.load %arg13[%299, %c0_70, %c0_71] : memref<8x2x64xf32, #tpu.memory_space<vmem>>, vector<1x2x64xf32>
    %301 = vector.shape_cast %300 : vector<1x2x64xf32> to vector<2x64xf32>
    %302 = vector.broadcast %c4_i32 : i32 to vector<1x8xi32>
    %303 = arith.cmpi eq, %61, %302 : vector<1x8xi32>
    %cst_72 = arith.constant 0.000000e+00 : f32
    %304 = vector.shape_cast %303 : vector<1x8xi1> to vector<1x8xi1>
    %305 = vector.broadcast %304 : vector<1x8xi1> to vector<2x8xi1>
    %306 = vector.broadcast %cst_72 : f32 to vector<2x8xf32>
    %307 = arith.select %305, %51, %306 : vector<2x8xi1>, vector<2x8xf32>
    %cst_73 = arith.constant dense<0.000000e+00> : vector<2xf32>
    %308 = vector.multi_reduction <add>, %307, %cst_73 [1] : vector<2x8xf32> to vector<2xf32>
    %309 = vector.shape_cast %308 : vector<2xf32> to vector<2x1xf32>
    %cst_74 = arith.constant dense<0.000000e+00> : vector<1x64xf32>
    %310 = tpu.matmul %276, %60, %cst_74 {dimension_numbers = #tpu.dot_dimension_numbers<[1], [0], [0], [1], [0, 0, 1, 1], [], []>} : vector<1x32xf32>, vector<32x64xf32>, vector<1x64xf32> -> vector<1x64xf32>
    %311 = arith.addf %310, %25 : vector<1x64xf32>
    %cst_75 = arith.constant dense<0.000000e+00> : vector<1x64xf32>
    %312 = tpu.matmul %298, %60, %cst_75 {dimension_numbers = #tpu.dot_dimension_numbers<[1], [0], [0], [1], [0, 0, 1, 1], [], []>} : vector<1x32xf32>, vector<32x64xf32>, vector<1x64xf32> -> vector<1x64xf32>
    %313 = arith.addf %312, %25 : vector<1x64xf32>
    %314 = vector.extract_strided_slice %301 {offsets = [0, 0], sizes = [1, 64], strides = [1, 1]} : vector<2x64xf32> to vector<1x64xf32>
    %315 = vector.extract_strided_slice %309 {offsets = [0, 0], sizes = [1, 1], strides = [1, 1]} : vector<2x1xf32> to vector<1x1xf32>
    %316 = vector.extract_strided_slice %314 {offsets = [0, 0], sizes = [1, 32], strides = [1, 1]} : vector<1x64xf32> to vector<1x32xf32>
    %317 = vector.extract_strided_slice %311 {offsets = [0, 0], sizes = [1, 32], strides = [1, 1]} : vector<1x64xf32> to vector<1x32xf32>
    %318 = arith.addf %316, %317 : vector<1x32xf32>
    %319 = arith.negf %318 : vector<1x32xf32>
    %320 = math.exp %319 : vector<1x32xf32>
    %cst_76 = arith.constant 1.000000e+00 : f32
    %321 = vector.broadcast %cst_76 : f32 to vector<1x32xf32>
    %322 = arith.addf %321, %320 : vector<1x32xf32>
    %323 = arith.divf %321, %322 : vector<1x32xf32>
    %324 = vector.extract_strided_slice %314 {offsets = [0, 32], sizes = [1, 32], strides = [1, 1]} : vector<1x64xf32> to vector<1x32xf32>
    %325 = vector.extract_strided_slice %311 {offsets = [0, 32], sizes = [1, 32], strides = [1, 1]} : vector<1x64xf32> to vector<1x32xf32>
    %326 = arith.mulf %323, %325 : vector<1x32xf32>
    %327 = arith.addf %324, %326 : vector<1x32xf32>
    %328 = math.tanh %327 : vector<1x32xf32>
    %329 = vector.broadcast %315 : vector<1x1xf32> to vector<1x32xf32>
    %330 = arith.mulf %329, %328 : vector<1x32xf32>
    %cst_77 = arith.constant 1.000000e+00 : f32
    %331 = vector.broadcast %cst_77 : f32 to vector<1x1xf32>
    %332 = arith.subf %331, %315 : vector<1x1xf32>
    %333 = vector.broadcast %332 : vector<1x1xf32> to vector<1x32xf32>
    %334 = arith.mulf %333, %276 : vector<1x32xf32>
    %335 = arith.addf %330, %334 : vector<1x32xf32>
    %336 = vector.extract_strided_slice %301 {offsets = [1, 0], sizes = [1, 64], strides = [1, 1]} : vector<2x64xf32> to vector<1x64xf32>
    %337 = vector.extract_strided_slice %309 {offsets = [1, 0], sizes = [1, 1], strides = [1, 1]} : vector<2x1xf32> to vector<1x1xf32>
    %338 = vector.extract_strided_slice %336 {offsets = [0, 0], sizes = [1, 32], strides = [1, 1]} : vector<1x64xf32> to vector<1x32xf32>
    %339 = vector.extract_strided_slice %313 {offsets = [0, 0], sizes = [1, 32], strides = [1, 1]} : vector<1x64xf32> to vector<1x32xf32>
    %340 = arith.addf %338, %339 : vector<1x32xf32>
    %341 = arith.negf %340 : vector<1x32xf32>
    %342 = math.exp %341 : vector<1x32xf32>
    %cst_78 = arith.constant 1.000000e+00 : f32
    %343 = vector.broadcast %cst_78 : f32 to vector<1x32xf32>
    %344 = arith.addf %343, %342 : vector<1x32xf32>
    %345 = arith.divf %343, %344 : vector<1x32xf32>
    %346 = vector.extract_strided_slice %336 {offsets = [0, 32], sizes = [1, 32], strides = [1, 1]} : vector<1x64xf32> to vector<1x32xf32>
    %347 = vector.extract_strided_slice %313 {offsets = [0, 32], sizes = [1, 32], strides = [1, 1]} : vector<1x64xf32> to vector<1x32xf32>
    %348 = arith.mulf %345, %347 : vector<1x32xf32>
    %349 = arith.addf %346, %348 : vector<1x32xf32>
    %350 = math.tanh %349 : vector<1x32xf32>
    %351 = vector.broadcast %337 : vector<1x1xf32> to vector<1x32xf32>
    %352 = arith.mulf %351, %350 : vector<1x32xf32>
    %cst_79 = arith.constant 1.000000e+00 : f32
    %353 = vector.broadcast %cst_79 : f32 to vector<1x1xf32>
    %354 = arith.subf %353, %337 : vector<1x1xf32>
    %355 = vector.broadcast %354 : vector<1x1xf32> to vector<1x32xf32>
    %356 = arith.mulf %355, %298 : vector<1x32xf32>
    %357 = arith.addf %352, %356 : vector<1x32xf32>
    %c5_i32 = arith.constant 5 : i32
    %358 = arith.index_cast %c5_i32 : i32 to index
    %c0_80 = arith.constant 0 : index
    %c0_81 = arith.constant 0 : index
    %359 = vector.load %arg13[%358, %c0_80, %c0_81] : memref<8x2x64xf32, #tpu.memory_space<vmem>>, vector<1x2x64xf32>
    %360 = vector.shape_cast %359 : vector<1x2x64xf32> to vector<2x64xf32>
    %361 = vector.broadcast %c5_i32 : i32 to vector<1x8xi32>
    %362 = arith.cmpi eq, %61, %361 : vector<1x8xi32>
    %cst_82 = arith.constant 0.000000e+00 : f32
    %363 = vector.shape_cast %362 : vector<1x8xi1> to vector<1x8xi1>
    %364 = vector.broadcast %363 : vector<1x8xi1> to vector<2x8xi1>
    %365 = vector.broadcast %cst_82 : f32 to vector<2x8xf32>
    %366 = arith.select %364, %51, %365 : vector<2x8xi1>, vector<2x8xf32>
    %cst_83 = arith.constant dense<0.000000e+00> : vector<2xf32>
    %367 = vector.multi_reduction <add>, %366, %cst_83 [1] : vector<2x8xf32> to vector<2xf32>
    %368 = vector.shape_cast %367 : vector<2xf32> to vector<2x1xf32>
    %cst_84 = arith.constant dense<0.000000e+00> : vector<1x64xf32>
    %369 = tpu.matmul %335, %60, %cst_84 {dimension_numbers = #tpu.dot_dimension_numbers<[1], [0], [0], [1], [0, 0, 1, 1], [], []>} : vector<1x32xf32>, vector<32x64xf32>, vector<1x64xf32> -> vector<1x64xf32>
    %370 = arith.addf %369, %25 : vector<1x64xf32>
    %cst_85 = arith.constant dense<0.000000e+00> : vector<1x64xf32>
    %371 = tpu.matmul %357, %60, %cst_85 {dimension_numbers = #tpu.dot_dimension_numbers<[1], [0], [0], [1], [0, 0, 1, 1], [], []>} : vector<1x32xf32>, vector<32x64xf32>, vector<1x64xf32> -> vector<1x64xf32>
    %372 = arith.addf %371, %25 : vector<1x64xf32>
    %373 = vector.extract_strided_slice %360 {offsets = [0, 0], sizes = [1, 64], strides = [1, 1]} : vector<2x64xf32> to vector<1x64xf32>
    %374 = vector.extract_strided_slice %368 {offsets = [0, 0], sizes = [1, 1], strides = [1, 1]} : vector<2x1xf32> to vector<1x1xf32>
    %375 = vector.extract_strided_slice %373 {offsets = [0, 0], sizes = [1, 32], strides = [1, 1]} : vector<1x64xf32> to vector<1x32xf32>
    %376 = vector.extract_strided_slice %370 {offsets = [0, 0], sizes = [1, 32], strides = [1, 1]} : vector<1x64xf32> to vector<1x32xf32>
    %377 = arith.addf %375, %376 : vector<1x32xf32>
    %378 = arith.negf %377 : vector<1x32xf32>
    %379 = math.exp %378 : vector<1x32xf32>
    %cst_86 = arith.constant 1.000000e+00 : f32
    %380 = vector.broadcast %cst_86 : f32 to vector<1x32xf32>
    %381 = arith.addf %380, %379 : vector<1x32xf32>
    %382 = arith.divf %380, %381 : vector<1x32xf32>
    %383 = vector.extract_strided_slice %373 {offsets = [0, 32], sizes = [1, 32], strides = [1, 1]} : vector<1x64xf32> to vector<1x32xf32>
    %384 = vector.extract_strided_slice %370 {offsets = [0, 32], sizes = [1, 32], strides = [1, 1]} : vector<1x64xf32> to vector<1x32xf32>
    %385 = arith.mulf %382, %384 : vector<1x32xf32>
    %386 = arith.addf %383, %385 : vector<1x32xf32>
    %387 = math.tanh %386 : vector<1x32xf32>
    %388 = vector.broadcast %374 : vector<1x1xf32> to vector<1x32xf32>
    %389 = arith.mulf %388, %387 : vector<1x32xf32>
    %cst_87 = arith.constant 1.000000e+00 : f32
    %390 = vector.broadcast %cst_87 : f32 to vector<1x1xf32>
    %391 = arith.subf %390, %374 : vector<1x1xf32>
    %392 = vector.broadcast %391 : vector<1x1xf32> to vector<1x32xf32>
    %393 = arith.mulf %392, %335 : vector<1x32xf32>
    %394 = arith.addf %389, %393 : vector<1x32xf32>
    %395 = vector.extract_strided_slice %360 {offsets = [1, 0], sizes = [1, 64], strides = [1, 1]} : vector<2x64xf32> to vector<1x64xf32>
    %396 = vector.extract_strided_slice %368 {offsets = [1, 0], sizes = [1, 1], strides = [1, 1]} : vector<2x1xf32> to vector<1x1xf32>
    %397 = vector.extract_strided_slice %395 {offsets = [0, 0], sizes = [1, 32], strides = [1, 1]} : vector<1x64xf32> to vector<1x32xf32>
    %398 = vector.extract_strided_slice %372 {offsets = [0, 0], sizes = [1, 32], strides = [1, 1]} : vector<1x64xf32> to vector<1x32xf32>
    %399 = arith.addf %397, %398 : vector<1x32xf32>
    %400 = arith.negf %399 : vector<1x32xf32>
    %401 = math.exp %400 : vector<1x32xf32>
    %cst_88 = arith.constant 1.000000e+00 : f32
    %402 = vector.broadcast %cst_88 : f32 to vector<1x32xf32>
    %403 = arith.addf %402, %401 : vector<1x32xf32>
    %404 = arith.divf %402, %403 : vector<1x32xf32>
    %405 = vector.extract_strided_slice %395 {offsets = [0, 32], sizes = [1, 32], strides = [1, 1]} : vector<1x64xf32> to vector<1x32xf32>
    %406 = vector.extract_strided_slice %372 {offsets = [0, 32], sizes = [1, 32], strides = [1, 1]} : vector<1x64xf32> to vector<1x32xf32>
    %407 = arith.mulf %404, %406 : vector<1x32xf32>
    %408 = arith.addf %405, %407 : vector<1x32xf32>
    %409 = math.tanh %408 : vector<1x32xf32>
    %410 = vector.broadcast %396 : vector<1x1xf32> to vector<1x32xf32>
    %411 = arith.mulf %410, %409 : vector<1x32xf32>
    %cst_89 = arith.constant 1.000000e+00 : f32
    %412 = vector.broadcast %cst_89 : f32 to vector<1x1xf32>
    %413 = arith.subf %412, %396 : vector<1x1xf32>
    %414 = vector.broadcast %413 : vector<1x1xf32> to vector<1x32xf32>
    %415 = arith.mulf %414, %357 : vector<1x32xf32>
    %416 = arith.addf %411, %415 : vector<1x32xf32>
    %c6_i32 = arith.constant 6 : i32
    %417 = arith.index_cast %c6_i32 : i32 to index
    %c0_90 = arith.constant 0 : index
    %c0_91 = arith.constant 0 : index
    %418 = vector.load %arg13[%417, %c0_90, %c0_91] : memref<8x2x64xf32, #tpu.memory_space<vmem>>, vector<1x2x64xf32>
    %419 = vector.shape_cast %418 : vector<1x2x64xf32> to vector<2x64xf32>
    %420 = vector.broadcast %c6_i32 : i32 to vector<1x8xi32>
    %421 = arith.cmpi eq, %61, %420 : vector<1x8xi32>
    %cst_92 = arith.constant 0.000000e+00 : f32
    %422 = vector.shape_cast %421 : vector<1x8xi1> to vector<1x8xi1>
    %423 = vector.broadcast %422 : vector<1x8xi1> to vector<2x8xi1>
    %424 = vector.broadcast %cst_92 : f32 to vector<2x8xf32>
    %425 = arith.select %423, %51, %424 : vector<2x8xi1>, vector<2x8xf32>
    %cst_93 = arith.constant dense<0.000000e+00> : vector<2xf32>
    %426 = vector.multi_reduction <add>, %425, %cst_93 [1] : vector<2x8xf32> to vector<2xf32>
    %427 = vector.shape_cast %426 : vector<2xf32> to vector<2x1xf32>
    %cst_94 = arith.constant dense<0.000000e+00> : vector<1x64xf32>
    %428 = tpu.matmul %394, %60, %cst_94 {dimension_numbers = #tpu.dot_dimension_numbers<[1], [0], [0], [1], [0, 0, 1, 1], [], []>} : vector<1x32xf32>, vector<32x64xf32>, vector<1x64xf32> -> vector<1x64xf32>
    %429 = arith.addf %428, %25 : vector<1x64xf32>
    %cst_95 = arith.constant dense<0.000000e+00> : vector<1x64xf32>
    %430 = tpu.matmul %416, %60, %cst_95 {dimension_numbers = #tpu.dot_dimension_numbers<[1], [0], [0], [1], [0, 0, 1, 1], [], []>} : vector<1x32xf32>, vector<32x64xf32>, vector<1x64xf32> -> vector<1x64xf32>
    %431 = arith.addf %430, %25 : vector<1x64xf32>
    %432 = vector.extract_strided_slice %419 {offsets = [0, 0], sizes = [1, 64], strides = [1, 1]} : vector<2x64xf32> to vector<1x64xf32>
    %433 = vector.extract_strided_slice %427 {offsets = [0, 0], sizes = [1, 1], strides = [1, 1]} : vector<2x1xf32> to vector<1x1xf32>
    %434 = vector.extract_strided_slice %432 {offsets = [0, 0], sizes = [1, 32], strides = [1, 1]} : vector<1x64xf32> to vector<1x32xf32>
    %435 = vector.extract_strided_slice %429 {offsets = [0, 0], sizes = [1, 32], strides = [1, 1]} : vector<1x64xf32> to vector<1x32xf32>
    %436 = arith.addf %434, %435 : vector<1x32xf32>
    %437 = arith.negf %436 : vector<1x32xf32>
    %438 = math.exp %437 : vector<1x32xf32>
    %cst_96 = arith.constant 1.000000e+00 : f32
    %439 = vector.broadcast %cst_96 : f32 to vector<1x32xf32>
    %440 = arith.addf %439, %438 : vector<1x32xf32>
    %441 = arith.divf %439, %440 : vector<1x32xf32>
    %442 = vector.extract_strided_slice %432 {offsets = [0, 32], sizes = [1, 32], strides = [1, 1]} : vector<1x64xf32> to vector<1x32xf32>
    %443 = vector.extract_strided_slice %429 {offsets = [0, 32], sizes = [1, 32], strides = [1, 1]} : vector<1x64xf32> to vector<1x32xf32>
    %444 = arith.mulf %441, %443 : vector<1x32xf32>
    %445 = arith.addf %442, %444 : vector<1x32xf32>
    %446 = math.tanh %445 : vector<1x32xf32>
    %447 = vector.broadcast %433 : vector<1x1xf32> to vector<1x32xf32>
    %448 = arith.mulf %447, %446 : vector<1x32xf32>
    %cst_97 = arith.constant 1.000000e+00 : f32
    %449 = vector.broadcast %cst_97 : f32 to vector<1x1xf32>
    %450 = arith.subf %449, %433 : vector<1x1xf32>
    %451 = vector.broadcast %450 : vector<1x1xf32> to vector<1x32xf32>
    %452 = arith.mulf %451, %394 : vector<1x32xf32>
    %453 = arith.addf %448, %452 : vector<1x32xf32>
    %454 = vector.extract_strided_slice %419 {offsets = [1, 0], sizes = [1, 64], strides = [1, 1]} : vector<2x64xf32> to vector<1x64xf32>
    %455 = vector.extract_strided_slice %427 {offsets = [1, 0], sizes = [1, 1], strides = [1, 1]} : vector<2x1xf32> to vector<1x1xf32>
    %456 = vector.extract_strided_slice %454 {offsets = [0, 0], sizes = [1, 32], strides = [1, 1]} : vector<1x64xf32> to vector<1x32xf32>
    %457 = vector.extract_strided_slice %431 {offsets = [0, 0], sizes = [1, 32], strides = [1, 1]} : vector<1x64xf32> to vector<1x32xf32>
    %458 = arith.addf %456, %457 : vector<1x32xf32>
    %459 = arith.negf %458 : vector<1x32xf32>
    %460 = math.exp %459 : vector<1x32xf32>
    %cst_98 = arith.constant 1.000000e+00 : f32
    %461 = vector.broadcast %cst_98 : f32 to vector<1x32xf32>
    %462 = arith.addf %461, %460 : vector<1x32xf32>
    %463 = arith.divf %461, %462 : vector<1x32xf32>
    %464 = vector.extract_strided_slice %454 {offsets = [0, 32], sizes = [1, 32], strides = [1, 1]} : vector<1x64xf32> to vector<1x32xf32>
    %465 = vector.extract_strided_slice %431 {offsets = [0, 32], sizes = [1, 32], strides = [1, 1]} : vector<1x64xf32> to vector<1x32xf32>
    %466 = arith.mulf %463, %465 : vector<1x32xf32>
    %467 = arith.addf %464, %466 : vector<1x32xf32>
    %468 = math.tanh %467 : vector<1x32xf32>
    %469 = vector.broadcast %455 : vector<1x1xf32> to vector<1x32xf32>
    %470 = arith.mulf %469, %468 : vector<1x32xf32>
    %cst_99 = arith.constant 1.000000e+00 : f32
    %471 = vector.broadcast %cst_99 : f32 to vector<1x1xf32>
    %472 = arith.subf %471, %455 : vector<1x1xf32>
    %473 = vector.broadcast %472 : vector<1x1xf32> to vector<1x32xf32>
    %474 = arith.mulf %473, %416 : vector<1x32xf32>
    %475 = arith.addf %470, %474 : vector<1x32xf32>
    %c7_i32 = arith.constant 7 : i32
    %476 = arith.index_cast %c7_i32 : i32 to index
    %c0_100 = arith.constant 0 : index
    %c0_101 = arith.constant 0 : index
    %477 = vector.load %arg13[%476, %c0_100, %c0_101] : memref<8x2x64xf32, #tpu.memory_space<vmem>>, vector<1x2x64xf32>
    %478 = vector.shape_cast %477 : vector<1x2x64xf32> to vector<2x64xf32>
    %479 = vector.broadcast %c7_i32 : i32 to vector<1x8xi32>
    %480 = arith.cmpi eq, %61, %479 : vector<1x8xi32>
    %cst_102 = arith.constant 0.000000e+00 : f32
    %481 = vector.shape_cast %480 : vector<1x8xi1> to vector<1x8xi1>
    %482 = vector.broadcast %481 : vector<1x8xi1> to vector<2x8xi1>
    %483 = vector.broadcast %cst_102 : f32 to vector<2x8xf32>
    %484 = arith.select %482, %51, %483 : vector<2x8xi1>, vector<2x8xf32>
    %cst_103 = arith.constant dense<0.000000e+00> : vector<2xf32>
    %485 = vector.multi_reduction <add>, %484, %cst_103 [1] : vector<2x8xf32> to vector<2xf32>
    %486 = vector.shape_cast %485 : vector<2xf32> to vector<2x1xf32>
    %cst_104 = arith.constant dense<0.000000e+00> : vector<1x64xf32>
    %487 = tpu.matmul %453, %60, %cst_104 {dimension_numbers = #tpu.dot_dimension_numbers<[1], [0], [0], [1], [0, 0, 1, 1], [], []>} : vector<1x32xf32>, vector<32x64xf32>, vector<1x64xf32> -> vector<1x64xf32>
    %488 = arith.addf %487, %25 : vector<1x64xf32>
    %cst_105 = arith.constant dense<0.000000e+00> : vector<1x64xf32>
    %489 = tpu.matmul %475, %60, %cst_105 {dimension_numbers = #tpu.dot_dimension_numbers<[1], [0], [0], [1], [0, 0, 1, 1], [], []>} : vector<1x32xf32>, vector<32x64xf32>, vector<1x64xf32> -> vector<1x64xf32>
    %490 = arith.addf %489, %25 : vector<1x64xf32>
    %491 = vector.extract_strided_slice %478 {offsets = [0, 0], sizes = [1, 64], strides = [1, 1]} : vector<2x64xf32> to vector<1x64xf32>
    %492 = vector.extract_strided_slice %486 {offsets = [0, 0], sizes = [1, 1], strides = [1, 1]} : vector<2x1xf32> to vector<1x1xf32>
    %493 = vector.extract_strided_slice %491 {offsets = [0, 0], sizes = [1, 32], strides = [1, 1]} : vector<1x64xf32> to vector<1x32xf32>
    %494 = vector.extract_strided_slice %488 {offsets = [0, 0], sizes = [1, 32], strides = [1, 1]} : vector<1x64xf32> to vector<1x32xf32>
    %495 = arith.addf %493, %494 : vector<1x32xf32>
    %496 = arith.negf %495 : vector<1x32xf32>
    %497 = math.exp %496 : vector<1x32xf32>
    %cst_106 = arith.constant 1.000000e+00 : f32
    %498 = vector.broadcast %cst_106 : f32 to vector<1x32xf32>
    %499 = arith.addf %498, %497 : vector<1x32xf32>
    %500 = arith.divf %498, %499 : vector<1x32xf32>
    %501 = vector.extract_strided_slice %491 {offsets = [0, 32], sizes = [1, 32], strides = [1, 1]} : vector<1x64xf32> to vector<1x32xf32>
    %502 = vector.extract_strided_slice %488 {offsets = [0, 32], sizes = [1, 32], strides = [1, 1]} : vector<1x64xf32> to vector<1x32xf32>
    %503 = arith.mulf %500, %502 : vector<1x32xf32>
    %504 = arith.addf %501, %503 : vector<1x32xf32>
    %505 = math.tanh %504 : vector<1x32xf32>
    %506 = vector.broadcast %492 : vector<1x1xf32> to vector<1x32xf32>
    %507 = arith.mulf %506, %505 : vector<1x32xf32>
    %cst_107 = arith.constant 1.000000e+00 : f32
    %508 = vector.broadcast %cst_107 : f32 to vector<1x1xf32>
    %509 = arith.subf %508, %492 : vector<1x1xf32>
    %510 = vector.broadcast %509 : vector<1x1xf32> to vector<1x32xf32>
    %511 = arith.mulf %510, %453 : vector<1x32xf32>
    %512 = arith.addf %507, %511 : vector<1x32xf32>
    %513 = vector.extract_strided_slice %478 {offsets = [1, 0], sizes = [1, 64], strides = [1, 1]} : vector<2x64xf32> to vector<1x64xf32>
    %514 = vector.extract_strided_slice %486 {offsets = [1, 0], sizes = [1, 1], strides = [1, 1]} : vector<2x1xf32> to vector<1x1xf32>
    %515 = vector.extract_strided_slice %513 {offsets = [0, 0], sizes = [1, 32], strides = [1, 1]} : vector<1x64xf32> to vector<1x32xf32>
    %516 = vector.extract_strided_slice %490 {offsets = [0, 0], sizes = [1, 32], strides = [1, 1]} : vector<1x64xf32> to vector<1x32xf32>
    %517 = arith.addf %515, %516 : vector<1x32xf32>
    %518 = arith.negf %517 : vector<1x32xf32>
    %519 = math.exp %518 : vector<1x32xf32>
    %cst_108 = arith.constant 1.000000e+00 : f32
    %520 = vector.broadcast %cst_108 : f32 to vector<1x32xf32>
    %521 = arith.addf %520, %519 : vector<1x32xf32>
    %522 = arith.divf %520, %521 : vector<1x32xf32>
    %523 = vector.extract_strided_slice %513 {offsets = [0, 32], sizes = [1, 32], strides = [1, 1]} : vector<1x64xf32> to vector<1x32xf32>
    %524 = vector.extract_strided_slice %490 {offsets = [0, 32], sizes = [1, 32], strides = [1, 1]} : vector<1x64xf32> to vector<1x32xf32>
    %525 = arith.mulf %522, %524 : vector<1x32xf32>
    %526 = arith.addf %523, %525 : vector<1x32xf32>
    %527 = math.tanh %526 : vector<1x32xf32>
    %528 = vector.broadcast %514 : vector<1x1xf32> to vector<1x32xf32>
    %529 = arith.mulf %528, %527 : vector<1x32xf32>
    %cst_109 = arith.constant 1.000000e+00 : f32
    %530 = vector.broadcast %cst_109 : f32 to vector<1x1xf32>
    %531 = arith.subf %530, %514 : vector<1x1xf32>
    %532 = vector.broadcast %531 : vector<1x1xf32> to vector<1x32xf32>
    %533 = arith.mulf %532, %475 : vector<1x32xf32>
    %534 = arith.addf %529, %533 : vector<1x32xf32>
    %c8_i32 = arith.constant 8 : i32
    %535 = tpu.concatenate %512, %534 in 0 : vector<1x32xf32>, vector<1x32xf32> -> vector<2x32xf32>
    %c0_110 = arith.constant 0 : index
    %c0_111 = arith.constant 0 : index
    %536 = vector.load %arg8[%c0_110, %c0_111] : memref<32x32xf32, #tpu.memory_space<vmem>>, vector<32x32xf32>
    %cst_112 = arith.constant dense<0.000000e+00> : vector<2x32xf32>
    %537 = tpu.matmul %2, %536, %cst_112 {dimension_numbers = #tpu.dot_dimension_numbers<[1], [0], [0], [1], [0, 0, 1, 1], [], []>} : vector<2x32xf32>, vector<32x32xf32>, vector<2x32xf32> -> vector<2x32xf32>
    %c0_113 = arith.constant 0 : index
    %c0_114 = arith.constant 0 : index
    %538 = vector.load %arg9[%c0_113, %c0_114] : memref<32x32xf32, #tpu.memory_space<vmem>>, vector<32x32xf32>
    %cst_115 = arith.constant dense<0.000000e+00> : vector<2x32xf32>
    %539 = tpu.matmul %535, %538, %cst_115 {dimension_numbers = #tpu.dot_dimension_numbers<[1], [0], [0], [1], [0, 0, 1, 1], [], []>} : vector<2x32xf32>, vector<32x32xf32>, vector<2x32xf32> -> vector<2x32xf32>
    %540 = arith.addf %537, %539 : vector<2x32xf32>
    %c0_116 = arith.constant 0 : index
    %c0_117 = arith.constant 0 : index
    %541 = vector.load %arg10[%c0_116, %c0_117] : memref<32x32xf32, #tpu.memory_space<vmem>>, vector<32x32xf32>
    %cst_118 = arith.constant dense<0.000000e+00> : vector<2x32xf32>
    %542 = tpu.matmul %1, %541, %cst_118 {dimension_numbers = #tpu.dot_dimension_numbers<[1], [0], [0], [1], [0, 0, 1, 1], [], []>} : vector<2x32xf32>, vector<32x32xf32>, vector<2x32xf32> -> vector<2x32xf32>
    %543 = arith.addf %540, %542 : vector<2x32xf32>
    %544 = vector.broadcast %26 : vector<1x32xf32> to vector<2x32xf32>
    %545 = arith.addf %543, %544 : vector<2x32xf32>
    %cst_119 = arith.constant 0.000000e+00 : f32
    %546 = vector.broadcast %cst_119 : f32 to vector<2x32xf32>
    %547 = arith.maximumf %545, %546 : vector<2x32xf32>
    %c0_120 = arith.constant 0 : index
    %c0_121 = arith.constant 0 : index
    %548 = vector.load %arg12[%c0_120, %c0_121] : memref<2x32xf32, #tpu.memory_space<vmem>>, vector<2x32xf32>
    tpu.vector_store %arg12[%c0_120, %c0_121], %547 {strides = array<i32>} : memref<2x32xf32, #tpu.memory_space<vmem>>, vector<2x32xf32>,
    return
  }
  func.func @transform_0(%arg0: i32) -> (i32, i32, i32) {
    %c0_i32 = arith.constant 0 : i32
    %c0_i32_0 = arith.constant 0 : i32
    %c0_i32_1 = arith.constant 0 : i32
    return %arg0, %c0_i32, %c0_i32_0 : i32, i32, i32
  }
  func.func @transform_1(%arg0: i32) -> (i32, i32) {
    %c0_i32 = arith.constant 0 : i32
    %c0_i32_0 = arith.constant 0 : i32
    return %arg0, %c0_i32 : i32, i32
  }
  func.func @transform_2(%arg0: i32) -> (i32, i32) {
    %c0_i32 = arith.constant 0 : i32
    %c0_i32_0 = arith.constant 0 : i32
    return %arg0, %c0_i32 : i32, i32
  }
  func.func @transform_3(%arg0: i32) -> (i32, i32) {
    %c0_i32 = arith.constant 0 : i32
    %c0_i32_0 = arith.constant 0 : i32
    %c0_i32_1 = arith.constant 0 : i32
    return %c0_i32, %c0_i32_0 : i32, i32
  }
  func.func @transform_4(%arg0: i32) -> (i32, i32) {
    %c0_i32 = arith.constant 0 : i32
    %c0_i32_0 = arith.constant 0 : i32
    %c0_i32_1 = arith.constant 0 : i32
    return %c0_i32, %c0_i32_0 : i32, i32
  }
  func.func @transform_5(%arg0: i32) -> (i32, i32) {
    %c0_i32 = arith.constant 0 : i32
    %c0_i32_0 = arith.constant 0 : i32
    %c0_i32_1 = arith.constant 0 : i32
    return %c0_i32, %c0_i32_0 : i32, i32
  }
  func.func @transform_6(%arg0: i32) -> (i32, i32) {
    %c0_i32 = arith.constant 0 : i32
    %c0_i32_0 = arith.constant 0 : i32
    %c0_i32_1 = arith.constant 0 : i32
    return %c0_i32, %c0_i32_0 : i32, i32
  }
  func.func @transform_7(%arg0: i32) -> (i32, i32) {
    %c0_i32 = arith.constant 0 : i32
    %c0_i32_0 = arith.constant 0 : i32
    %c0_i32_1 = arith.constant 0 : i32
    return %c0_i32, %c0_i32_0 : i32, i32
  }
  func.func @transform_8(%arg0: i32) -> (i32, i32) {
    %c0_i32 = arith.constant 0 : i32
    %c0_i32_0 = arith.constant 0 : i32
    %c0_i32_1 = arith.constant 0 : i32
    return %c0_i32, %c0_i32_0 : i32, i32
  }
  func.func @transform_9(%arg0: i32) -> (i32, i32) {
    %c0_i32 = arith.constant 0 : i32
    %c0_i32_0 = arith.constant 0 : i32
    %c0_i32_1 = arith.constant 0 : i32
    return %c0_i32, %c0_i32_0 : i32, i32
  }
  func.func @transform_10(%arg0: i32) -> (i32, i32) {
    %c0_i32 = arith.constant 0 : i32
    %c0_i32_0 = arith.constant 0 : i32
    %c0_i32_1 = arith.constant 0 : i32
    return %c0_i32, %c0_i32_0 : i32, i32
  }
  func.func @transform_11(%arg0: i32) -> (i32, i32) {
    %c0_i32 = arith.constant 0 : i32
    %c0_i32_0 = arith.constant 0 : i32
    return %arg0, %c0_i32 : i32, i32
  }
}

</mosaic_0001>

<llo_original>
// kernel: episodic_memory.1
$region0: #{episodic_memory.1}
  #allocation0 [shape = 'u32[]', space=smem, size = 0x4, offset = 0x4, fixed_abs, tag = 'smem constant byte address 0x4 - core index']
  #allocation1 [shape = 'u32[144,128]{1,0:T(1,128)}', space=vmem, size = 0x12000, scoped, tag = 'internal scratch']
  #allocation2 [shape = 'f32[8,2,64]{2,1,0:T(2,128)}', space=vmem, size = 0x2000, scoped, tag = 'scratch operand']
  %s0 = inlined_call_operand.vmem [shape: bf16[2,8,32], index: 0, kind: input, shape index: {}]
  %s1 = inlined_call_operand.vmem [shape: f32[2,32], index: 1, kind: input, shape index: {}]
  %s2 = inlined_call_operand.vmem [shape: f32[2,32], index: 2, kind: input, shape index: {}]
  %s3 = inlined_call_operand.vmem [shape: bf16[64,32], index: 3, kind: input, shape index: {}]
  %s4 = inlined_call_operand.vmem [shape: bf16[64,32], index: 4, kind: input, shape index: {}]
  %s5 = inlined_call_operand.vmem [shape: bf16[32,64], index: 5, kind: input, shape index: {}]
  %s6 = inlined_call_operand.vmem [shape: f32[32,64], index: 6, kind: input, shape index: {}]
  %s7 = inlined_call_operand.vmem [shape: f32[32,32], index: 7, kind: input, shape index: {}]
  %s8 = inlined_call_operand.vmem [shape: f32[32,32], index: 8, kind: input, shape index: {}]
  %s9 = inlined_call_operand.vmem [shape: f32[32,32], index: 9, kind: input, shape index: {}]
  %s10 = inlined_call_operand.vmem [shape: f32[5,64], index: 10, kind: input, shape index: {}]
  %s11 = inlined_call_operand.hbm [shape: f32[2,32], index: 11, kind: output, shape index: {}]
  %s12 = sld [smem:[#allocation0]]
  $region54: #{episodic_memory.1} parent=0
    _
  %s14 = ssub.s32 1, %s12
  %s15 = scalar_select 0, %s14, %s12
  $region1: #{episodic_memory.1} parent=0
    #allocation3 [shape = 'u8[1024]{0}', space=vmem, size = 0x400, scoped, tag = 'output window, operand 0, single buffered']
    #allocation4 [shape = 's32[1]{0}', space=sflag, size = 0x4, scoped, tag = 'scoped memory for episodic_memory.1']
    %16 = vsyncpa [#allocation4], 0
    // Predicated region
    $region2: #{episodic_memory.1} parent=1 // pred_check
      _
    $region3: #{episodic_memory.1} parent=1 // pred_check_branch
      %18 = sbr.rel (0) target = $region5
    $region4: #{episodic_memory.1} parent=1 // pred_region
      _
    $region5: #{episodic_memory.1} parent=1 // pred_fallthru
      _
    // Predicated region
    $region6: #{episodic_memory.1} parent=1 // pred_check
      _
    $region7: #{episodic_memory.1} parent=1 // pred_check_branch
      %20 = sbr.rel (0) target = $region9
    $region8: #{episodic_memory.1} parent=1 // pred_region
      _
    $region9: #{episodic_memory.1} parent=1 // pred_fallthru
      _
    // Predicated region
    $region10: #{episodic_memory.1} parent=1 // pred_check
      _
    $region11: #{episodic_memory.1} parent=1 // pred_check_branch
      %22 = sbr.rel (0) target = $region13
    $region12: #{episodic_memory.1} parent=1 // pred_region
      _
    $region13: #{episodic_memory.1} parent=1 // pred_fallthru
      _
    // Predicated region
    $region14: #{episodic_memory.1} parent=1 // pred_check
      _
    $region15: #{episodic_memory.1} parent=1 // pred_check_branch
      %24 = sbr.rel (0) target = $region17
    $region16: #{episodic_memory.1} parent=1 // pred_region
      _
    $region17: #{episodic_memory.1} parent=1 // pred_fallthru
      _
    // Predicated region
    $region18: #{episodic_memory.1} parent=1 // pred_check
      _
    $region19: #{episodic_memory.1} parent=1 // pred_check_branch
      %26 = sbr.rel (0) target = $region21
    $region20: #{episodic_memory.1} parent=1 // pred_region
      _
    $region21: #{episodic_memory.1} parent=1 // pred_fallthru
      _
    // Predicated region
    $region22: #{episodic_memory.1} parent=1 // pred_check
      _
    $region23: #{episodic_memory.1} parent=1 // pred_check_branch
      %28 = sbr.rel (0) target = $region25
    $region24: #{episodic_memory.1} parent=1 // pred_region
      _
    $region25: #{episodic_memory.1} parent=1 // pred_fallthru
      _
    // Predicated region
    $region26: #{episodic_memory.1} parent=1 // pred_check
      _
    $region27: #{episodic_memory.1} parent=1 // pred_check_branch
      %30 = sbr.rel (0) target = $region29
    $region28: #{episodic_memory.1} parent=1 // pred_region
      _
    $region29: #{episodic_memory.1} parent=1 // pred_fallthru
      _
    // Predicated region
    $region30: #{episodic_memory.1} parent=1 // pred_check
      _
    $region31: #{episodic_memory.1} parent=1 // pred_check_branch
      %32 = sbr.rel (0) target = $region33
    $region32: #{episodic_memory.1} parent=1 // pred_region
      _
    $region33: #{episodic_memory.1} parent=1 // pred_fallthru
      _
    // Predicated region
    $region34: #{episodic_memory.1} parent=1 // pred_check
      _
    $region35: #{episodic_memory.1} parent=1 // pred_check_branch
      %34 = sbr.rel (0) target = $region37
    $region36: #{episodic_memory.1} parent=1 // pred_region
      _
    $region37: #{episodic_memory.1} parent=1 // pred_fallthru
      _
    // Predicated region
    $region38: #{episodic_memory.1} parent=1 // pred_check
      _
    $region39: #{episodic_memory.1} parent=1 // pred_check_branch
      %36 = sbr.rel (0) target = $region41
    $region40: #{episodic_memory.1} parent=1 // pred_region
      _
    $region41: #{episodic_memory.1} parent=1 // pred_fallthru
      _
    // Predicated region
    $region42: #{episodic_memory.1} parent=1 // pred_check
      _
    $region43: #{episodic_memory.1} parent=1 // pred_check_branch
      %38 = sbr.rel (0) target = $region45
    $region44: #{episodic_memory.1} parent=1 // pred_region
      _
    $region45: #{episodic_memory.1} parent=1 // pred_fallthru
      _
    %v40 = vld [vmem:[%s0] sm:$0xf]
    %v41 = vld [vmem:[%s0 + $0x4] sm:$0xf]
    %v42 = vld [vmem:[%s1] sm:$0x3]
    %v43 = vld [vmem:[%s2] sm:$0x3]
    %v44 = vpack.c.bf16 %v42, %v42
    %v47 = vunpack.c.l.s4 1966171168
    %v48 = vunpack.c.0.s8 %v47
    %v49 = vlaneseq
    %v50 = vshrl.u32 %v49, 7
    %v51 = vsub.s32 %v48, %v50
    %v52 = vrot.slane %v44, %v51
    %v54 = vunpack.c.l.s4 1966171168
    %v55 = vunpack.c.0.s8 %v54
    %v56 = vlaneseq
    %v57 = vshrl.u32 %v56, 7
    %v58 = vsub.s32 %v55, %v57
    %v59 = vrot.slane %v52, %v58
    %v60 = vunpack.i.l.s16 %v59
    %v61 = vunpack.i.h.s16 %v59
    %v62 = vpack.c.bf16 %v43, %v43
    %v65 = vunpack.c.l.s4 1966171168
    %v66 = vunpack.c.0.s8 %v65
    %v67 = vlaneseq
    %v68 = vshrl.u32 %v67, 7
    %v69 = vsub.s32 %v66, %v68
    %v70 = vrot.slane %v62, %v69
    %v72 = vunpack.c.l.s4 1966171168
    %v73 = vunpack.c.0.s8 %v72
    %v74 = vlaneseq
    %v75 = vshrl.u32 %v74, 7
    %v76 = vsub.s32 %v73, %v75
    %v77 = vrot.slane %v70, %v76
    %v78 = vunpack.i.l.s16 %v77
    %v79 = vunpack.i.h.s16 %v77
    %v80 = vpack.i.b16 %v60, %v60
    %v81 = vpack.i.b16 %v61, %v61
    %v82 = vlaneseq
    %v83 = vshrl.u32 %v82, 7
    %v84 = vsub.s32 0, %v83
    %v85 = vrot.slane %v80, %v84
    %v86 = vlaneseq
    %v87 = vshrl.u32 %v86, 7
    %v88 = vsub.s32 0, %v87
    %v89 = vrot.slane %v81, %v88
    %v91 = vpack.i.b16 %v85, %v85
    %v93 = vlaneseq
    %v94 = vshrl.u32 %v93, 7
    %v95 = vsub.s32 0, %v94
    %v96 = vrot.slane %v91, %v95
    %v98 = vpack.i.b16 %v89, %v89
    %v100 = vlaneseq
    %v101 = vshrl.u32 %v100, 7
    %v102 = vsub.s32 0, %v101
    %v103 = vrot.slane %v98, %v102
    %v104 = vmul.bf16 %v40, %v96
    %v105 = vmul.bf16 %v41, %v103
    %v106 = vpack.i.b16 %v78, %v78
    %v107 = vpack.i.b16 %v79, %v79
    %v108 = vlaneseq
    %v109 = vshrl.u32 %v108, 7
    %v110 = vsub.s32 0, %v109
    %v111 = vrot.slane %v106, %v110
    %v112 = vlaneseq
    %v113 = vshrl.u32 %v112, 7
    %v114 = vsub.s32 0, %v113
    %v115 = vrot.slane %v107, %v114
    %v117 = vpack.i.b16 %v111, %v111
    %v119 = vlaneseq
    %v120 = vshrl.u32 %v119, 7
    %v121 = vsub.s32 0, %v120
    %v122 = vrot.slane %v117, %v121
    %v124 = vpack.i.b16 %v115, %v115
    %v126 = vlaneseq
    %v127 = vshrl.u32 %v126, 7
    %v128 = vsub.s32 0, %v127
    %v129 = vrot.slane %v124, %v128
    %v130 = vmul.bf16 %v40, %v122
    %v131 = vmul.bf16 %v41, %v129
    %v132 = vsub.bf16 %v40, %v96
    %v133 = vsub.bf16 %v41, %v103
    %v134 = vand.u32 2147450879, %v132
    %v135 = vand.u32 2147450879, %v133
    %v136 = vsub.bf16 %v40, %v122
    %v137 = vsub.bf16 %v41, %v129
    %v138 = vand.u32 2147450879, %v136
    %v139 = vand.u32 2147450879, %v137
    %v140 = vld [vmem:[%s10] sm:$0x1]
    %v141 = vld [vmem:[%s10 + $0x1] sm:$0x1]
    %v142 = vld [vmem:[%s10 + $0x2] sm:$0x1]
    %v143 = vld [vmem:[%s10 + $0x3] sm:$0x1]
    %v144 = vld [vmem:[%s10 + $0x4] sm:$0x1]
    %v147 = vunpack.c.l.b16 %v104
    %v148 = vunpack.c.l.b16 %v105
    %v149 = vpack.c.b16 %v148, %v147
    %v152 = vunpack.c.l.b16 %v130
    %v153 = vunpack.c.l.b16 %v131
    %v154 = vpack.c.b16 %v153, %v152
    %155 = vrot.lane.b32.xlu0 %v154, 32
    %v156 = vpop.permute.xlu0 %155
    %vm157 = vcmask 261120
    %v160 = vsel %vm157, %v149, %v156
    %v161 = vld [vmem:[%s3] sm:$0xf]
    %v162 = vld [vmem:[%s3 + $0x4] sm:$0xf]
    %v163 = vld [vmem:[%s3 + $0x8] sm:$0xf]
    %v164 = vld [vmem:[%s3 + $0xc] sm:$0xf]
    %v165 = vld [vmem:[%s3 + $0x10] sm:$0xf]
    %v166 = vld [vmem:[%s3 + $0x14] sm:$0xf]
    %v167 = vld [vmem:[%s3 + $0x18] sm:$0xf]
    %v168 = vld [vmem:[%s3 + $0x1c] sm:$0xf]
    %v171 = vunpack.c.l.b16 %v134
    %v172 = vunpack.c.l.b16 %v135
    %v173 = vpack.c.b16 %v172, %v171
    %v176 = vunpack.c.l.b16 %v138
    %v177 = vunpack.c.l.b16 %v139
    %v178 = vpack.c.b16 %v177, %v176
    %179 = vrot.lane.b32.xlu0 %v178, 32
    %v180 = vpop.permute.xlu0 %179
    %v183 = vsel %vm157, %v173, %v180
    %v184 = vld [vmem:[%s4] sm:$0xf]
    %v185 = vld [vmem:[%s4 + $0x4] sm:$0xf]
    %v186 = vld [vmem:[%s4 + $0x8] sm:$0xf]
    %v187 = vld [vmem:[%s4 + $0xc] sm:$0xf]
    %v188 = vld [vmem:[%s4 + $0x10] sm:$0xf]
    %v189 = vld [vmem:[%s4 + $0x14] sm:$0xf]
    %v190 = vld [vmem:[%s4 + $0x18] sm:$0xf]
    %v191 = vld [vmem:[%s4 + $0x1c] sm:$0xf]
    %v200 = vunpack.c.l.b16 %v184
    %v201 = vunpack.c.l.b16 %v185
    %v202 = vunpack.c.l.b16 %v186
    %v203 = vunpack.c.l.b16 %v187
    %v204 = vunpack.c.l.b16 %v188
    %v205 = vunpack.c.l.b16 %v189
    %v206 = vunpack.c.l.b16 %v190
    %v207 = vunpack.c.l.b16 %v191
    %v208 = vpack.c.b16 %v201, %v200
    %v209 = vpack.c.b16 %v203, %v202
    %v210 = vpack.c.b16 %v205, %v204
    %v211 = vpack.c.b16 %v207, %v206
    %vm216 = vcmask 523264
    %v217 = vsel %vm216, %v183, 0
    %219 = vmatprep.subr.bf16.mxu0 0
    %220 = vmatpush1.bf16.msra.mxu0 %v208
    %221 = vmatprep.subr.bf16.mxu0 0
    %222 = vmatpush1.bf16.msra.mxu0 %v209
    %223 = vmatprep.subr.bf16.mxu0 0
    %224 = vmatpush1.bf16.msra.mxu0 %v210
    %225 = vmatprep.subr.bf16.mxu0 0
    %226 = vmatpush1.bf16.msra.mxu0 %v211
    %227 = vmatprep.subr.bf16.mxu0 0
    %228 = vmatpush1.bf16.msra.mxu0 0
    %229 = vmatprep.subr.bf16.mxu0 0
    %230 = vmatpush1.bf16.msra.mxu0 0
    %231 = vmatprep.subr.bf16.mxu0 0
    %232 = vmatpush1.bf16.msra.mxu0 0
    %233 = vmatprep.subr.bf16.mxu0 0
    %234 = vmatpush1.bf16.msra.mxu0 0
    %235 = vmatprep.subr.bf16.mxu0 0
    %236 = vmatpush1.bf16.msra.mxu0 0
    %237 = vmatprep.subr.bf16.mxu0 0
    %238 = vmatpush1.bf16.msra.mxu0 0
    %239 = vmatprep.subr.bf16.mxu0 0
    %240 = vmatpush1.bf16.msra.mxu0 0
    %241 = vmatprep.subr.bf16.mxu0 0
    %242 = vmatpush1.bf16.msra.mxu0 0
    %243 = vmatprep.subr.bf16.mxu0 0
    %244 = vmatpush1.bf16.msra.mxu0 0
    %245 = vmatprep.subr.bf16.mxu0 0
    %246 = vmatpush1.bf16.msra.mxu0 0
    %247 = vmatprep.subr.bf16.mxu0 0
    %248 = vmatpush1.bf16.msra.mxu0 0
    %249 = vmatprep.subr.bf16.mxu0 0
    %250 = vmatpush1.bf16.msra.mxu0 0
    %251 = vmatprep.mubr.bf16.mxu0 0
    %252 = vmatmul.mubr.bf16.gmra.mrb[0].mxu0 %v217
    %v253 = vpop.f32.mrb[0].mxu0
    %v254 = vadd.f32 0.0, %v253
    %v255 = vpop.f32.mrb[0].mxu0
    %v256 = vpop.f32.mrb[0].mxu0
    %v257 = vadd.f32 0.0, %v256
    %v258 = vpop.f32.mrb[0].mxu0
    %259 = vdwg.mxu0
    %v268 = vunpack.c.l.b16 %v161
    %v269 = vunpack.c.l.b16 %v162
    %v270 = vunpack.c.l.b16 %v163
    %v271 = vunpack.c.l.b16 %v164
    %v272 = vunpack.c.l.b16 %v165
    %v273 = vunpack.c.l.b16 %v166
    %v274 = vunpack.c.l.b16 %v167
    %v275 = vunpack.c.l.b16 %v168
    %v276 = vpack.c.b16 %v269, %v268
    %v277 = vpack.c.b16 %v271, %v270
    %v278 = vpack.c.b16 %v273, %v272
    %v279 = vpack.c.b16 %v275, %v274
    %v284 = vsel %vm216, %v160, 0
    %286 = vmatprep.subr.bf16.mxu0 0
    %287 = vmatpush1.bf16.msra.mxu0 %v276
    %288 = vmatprep.subr.bf16.mxu0 0
    %289 = vmatpush1.bf16.msra.mxu0 %v277
    %290 = vmatprep.subr.bf16.mxu0 0
    %291 = vmatpush1.bf16.msra.mxu0 %v278
    %292 = vmatprep.subr.bf16.mxu0 0
    %293 = vmatpush1.bf16.msra.mxu0 %v279
    %294 = vmatprep.subr.bf16.mxu0 0
    %295 = vmatpush1.bf16.msra.mxu0 0
    %296 = vmatprep.subr.bf16.mxu0 0
    %297 = vmatpush1.bf16.msra.mxu0 0
    %298 = vmatprep.subr.bf16.mxu0 0
    %299 = vmatpush1.bf16.msra.mxu0 0
    %300 = vmatprep.subr.bf16.mxu0 0
    %301 = vmatpush1.bf16.msra.mxu0 0
    %302 = vmatprep.subr.bf16.mxu0 0
    %303 = vmatpush1.bf16.msra.mxu0 0
    %304 = vmatprep.subr.bf16.mxu0 0
    %305 = vmatpush1.bf16.msra.mxu0 0
    %306 = vmatprep.subr.bf16.mxu0 0
    %307 = vmatpush1.bf16.msra.mxu0 0
    %308 = vmatprep.subr.bf16.mxu0 0
    %309 = vmatpush1.bf16.msra.mxu0 0
    %310 = vmatprep.subr.bf16.mxu0 0
    %311 = vmatpush1.bf16.msra.mxu0 0
    %312 = vmatprep.subr.bf16.mxu0 0
    %313 = vmatpush1.bf16.msra.mxu0 0
    %314 = vmatprep.subr.bf16.mxu0 0
    %315 = vmatpush1.bf16.msra.mxu0 0
    %316 = vmatprep.subr.bf16.mxu0 0
    %317 = vmatpush1.bf16.msra.mxu0 0
    %318 = vmatprep.mubr.bf16.mxu0 0
    %319 = vmatmul.mubr.bf16.gmra.mrb[0].mxu0 %v284
    %v320 = vpop.f32.mrb[0].mxu0
    %v321 = vadd.f32 %v254, %v320
    %v322 = vpop.f32.mrb[0].mxu0
    %v323 = vpop.f32.mrb[0].mxu0
    %v324 = vadd.f32 %v257, %v323
    %v325 = vpop.f32.mrb[0].mxu0
    %326 = vdwg.mxu0
    %v327 = vlaneseq
    %v328 = vshrl.u32 %v327, 7
    %v329 = vsub.s32 0, %v328
    %v330 = vrot.slane %v140, %v329
    %v331 = vadd.f32 %v321, %v330
    %v332 = vadd.f32 %v324, %v330
    %v333 = vtanh.pop %v331
    %v334 = vtanh.pop %v332
    %v335 = vlaneseq
    %v336 = vshrl.u32 %v335, 7
    %v337 = vsub.s32 0, %v336
    %v338 = vrot.slane %v141, %v337
    %v339 = vmul.f32 %v333, %v338
    %v340 = vmul.f32 %v334, %v338
    %v341 = vsel %vm157, %v339, 0.0
    %342 = vadd.xlane.f32.xlu0 %v341
    %v343 = vpop.xlane.xlu0 %342
    %v344 = vsel %vm157, %v340, 0.0
    %345 = vadd.xlane.f32.xlu0 %v344
    %v346 = vpop.xlane.xlu0 %345
    %348 = vrot.lane.b32.xlu0 %v141, 96
    %v349 = vpop.permute.xlu0 %348
    %s350 = vtos %v349
    %v351 = vstv %s350
    %v353 = vadd.f32 %v343, %v351
    %v354 = vadd.f32 %v346, %v351
    %v357 = vlaneseq
    %v358 = vand.u32 %v357, 127
    %v359 = vlaneseq
    %v360 = vshrl.u32 %v359, 7
    %v361 = vsub.s32 %v358, %v360
    %v362 = vrot.slane %v353, %v361
    %v363 = vlaneseq
    %v364 = vshrl.u32 %v363, 7
    %v365 = vsub.s32 %v358, %v364
    %v366 = vrot.slane %v354, %v365
    %vm367 = vcmask 1041409
    %v368 = vsel %vm367, %v366, %v362
    %vm370 = vcmask 58368
    %v371 = vsel %vm370, %v368, -inf
    %372 = vmax.xlane.f32.xlu0 %v371
    %v373 = vpop.xlane.xlu0 %372
    %v375 = vlaneseq
    %v376 = vshrl.u32 %v375, 7
    %v377 = vsub.s32 0, %v376
    %v378 = vrot.slane %v373, %v377
    %v379 = vlaneseq
    %v380 = vshrl.u32 %v379, 7
    %v381 = vsub.s32 1, %v380
    %v382 = vrot.slane %v373, %v381
    %v385 = vsub.f32 %v353, %v378
    %v386 = vsub.f32 %v354, %v382
    %v387 = vmul.f32 %v385, 1.442695
    %v388 = vpow.pop %v387
    %v389 = vmul.f32 %v386, 1.442695
    %v390 = vpow.pop %v389
    %393 = vset.pattern.permute.xlu0 0
    %394 = vperm.xlu0 %393, %v388
    %v395 = vpop.permute.xlu0 %394
    %396 = vset.pattern.permute.xlu0 0
    %397 = vperm.xlu0 %396, %v390
    %v398 = vpop.permute.xlu0 %397
    %v399 = vlaneseq
    %v400 = vshrl.u32 %v399, 7
    %v401 = vsub.s32 %v358, %v400
    %v402 = vrot.slane %v395, %v401
    %v403 = vlaneseq
    %v404 = vshrl.u32 %v403, 7
    %v405 = vsub.s32 %v358, %v404
    %v406 = vrot.slane %v398, %v405
    %v407 = vsel %vm367, %v406, %v402
    %v409 = vsel %vm370, %v407, 0.0
    %410 = vadd.xlane.f32.xlu0 %v409
    %v411 = vpop.xlane.xlu0 %410
    %v413 = vlaneseq
    %v414 = vshrl.u32 %v413, 7
    %v415 = vsub.s32 0, %v414
    %v416 = vrot.slane %v411, %v415
    %v417 = vlaneseq
    %v418 = vshrl.u32 %v417, 7
    %v419 = vsub.s32 1, %v418
    %v420 = vrot.slane %v411, %v419
    %v423 = vrcp.pop %v416
    %v424 = vmul.f32 %v388, %v423
    %v425 = vrcp.pop %v420
    %v426 = vmul.f32 %v390, %v425
    %v427 = vld [vmem:[%s5] sm:$0xf]
    %v428 = vld [vmem:[%s5 + $0x4] sm:$0xf]
    %v429 = vld [vmem:[%s5 + $0x8] sm:$0xf]
    %v430 = vld [vmem:[%s5 + $0xc] sm:$0xf]
    %v431 = vlaneseq
    %v432 = vshrl.u32 %v431, 7
    %v433 = vsub.s32 0, %v432
    %v434 = vrot.slane %v142, %v433
    %v437 = vunpack.c.l.b16 %v40
    %v438 = vunpack.c.l.b16 %v41
    %v439 = vpack.c.b16 %v438, %v437
    %v444 = vunpack.c.l.b16 %v427
    %v445 = vunpack.c.l.b16 %v428
    %v446 = vunpack.c.l.b16 %v429
    %v447 = vunpack.c.l.b16 %v430
    %v448 = vpack.c.b16 %v445, %v444
    %v449 = vpack.c.b16 %v447, %v446
    %v453 = vsel %vm157, %v439, 0
    %455 = vmatprep.subr.bf16.mxu0 0
    %456 = vmatpush1.bf16.msra.mxu0 %v448
    %457 = vmatprep.subr.bf16.mxu0 0
    %458 = vmatpush1.bf16.msra.mxu0 %v449
    %459 = vmatprep.subr.bf16.mxu0 0
    %460 = vmatpush1.bf16.msra.mxu0 0
    %461 = vmatprep.subr.bf16.mxu0 0
    %462 = vmatpush1.bf16.msra.mxu0 0
    %463 = vmatprep.subr.bf16.mxu0 0
    %464 = vmatpush1.bf16.msra.mxu0 0
    %465 = vmatprep.subr.bf16.mxu0 0
    %466 = vmatpush1.bf16.msra.mxu0 0
    %467 = vmatprep.subr.bf16.mxu0 0
    %468 = vmatpush1.bf16.msra.mxu0 0
    %469 = vmatprep.subr.bf16.mxu0 0
    %470 = vmatpush1.bf16.msra.mxu0 0
    %471 = vmatprep.subr.bf16.mxu0 0
    %472 = vmatpush1.bf16.msra.mxu0 0
    %473 = vmatprep.subr.bf16.mxu0 0
    %474 = vmatpush1.bf16.msra.mxu0 0
    %475 = vmatprep.subr.bf16.mxu0 0
    %476 = vmatpush1.bf16.msra.mxu0 0
    %477 = vmatprep.subr.bf16.mxu0 0
    %478 = vmatpush1.bf16.msra.mxu0 0
    %479 = vmatprep.subr.bf16.mxu0 0
    %480 = vmatpush1.bf16.msra.mxu0 0
    %481 = vmatprep.subr.bf16.mxu0 0
    %482 = vmatpush1.bf16.msra.mxu0 0
    %483 = vmatprep.subr.bf16.mxu0 0
    %484 = vmatpush1.bf16.msra.mxu0 0
    %485 = vmatprep.subr.bf16.mxu0 0
    %486 = vmatpush1.bf16.msra.mxu0 0
    %487 = vmatprep.mubr.bf16.mxu0 0
    %488 = vmatmul.mubr.bf16.gmra.mrb[0].mxu0 %v453
    %v489 = vpop.f32.mrb[0].mxu0
    %v490 = vadd.f32 %v434, %v489
    %v491 = vpop.f32.mrb[0].mxu0
    %v492 = vpop.f32.mrb[0].mxu0
    %v493 = vadd.f32 %v434, %v492
    %v494 = vpop.f32.mrb[0].mxu0
    %495 = vdwg.mxu0
    %v496 = vcombine.high %v490, 0.0
    %v498 = vunpack.c.l.s4 1983009808
    %v499 = vunpack.c.0.s8 %v498
    %v500 = vlaneseq
    %v501 = vshrl.u32 %v500, 7
    %v502 = vsub.s32 %v499, %v501
    %v503 = vrot.slane %v490, %v502
    %v505 = vunpack.c.l.s4 1983009808
    %v506 = vunpack.c.0.s8 %v505
    %v507 = vlaneseq
    %v508 = vshrl.u32 %v507, 7
    %v509 = vsub.s32 %v506, %v508
    %v510 = vrot.slane %v496, %v509
    %v511 = vcombine.high %v493, 0.0
    %v513 = vunpack.c.l.s4 1983009808
    %v514 = vunpack.c.0.s8 %v513
    %v515 = vlaneseq
    %v516 = vshrl.u32 %v515, 7
    %v517 = vsub.s32 %v514, %v516
    %v518 = vrot.slane %v493, %v517
    %v520 = vunpack.c.l.s4 1983009808
    %v521 = vunpack.c.0.s8 %v520
    %v522 = vlaneseq
    %v523 = vshrl.u32 %v522, 7
    %v524 = vsub.s32 %v521, %v523
    %v525 = vrot.slane %v511, %v524
    %v526 = vcombine.low %v503, %v518
    %v527 = vcombine.high %v503, %v518
    %v529 = vunpack.c.l.s4 1934713408
    %v530 = vunpack.c.0.s8 %v529
    %v531 = vlaneseq
    %v532 = vshrl.u32 %v531, 7
    %v533 = vsub.s32 %v530, %v532
    %v534 = vrot.slane %v526, %v533
    %v536 = vunpack.c.l.s4 1934713408
    %v537 = vunpack.c.0.s8 %v536
    %v538 = vlaneseq
    %v539 = vshrl.u32 %v538, 7
    %v540 = vsub.s32 %v537, %v539
    %v541 = vrot.slane %v527, %v540
    %v542 = vcombine.low %v510, %v525
    %v543 = vcombine.high %v510, %v525
    %v545 = vunpack.c.l.s4 1934713408
    %v546 = vunpack.c.0.s8 %v545
    %v547 = vlaneseq
    %v548 = vshrl.u32 %v547, 7
    %v549 = vsub.s32 %v546, %v548
    %v550 = vrot.slane %v542, %v549
    %v552 = vunpack.c.l.s4 1934713408
    %v553 = vunpack.c.0.s8 %v552
    %v554 = vlaneseq
    %v555 = vshrl.u32 %v554, 7
    %v556 = vsub.s32 %v553, %v555
    %v557 = vrot.slane %v543, %v556
    %v558 = vcombine.high %v534, 0.0
    %v559 = vcombine.high %v541, 0.0
    %v560 = vcombine.high %v550, 0.0
    %v561 = vcombine.high %v557, 0.0
    %vm562 = vcmask 517120
    %563 = vst.msk [vmem:[#allocation2] sm:$0x3] %vm562, %v534
    %564 = vst.msk [vmem:[#allocation2 + $0x2] sm:$0x3] %vm562, %v558
    %565 = vst.msk [vmem:[#allocation2 + $0x4] sm:$0x3] %vm562, %v541
    %566 = vst.msk [vmem:[#allocation2 + $0x6] sm:$0x3] %vm562, %v559
    %567 = vst.msk [vmem:[#allocation2 + $0x8] sm:$0x3] %vm562, %v550
    %568 = vst.msk [vmem:[#allocation2 + $0xa] sm:$0x3] %vm562, %v560
    %569 = vst.msk [vmem:[#allocation2 + $0xc] sm:$0x3] %vm562, %v557
    %570 = vst.msk [vmem:[#allocation2 + $0xe] sm:$0x3] %vm562, %v561
    %v571 = vld [vmem:[%s6] sm:$0xff]
    %v572 = vld [vmem:[%s6 + $0x8] sm:$0xff]
    %v573 = vld [vmem:[%s6 + $0x10] sm:$0xff]
    %v574 = vld [vmem:[%s6 + $0x18] sm:$0xff]
    %v575 = vld [vmem:[#allocation2] sm:$0x3]
    %vm576 = vcmp.eq.s32.totalorder %v358, 0
    %v577 = vsel %vm576, 1, 0
    %vm578 = vcmp.eq.s32.totalorder %v577, 1
    %581 = vset.pattern.permute.xlu0 0
    %582 = vperm.xlu0 %581, %v424
    %v583 = vpop.permute.xlu0 %582
    %584 = vset.pattern.permute.xlu0 0
    %585 = vperm.xlu0 %584, %v426
    %v586 = vpop.permute.xlu0 %585
    %v587 = vlaneseq
    %v588 = vshrl.u32 %v587, 7
    %v589 = vsub.s32 %v358, %v588
    %v590 = vrot.slane %v583, %v589
    %v591 = vlaneseq
    %v592 = vshrl.u32 %v591, 7
    %v593 = vsub.s32 %v358, %v592
    %v594 = vrot.slane %v586, %v593
    %v595 = vsel %vm367, %v594, %v590
    %v597 = vsel %vm578, %v595, 0.0
    %v598 = vsel %vm370, %v597, 0.0
    %599 = vadd.xlane.f32.xlu0 %v598
    %v600 = vpop.xlane.xlu0 %599
    %v602 = vsel %vm157, 0.0, 0
    %604 = vmatprep.subr.mxu0 0.0
    %605 = vmatpush1.msra.mxu0 %v571
    %606 = vmatprep.subr.mxu0 0.0
    %607 = vmatpush1.msra.mxu0 %v572
    %608 = vmatprep.subr.mxu0 0.0
    %609 = vmatpush1.msra.mxu0 %v573
    %610 = vmatprep.subr.mxu0 0.0
    %611 = vmatpush1.msra.mxu0 %v574
    %612 = vmatprep.subr.mxu0 0.0
    %613 = vmatpush1.msra.mxu0 0.0
    %614 = vmatprep.subr.mxu0 0.0
    %615 = vmatpush1.msra.mxu0 0.0
    %616 = vmatprep.subr.mxu0 0.0
    %617 = vmatpush1.msra.mxu0 0.0
    %618 = vmatprep.subr.mxu0 0.0
    %619 = vmatpush1.msra.mxu0 0.0
    %620 = vmatprep.subr.mxu0 0.0
    %621 = vmatpush1.msra.mxu0 0.0
    %622 = vmatprep.subr.mxu0 0.0
    %623 = vmatpush1.msra.mxu0 0.0
    %624 = vmatprep.subr.mxu0 0.0
    %625 = vmatpush1.msra.mxu0 0.0
    %626 = vmatprep.subr.mxu0 0.0
    %627 = vmatpush1.msra.mxu0 0.0
    %628 = vmatprep.subr.mxu0 0.0
    %629 = vmatpush1.msra.mxu0 0.0
    %630 = vmatprep.subr.mxu0 0.0
    %631 = vmatpush1.msra.mxu0 0.0
    %632 = vmatprep.subr.mxu0 0.0
    %633 = vmatpush1.msra.mxu0 0.0
    %634 = vmatprep.subr.mxu0 0.0
    %635 = vmatpush1.msra.mxu0 0.0
    %636 = vmatprep.subr.mxu0 0.0
    %637 = vmatpush1.msra.mxu0 0.0
    %638 = vmatprep.subr.mxu0 0.0
    %639 = vmatpush1.msra.mxu0 0.0
    %640 = vmatprep.subr.mxu0 0.0
    %641 = vmatpush1.msra.mxu0 0.0
    %642 = vmatprep.subr.mxu0 0.0
    %643 = vmatpush1.msra.mxu0 0.0
    %644 = vmatprep.subr.mxu0 0.0
    %645 = vmatpush1.msra.mxu0 0.0
    %646 = vmatprep.subr.mxu0 0.0
    %647 = vmatpush1.msra.mxu0 0.0
    %648 = vmatprep.subr.mxu0 0.0
    %649 = vmatpush1.msra.mxu0 0.0
    %650 = vmatprep.subr.mxu0 0.0
    %651 = vmatpush1.msra.mxu0 0.0
    %652 = vmatprep.subr.mxu0 0.0
    %653 = vmatpush1.msra.mxu0 0.0
    %654 = vmatprep.subr.mxu0 0.0
    %655 = vmatpush1.msra.mxu0 0.0
    %656 = vmatprep.subr.mxu0 0.0
    %657 = vmatpush1.msra.mxu0 0.0
    %658 = vmatprep.subr.mxu0 0.0
    %659 = vmatpush1.msra.mxu0 0.0
    %660 = vmatprep.subr.mxu0 0.0
    %661 = vmatpush1.msra.mxu0 0.0
    %662 = vmatprep.subr.mxu0 0.0
    %663 = vmatpush1.msra.mxu0 0.0
    %664 = vmatprep.subr.mxu0 0.0
    %665 = vmatpush1.msra.mxu0 0.0
    %666 = vmatprep.subr.mxu0 0.0
    %667 = vmatpush1.msra.mxu0 0.0
    %668 = vmatprep.mubr.f32.mxu0 0.0
    %669 = vmatmul.mubr.f32.gmra.mrb[0].mxu0 %v602
    %v670 = vpop.f32.mrb[0].mxu0
    %v671 = vadd.f32 %v143, %v670
    %v672 = vpop.f32.mrb[0].mxu0
    %673 = vdwg.mxu0
    %v674 = vadd.f32 %v575, %v671
    %v675 = vxor.u32 %v674, 2147483648
    %v676 = vmul.f32 %v675, 1.442695
    %v677 = vpow.pop %v676
    %v678 = vadd.f32 %v677, 1.0
    %v679 = vrcp.pop %v678
    %v680 = vmul.f32 1.0, %v679
    %682 = vrot.lane.b32.xlu0 %v671, 96
    %v683 = vpop.permute.xlu0 %682
    %v685 = vmul.f32 %v680, %v683
    %687 = vrot.lane.b32.xlu0 %v685, 32
    %v688 = vpop.permute.xlu0 %687
    %v690 = vadd.f32 %v575, %v688
    %v691 = vtanh.pop %v690
    %v692 = vmul.f32 %v600, %v691
    %v693 = vsub.f32 1.0, %v600
    %v694 = vmul.f32 %v693, 0.0
    %v695 = vadd.f32 %v692, %v694
    %v696 = vrot.slane %v671, 7
    %v698 = vadd.f32 %v575, %v696
    %v699 = vxor.u32 %v698, 2147483648
    %v700 = vmul.f32 %v699, 1.442695
    %v701 = vpow.pop %v700
    %v702 = vadd.f32 %v701, 1.0
    %v703 = vrcp.pop %v702
    %v704 = vmul.f32 1.0, %v703
    %705 = vrot.lane.b32.xlu0 %v696, 96
    %v706 = vpop.permute.xlu0 %705
    %v708 = vmul.f32 %v704, %v706
    %710 = vrot.lane.b32.xlu0 %v708, 32
    %v711 = vpop.permute.xlu0 %710
    %v713 = vadd.f32 %v575, %v711
    %v714 = vtanh.pop %v713
    %v715 = vmul.f32 %v600, %v714
    %v716 = vadd.f32 %v715, %v694
    %s717 = scalar_lea.vmem [#allocation2], 2
    %v718 = vld [vmem:[%s717] sm:$0x3]
    %vm719 = vcmp.eq.s32.totalorder %v358, 1
    %v720 = vsel %vm719, 1, 0
    %vm721 = vcmp.eq.s32.totalorder %v720, 1
    %v722 = vsel %vm721, %v595, 0.0
    %v723 = vsel %vm370, %v722, 0.0
    %724 = vadd.xlane.f32.xlu0 %v723
    %v725 = vpop.xlane.xlu0 %724
    %727 = vrot.lane.b32.xlu0 %v695, 96
    %v728 = vpop.permute.xlu0 %727
    %v729 = vsel %vm157, %v728, 0
    %731 = vmatprep.subr.mxu0 0.0
    %732 = vmatpush1.msra.mxu0 %v571
    %733 = vmatprep.subr.mxu0 0.0
    %734 = vmatpush1.msra.mxu0 %v572
    %735 = vmatprep.subr.mxu0 0.0
    %736 = vmatpush1.msra.mxu0 %v573
    %737 = vmatprep.subr.mxu0 0.0
    %738 = vmatpush1.msra.mxu0 %v574
    %739 = vmatprep.subr.mxu0 0.0
    %740 = vmatpush1.msra.mxu0 0.0
    %741 = vmatprep.subr.mxu0 0.0
    %742 = vmatpush1.msra.mxu0 0.0
    %743 = vmatprep.subr.mxu0 0.0
    %744 = vmatpush1.msra.mxu0 0.0
    %745 = vmatprep.subr.mxu0 0.0
    %746 = vmatpush1.msra.mxu0 0.0
    %747 = vmatprep.subr.mxu0 0.0
    %748 = vmatpush1.msra.mxu0 0.0
    %749 = vmatprep.subr.mxu0 0.0
    %750 = vmatpush1.msra.mxu0 0.0
    %751 = vmatprep.subr.mxu0 0.0
    %752 = vmatpush1.msra.mxu0 0.0
    %753 = vmatprep.subr.mxu0 0.0
    %754 = vmatpush1.msra.mxu0 0.0
    %755 = vmatprep.subr.mxu0 0.0
    %756 = vmatpush1.msra.mxu0 0.0
    %757 = vmatprep.subr.mxu0 0.0
    %758 = vmatpush1.msra.mxu0 0.0
    %759 = vmatprep.subr.mxu0 0.0
    %760 = vmatpush1.msra.mxu0 0.0
    %761 = vmatprep.subr.mxu0 0.0
    %762 = vmatpush1.msra.mxu0 0.0
    %763 = vmatprep.subr.mxu0 0.0
    %764 = vmatpush1.msra.mxu0 0.0
    %765 = vmatprep.subr.mxu0 0.0
    %766 = vmatpush1.msra.mxu0 0.0
    %767 = vmatprep.subr.mxu0 0.0
    %768 = vmatpush1.msra.mxu0 0.0
    %769 = vmatprep.subr.mxu0 0.0
    %770 = vmatpush1.msra.mxu0 0.0
    %771 = vmatprep.subr.mxu0 0.0
    %772 = vmatpush1.msra.mxu0 0.0
    %773 = vmatprep.subr.mxu0 0.0
    %774 = vmatpush1.msra.mxu0 0.0
    %775 = vmatprep.subr.mxu0 0.0
    %776 = vmatpush1.msra.mxu0 0.0
    %777 = vmatprep.subr.mxu0 0.0
    %778 = vmatpush1.msra.mxu0 0.0
    %779 = vmatprep.subr.mxu0 0.0
    %780 = vmatpush1.msra.mxu0 0.0
    %781 = vmatprep.subr.mxu0 0.0
    %782 = vmatpush1.msra.mxu0 0.0
    %783 = vmatprep.subr.mxu0 0.0
    %784 = vmatpush1.msra.mxu0 0.0
    %785 = vmatprep.subr.mxu0 0.0
    %786 = vmatpush1.msra.mxu0 0.0
    %787 = vmatprep.subr.mxu0 0.0
    %788 = vmatpush1.msra.mxu0 0.0
    %789 = vmatprep.subr.mxu0 0.0
    %790 = vmatpush1.msra.mxu0 0.0
    %791 = vmatprep.subr.mxu0 0.0
    %792 = vmatpush1.msra.mxu0 0.0
    %793 = vmatprep.subr.mxu0 0.0
    %794 = vmatpush1.msra.mxu0 0.0
    %795 = vmatprep.mubr.f32.mxu0 0.0
    %796 = vmatmul.mubr.f32.gmra.mrb[0].mxu0 %v729
    %v797 = vpop.f32.mrb[0].mxu0
    %v798 = vadd.f32 %v143, %v797
    %v799 = vpop.f32.mrb[0].mxu0
    %800 = vdwg.mxu0
    %v802 = vrot.slane %v716, 1
    %803 = vrot.lane.b32.xlu0 %v802, 96
    %v804 = vpop.permute.xlu0 %803
    %v805 = vsel %vm157, %v804, 0
    %807 = vmatprep.subr.mxu0 0.0
    %808 = vmatpush1.msra.mxu0 %v571
    %809 = vmatprep.subr.mxu0 0.0
    %810 = vmatpush1.msra.mxu0 %v572
    %811 = vmatprep.subr.mxu0 0.0
    %812 = vmatpush1.msra.mxu0 %v573
    %813 = vmatprep.subr.mxu0 0.0
    %814 = vmatpush1.msra.mxu0 %v574
    %815 = vmatprep.subr.mxu0 0.0
    %816 = vmatpush1.msra.mxu0 0.0
    %817 = vmatprep.subr.mxu0 0.0
    %818 = vmatpush1.msra.mxu0 0.0
    %819 = vmatprep.subr.mxu0 0.0
    %820 = vmatpush1.msra.mxu0 0.0
    %821 = vmatprep.subr.mxu0 0.0
    %822 = vmatpush1.msra.mxu0 0.0
    %823 = vmatprep.subr.mxu0 0.0
    %824 = vmatpush1.msra.mxu0 0.0
    %825 = vmatprep.subr.mxu0 0.0
    %826 = vmatpush1.msra.mxu0 0.0
    %827 = vmatprep.subr.mxu0 0.0
    %828 = vmatpush1.msra.mxu0 0.0
    %829 = vmatprep.subr.mxu0 0.0
    %830 = vmatpush1.msra.mxu0 0.0
    %831 = vmatprep.subr.mxu0 0.0
    %832 = vmatpush1.msra.mxu0 0.0
    %833 = vmatprep.subr.mxu0 0.0
    %834 = vmatpush1.msra.mxu0 0.0
    %835 = vmatprep.subr.mxu0 0.0
    %836 = vmatpush1.msra.mxu0 0.0
    %837 = vmatprep.subr.mxu0 0.0
    %838 = vmatpush1.msra.mxu0 0.0
    %839 = vmatprep.subr.mxu0 0.0
    %840 = vmatpush1.msra.mxu0 0.0
    %841 = vmatprep.subr.mxu0 0.0
    %842 = vmatpush1.msra.mxu0 0.0
    %843 = vmatprep.subr.mxu0 0.0
    %844 = vmatpush1.msra.mxu0 0.0
    %845 = vmatprep.subr.mxu0 0.0
    %846 = vmatpush1.msra.mxu0 0.0
    %847 = vmatprep.subr.mxu0 0.0
    %848 = vmatpush1.msra.mxu0 0.0
    %849 = vmatprep.subr.mxu0 0.0
    %850 = vmatpush1.msra.mxu0 0.0
    %851 = vmatprep.subr.mxu0 0.0
    %852 = vmatpush1.msra.mxu0 0.0
    %853 = vmatprep.subr.mxu0 0.0
    %854 = vmatpush1.msra.mxu0 0.0
    %855 = vmatprep.subr.mxu0 0.0
    %856 = vmatpush1.msra.mxu0 0.0
    %857 = vmatprep.subr.mxu0 0.0
    %858 = vmatpush1.msra.mxu0 0.0
    %859 = vmatprep.subr.mxu0 0.0
    %860 = vmatpush1.msra.mxu0 0.0
    %861 = vmatprep.subr.mxu0 0.0
    %862 = vmatpush1.msra.mxu0 0.0
    %863 = vmatprep.subr.mxu0 0.0
    %864 = vmatpush1.msra.mxu0 0.0
    %865 = vmatprep.subr.mxu0 0.0
    %866 = vmatpush1.msra.mxu0 0.0
    %867 = vmatprep.subr.mxu0 0.0
    %868 = vmatpush1.msra.mxu0 0.0
    %869 = vmatprep.subr.mxu0 0.0
    %870 = vmatpush1.msra.mxu0 0.0
    %871 = vmatprep.mubr.f32.mxu0 0.0
    %872 = vmatmul.mubr.f32.gmra.mrb[0].mxu0 %v805
    %v873 = vpop.f32.mrb[0].mxu0
    %v874 = vadd.f32 %v143, %v873
    %v875 = vpop.f32.mrb[0].mxu0
    %876 = vdwg.mxu0
    %v877 = vadd.f32 %v718, %v798
    %v878 = vxor.u32 %v877, 2147483648
    %v879 = vmul.f32 %v878, 1.442695
    %v880 = vpow.pop %v879
    %v881 = vadd.f32 %v880, 1.0
    %v882 = vrcp.pop %v881
    %v883 = vmul.f32 1.0, %v882
    %885 = vrot.lane.b32.xlu0 %v798, 96
    %v886 = vpop.permute.xlu0 %885
    %v888 = vmul.f32 %v883, %v886
    %890 = vrot.lane.b32.xlu0 %v888, 32
    %v891 = vpop.permute.xlu0 %890
    %v893 = vadd.f32 %v718, %v891
    %v894 = vtanh.pop %v893
    %v895 = vmul.f32 %v725, %v894
    %v896 = vsub.f32 1.0, %v725
    %v897 = vmul.f32 %v896, %v695
    %v898 = vadd.f32 %v895, %v897
    %v900 = vrot.slane %v874, 7
    %v902 = vadd.f32 %v718, %v900
    %v903 = vxor.u32 %v902, 2147483648
    %v904 = vmul.f32 %v903, 1.442695
    %v905 = vpow.pop %v904
    %v906 = vadd.f32 %v905, 1.0
    %v907 = vrcp.pop %v906
    %v908 = vmul.f32 1.0, %v907
    %909 = vrot.lane.b32.xlu0 %v900, 96
    %v910 = vpop.permute.xlu0 %909
    %v912 = vmul.f32 %v908, %v910
    %914 = vrot.lane.b32.xlu0 %v912, 32
    %v915 = vpop.permute.xlu0 %914
    %v917 = vadd.f32 %v718, %v915
    %v918 = vtanh.pop %v917
    %v919 = vmul.f32 %v725, %v918
    %v920 = vmul.f32 %v896, %v716
    %v921 = vadd.f32 %v919, %v920
    %s922 = scalar_lea.vmem [#allocation2], 4
    %v923 = vld [vmem:[%s922] sm:$0x3]
    %vm924 = vcmp.eq.s32.totalorder %v358, 2
    %v925 = vsel %vm924, 1, 0
    %vm926 = vcmp.eq.s32.totalorder %v925, 1
    %v927 = vsel %vm926, %v595, 0.0
    %v928 = vsel %vm370, %v927, 0.0
    %929 = vadd.xlane.f32.xlu0 %v928
    %v930 = vpop.xlane.xlu0 %929
    %932 = vrot.lane.b32.xlu0 %v898, 96
    %v933 = vpop.permute.xlu0 %932
    %v934 = vsel %vm157, %v933, 0
    %936 = vmatprep.subr.mxu0 0.0
    %937 = vmatpush1.msra.mxu0 %v571
    %938 = vmatprep.subr.mxu0 0.0
    %939 = vmatpush1.msra.mxu0 %v572
    %940 = vmatprep.subr.mxu0 0.0
    %941 = vmatpush1.msra.mxu0 %v573
    %942 = vmatprep.subr.mxu0 0.0
    %943 = vmatpush1.msra.mxu0 %v574
    %944 = vmatprep.subr.mxu0 0.0
    %945 = vmatpush1.msra.mxu0 0.0
    %946 = vmatprep.subr.mxu0 0.0
    %947 = vmatpush1.msra.mxu0 0.0
    %948 = vmatprep.subr.mxu0 0.0
    %949 = vmatpush1.msra.mxu0 0.0
    %950 = vmatprep.subr.mxu0 0.0
    %951 = vmatpush1.msra.mxu0 0.0
    %952 = vmatprep.subr.mxu0 0.0
    %953 = vmatpush1.msra.mxu0 0.0
    %954 = vmatprep.subr.mxu0 0.0
    %955 = vmatpush1.msra.mxu0 0.0
    %956 = vmatprep.subr.mxu0 0.0
    %957 = vmatpush1.msra.mxu0 0.0
    %958 = vmatprep.subr.mxu0 0.0
    %959 = vmatpush1.msra.mxu0 0.0
    %960 = vmatprep.subr.mxu0 0.0
    %961 = vmatpush1.msra.mxu0 0.0
    %962 = vmatprep.subr.mxu0 0.0
    %963 = vmatpush1.msra.mxu0 0.0
    %964 = vmatprep.subr.mxu0 0.0
    %965 = vmatpush1.msra.mxu0 0.0
    %966 = vmatprep.subr.mxu0 0.0
    %967 = vmatpush1.msra.mxu0 0.0
    %968 = vmatprep.subr.mxu0 0.0
    %969 = vmatpush1.msra.mxu0 0.0
    %970 = vmatprep.subr.mxu0 0.0
    %971 = vmatpush1.msra.mxu0 0.0
    %972 = vmatprep.subr.mxu0 0.0
    %973 = vmatpush1.msra.mxu0 0.0
    %974 = vmatprep.subr.mxu0 0.0
    %975 = vmatpush1.msra.mxu0 0.0
    %976 = vmatprep.subr.mxu0 0.0
    %977 = vmatpush1.msra.mxu0 0.0
    %978 = vmatprep.subr.mxu0 0.0
    %979 = vmatpush1.msra.mxu0 0.0
    %980 = vmatprep.subr.mxu0 0.0
    %981 = vmatpush1.msra.mxu0 0.0
    %982 = vmatprep.subr.mxu0 0.0
    %983 = vmatpush1.msra.mxu0 0.0
    %984 = vmatprep.subr.mxu0 0.0
    %985 = vmatpush1.msra.mxu0 0.0
    %986 = vmatprep.subr.mxu0 0.0
    %987 = vmatpush1.msra.mxu0 0.0
    %988 = vmatprep.subr.mxu0 0.0
    %989 = vmatpush1.msra.mxu0 0.0
    %990 = vmatprep.subr.mxu0 0.0
    %991 = vmatpush1.msra.mxu0 0.0
    %992 = vmatprep.subr.mxu0 0.0
    %993 = vmatpush1.msra.mxu0 0.0
    %994 = vmatprep.subr.mxu0 0.0
    %995 = vmatpush1.msra.mxu0 0.0
    %996 = vmatprep.subr.mxu0 0.0
    %997 = vmatpush1.msra.mxu0 0.0
    %998 = vmatprep.subr.mxu0 0.0
    %999 = vmatpush1.msra.mxu0 0.0
    %1000 = vmatprep.mubr.f32.mxu0 0.0
    %1001 = vmatmul.mubr.f32.gmra.mrb[0].mxu0 %v934
    %v1002 = vpop.f32.mrb[0].mxu0
    %v1003 = vadd.f32 %v143, %v1002
    %v1004 = vpop.f32.mrb[0].mxu0
    %1005 = vdwg.mxu0
    %v1007 = vrot.slane %v921, 1
    %1008 = vrot.lane.b32.xlu0 %v1007, 96
    %v1009 = vpop.permute.xlu0 %1008
    %v1010 = vsel %vm157, %v1009, 0
    %1012 = vmatprep.subr.mxu0 0.0
    %1013 = vmatpush1.msra.mxu0 %v571
    %1014 = vmatprep.subr.mxu0 0.0
    %1015 = vmatpush1.msra.mxu0 %v572
    %1016 = vmatprep.subr.mxu0 0.0
    %1017 = vmatpush1.msra.mxu0 %v573
    %1018 = vmatprep.subr.mxu0 0.0
    %1019 = vmatpush1.msra.mxu0 %v574
    %1020 = vmatprep.subr.mxu0 0.0
    %1021 = vmatpush1.msra.mxu0 0.0
    %1022 = vmatprep.subr.mxu0 0.0
    %1023 = vmatpush1.msra.mxu0 0.0
    %1024 = vmatprep.subr.mxu0 0.0
    %1025 = vmatpush1.msra.mxu0 0.0
    %1026 = vmatprep.subr.mxu0 0.0
    %1027 = vmatpush1.msra.mxu0 0.0
    %1028 = vmatprep.subr.mxu0 0.0
    %1029 = vmatpush1.msra.mxu0 0.0
    %1030 = vmatprep.subr.mxu0 0.0
    %1031 = vmatpush1.msra.mxu0 0.0
    %1032 = vmatprep.subr.mxu0 0.0
    %1033 = vmatpush1.msra.mxu0 0.0
    %1034 = vmatprep.subr.mxu0 0.0
    %1035 = vmatpush1.msra.mxu0 0.0
    %1036 = vmatprep.subr.mxu0 0.0
    %1037 = vmatpush1.msra.mxu0 0.0
    %1038 = vmatprep.subr.mxu0 0.0
    %1039 = vmatpush1.msra.mxu0 0.0
    %1040 = vmatprep.subr.mxu0 0.0
    %1041 = vmatpush1.msra.mxu0 0.0
    %1042 = vmatprep.subr.mxu0 0.0
    %1043 = vmatpush1.msra.mxu0 0.0
    %1044 = vmatprep.subr.mxu0 0.0
    %1045 = vmatpush1.msra.mxu0 0.0
    %1046 = vmatprep.subr.mxu0 0.0
    %1047 = vmatpush1.msra.mxu0 0.0
    %1048 = vmatprep.subr.mxu0 0.0
    %1049 = vmatpush1.msra.mxu0 0.0
    %1050 = vmatprep.subr.mxu0 0.0
    %1051 = vmatpush1.msra.mxu0 0.0
    %1052 = vmatprep.subr.mxu0 0.0
    %1053 = vmatpush1.msra.mxu0 0.0
    %1054 = vmatprep.subr.mxu0 0.0
    %1055 = vmatpush1.msra.mxu0 0.0
    %1056 = vmatprep.subr.mxu0 0.0
    %1057 = vmatpush1.msra.mxu0 0.0
    %1058 = vmatprep.subr.mxu0 0.0
    %1059 = vmatpush1.msra.mxu0 0.0
    %1060 = vmatprep.subr.mxu0 0.0
    %1061 = vmatpush1.msra.mxu0 0.0
    %1062 = vmatprep.subr.mxu0 0.0
    %1063 = vmatpush1.msra.mxu0 0.0
    %1064 = vmatprep.subr.mxu0 0.0
    %1065 = vmatpush1.msra.mxu0 0.0
    %1066 = vmatprep.subr.mxu0 0.0
    %1067 = vmatpush1.msra.mxu0 0.0
    %1068 = vmatprep.subr.mxu0 0.0
    %1069 = vmatpush1.msra.mxu0 0.0
    %1070 = vmatprep.subr.mxu0 0.0
    %1071 = vmatpush1.msra.mxu0 0.0
    %1072 = vmatprep.subr.mxu0 0.0
    %1073 = vmatpush1.msra.mxu0 0.0
    %1074 = vmatprep.subr.mxu0 0.0
    %1075 = vmatpush1.msra.mxu0 0.0
    %1076 = vmatprep.mubr.f32.mxu0 0.0
    %1077 = vmatmul.mubr.f32.gmra.mrb[0].mxu0 %v1010
    %v1078 = vpop.f32.mrb[0].mxu0
    %v1079 = vadd.f32 %v143, %v1078
    %v1080 = vpop.f32.mrb[0].mxu0
    %1081 = vdwg.mxu0
    %v1082 = vadd.f32 %v923, %v1003
    %v1083 = vxor.u32 %v1082, 2147483648
    %v1084 = vmul.f32 %v1083, 1.442695
    %v1085 = vpow.pop %v1084
    %v1086 = vadd.f32 %v1085, 1.0
    %v1087 = vrcp.pop %v1086
    %v1088 = vmul.f32 1.0, %v1087
    %1090 = vrot.lane.b32.xlu0 %v1003, 96
    %v1091 = vpop.permute.xlu0 %1090
    %v1093 = vmul.f32 %v1088, %v1091
    %1095 = vrot.lane.b32.xlu0 %v1093, 32
    %v1096 = vpop.permute.xlu0 %1095
    %v1098 = vadd.f32 %v923, %v1096
    %v1099 = vtanh.pop %v1098
    %v1100 = vmul.f32 %v930, %v1099
    %v1101 = vsub.f32 1.0, %v930
    %v1102 = vmul.f32 %v1101, %v898
    %v1103 = vadd.f32 %v1100, %v1102
    %v1105 = vrot.slane %v1079, 7
    %v1107 = vadd.f32 %v923, %v1105
    %v1108 = vxor.u32 %v1107, 2147483648
    %v1109 = vmul.f32 %v1108, 1.442695
    %v1110 = vpow.pop %v1109
    %v1111 = vadd.f32 %v1110, 1.0
    %v1112 = vrcp.pop %v1111
    %v1113 = vmul.f32 1.0, %v1112
    %1114 = vrot.lane.b32.xlu0 %v1105, 96
    %v1115 = vpop.permute.xlu0 %1114
    %v1117 = vmul.f32 %v1113, %v1115
    %1119 = vrot.lane.b32.xlu0 %v1117, 32
    %v1120 = vpop.permute.xlu0 %1119
    %v1122 = vadd.f32 %v923, %v1120
    %v1123 = vtanh.pop %v1122
    %v1124 = vmul.f32 %v930, %v1123
    %v1125 = vmul.f32 %v1101, %v921
    %v1126 = vadd.f32 %v1124, %v1125
    %s1127 = scalar_lea.vmem [#allocation2], 6
    %v1128 = vld [vmem:[%s1127] sm:$0x3]
    %vm1129 = vcmp.eq.s32.totalorder %v358, 3
    %v1130 = vsel %vm1129, 1, 0
    %vm1131 = vcmp.eq.s32.totalorder %v1130, 1
    %v1132 = vsel %vm1131, %v595, 0.0
    %v1133 = vsel %vm370, %v1132, 0.0
    %1134 = vadd.xlane.f32.xlu0 %v1133
    %v1135 = vpop.xlane.xlu0 %1134
    %1137 = vrot.lane.b32.xlu0 %v1103, 96
    %v1138 = vpop.permute.xlu0 %1137
    %v1139 = vsel %vm157, %v1138, 0
    %1141 = vmatprep.subr.mxu0 0.0
    %1142 = vmatpush1.msra.mxu0 %v571
    %1143 = vmatprep.subr.mxu0 0.0
    %1144 = vmatpush1.msra.mxu0 %v572
    %1145 = vmatprep.subr.mxu0 0.0
    %1146 = vmatpush1.msra.mxu0 %v573
    %1147 = vmatprep.subr.mxu0 0.0
    %1148 = vmatpush1.msra.mxu0 %v574
    %1149 = vmatprep.subr.mxu0 0.0
    %1150 = vmatpush1.msra.mxu0 0.0
    %1151 = vmatprep.subr.mxu0 0.0
    %1152 = vmatpush1.msra.mxu0 0.0
    %1153 = vmatprep.subr.mxu0 0.0
    %1154 = vmatpush1.msra.mxu0 0.0
    %1155 = vmatprep.subr.mxu0 0.0
    %1156 = vmatpush1.msra.mxu0 0.0
    %1157 = vmatprep.subr.mxu0 0.0
    %1158 = vmatpush1.msra.mxu0 0.0
    %1159 = vmatprep.subr.mxu0 0.0
    %1160 = vmatpush1.msra.mxu0 0.0
    %1161 = vmatprep.subr.mxu0 0.0
    %1162 = vmatpush1.msra.mxu0 0.0
    %1163 = vmatprep.subr.mxu0 0.0
    %1164 = vmatpush1.msra.mxu0 0.0
    %1165 = vmatprep.subr.mxu0 0.0
    %1166 = vmatpush1.msra.mxu0 0.0
    %1167 = vmatprep.subr.mxu0 0.0
    %1168 = vmatpush1.msra.mxu0 0.0
    %1169 = vmatprep.subr.mxu0 0.0
    %1170 = vmatpush1.msra.mxu0 0.0
    %1171 = vmatprep.subr.mxu0 0.0
    %1172 = vmatpush1.msra.mxu0 0.0
    %1173 = vmatprep.subr.mxu0 0.0
    %1174 = vmatpush1.msra.mxu0 0.0
    %1175 = vmatprep.subr.mxu0 0.0
    %1176 = vmatpush1.msra.mxu0 0.0
    %1177 = vmatprep.subr.mxu0 0.0
    %1178 = vmatpush1.msra.mxu0 0.0
    %1179 = vmatprep.subr.mxu0 0.0
    %1180 = vmatpush1.msra.mxu0 0.0
    %1181 = vmatprep.subr.mxu0 0.0
    %1182 = vmatpush1.msra.mxu0 0.0
    %1183 = vmatprep.subr.mxu0 0.0
    %1184 = vmatpush1.msra.mxu0 0.0
    %1185 = vmatprep.subr.mxu0 0.0
    %1186 = vmatpush1.msra.mxu0 0.0
    %1187 = vmatprep.subr.mxu0 0.0
    %1188 = vmatpush1.msra.mxu0 0.0
    %1189 = vmatprep.subr.mxu0 0.0
    %1190 = vmatpush1.msra.mxu0 0.0
    %1191 = vmatprep.subr.mxu0 0.0
    %1192 = vmatpush1.msra.mxu0 0.0
    %1193 = vmatprep.subr.mxu0 0.0
    %1194 = vmatpush1.msra.mxu0 0.0
    %1195 = vmatprep.subr.mxu0 0.0
    %1196 = vmatpush1.msra.mxu0 0.0
    %1197 = vmatprep.subr.mxu0 0.0
    %1198 = vmatpush1.msra.mxu0 0.0
    %1199 = vmatprep.subr.mxu0 0.0
    %1200 = vmatpush1.msra.mxu0 0.0
    %1201 = vmatprep.subr.mxu0 0.0
    %1202 = vmatpush1.msra.mxu0 0.0
    %1203 = vmatprep.subr.mxu0 0.0
    %1204 = vmatpush1.msra.mxu0 0.0
    %1205 = vmatprep.mubr.f32.mxu0 0.0
    %1206 = vmatmul.mubr.f32.gmra.mrb[0].mxu0 %v1139
    %v1207 = vpop.f32.mrb[0].mxu0
    %v1208 = vadd.f32 %v143, %v1207
    %v1209 = vpop.f32.mrb[0].mxu0
    %1210 = vdwg.mxu0
    %v1212 = vrot.slane %v1126, 1
    %1213 = vrot.lane.b32.xlu0 %v1212, 96
    %v1214 = vpop.permute.xlu0 %1213
    %v1215 = vsel %vm157, %v1214, 0
    %1217 = vmatprep.subr.mxu0 0.0
    %1218 = vmatpush1.msra.mxu0 %v571
    %1219 = vmatprep.subr.mxu0 0.0
    %1220 = vmatpush1.msra.mxu0 %v572
    %1221 = vmatprep.subr.mxu0 0.0
    %1222 = vmatpush1.msra.mxu0 %v573
    %1223 = vmatprep.subr.mxu0 0.0
    %1224 = vmatpush1.msra.mxu0 %v574
    %1225 = vmatprep.subr.mxu0 0.0
    %1226 = vmatpush1.msra.mxu0 0.0
    %1227 = vmatprep.subr.mxu0 0.0
    %1228 = vmatpush1.msra.mxu0 0.0
    %1229 = vmatprep.subr.mxu0 0.0
    %1230 = vmatpush1.msra.mxu0 0.0
    %1231 = vmatprep.subr.mxu0 0.0
    %1232 = vmatpush1.msra.mxu0 0.0
    %1233 = vmatprep.subr.mxu0 0.0
    %1234 = vmatpush1.msra.mxu0 0.0
    %1235 = vmatprep.subr.mxu0 0.0
    %1236 = vmatpush1.msra.mxu0 0.0
    %1237 = vmatprep.subr.mxu0 0.0
    %1238 = vmatpush1.msra.mxu0 0.0
    %1239 = vmatprep.subr.mxu0 0.0
    %1240 = vmatpush1.msra.mxu0 0.0
    %1241 = vmatprep.subr.mxu0 0.0
    %1242 = vmatpush1.msra.mxu0 0.0
    %1243 = vmatprep.subr.mxu0 0.0
    %1244 = vmatpush1.msra.mxu0 0.0
    %1245 = vmatprep.subr.mxu0 0.0
    %1246 = vmatpush1.msra.mxu0 0.0
    %1247 = vmatprep.subr.mxu0 0.0
    %1248 = vmatpush1.msra.mxu0 0.0
    %1249 = vmatprep.subr.mxu0 0.0
    %1250 = vmatpush1.msra.mxu0 0.0
    %1251 = vmatprep.subr.mxu0 0.0
    %1252 = vmatpush1.msra.mxu0 0.0
    %1253 = vmatprep.subr.mxu0 0.0
    %1254 = vmatpush1.msra.mxu0 0.0
    %1255 = vmatprep.subr.mxu0 0.0
    %1256 = vmatpush1.msra.mxu0 0.0
    %1257 = vmatprep.subr.mxu0 0.0
    %1258 = vmatpush1.msra.mxu0 0.0
    %1259 = vmatprep.subr.mxu0 0.0
    %1260 = vmatpush1.msra.mxu0 0.0
    %1261 = vmatprep.subr.mxu0 0.0
    %1262 = vmatpush1.msra.mxu0 0.0
    %1263 = vmatprep.subr.mxu0 0.0
    %1264 = vmatpush1.msra.mxu0 0.0
    %1265 = vmatprep.subr.mxu0 0.0
    %1266 = vmatpush1.msra.mxu0 0.0
    %1267 = vmatprep.subr.mxu0 0.0
    %1268 = vmatpush1.msra.mxu0 0.0
    %1269 = vmatprep.subr.mxu0 0.0
    %1270 = vmatpush1.msra.mxu0 0.0
    %1271 = vmatprep.subr.mxu0 0.0
    %1272 = vmatpush1.msra.mxu0 0.0
    %1273 = vmatprep.subr.mxu0 0.0
    %1274 = vmatpush1.msra.mxu0 0.0
    %1275 = vmatprep.subr.mxu0 0.0
    %1276 = vmatpush1.msra.mxu0 0.0
    %1277 = vmatprep.subr.mxu0 0.0
    %1278 = vmatpush1.msra.mxu0 0.0
    %1279 = vmatprep.subr.mxu0 0.0
    %1280 = vmatpush1.msra.mxu0 0.0
    %1281 = vmatprep.mubr.f32.mxu0 0.0
    %1282 = vmatmul.mubr.f32.gmra.mrb[0].mxu0 %v1215
    %v1283 = vpop.f32.mrb[0].mxu0
    %v1284 = vadd.f32 %v143, %v1283
    %v1285 = vpop.f32.mrb[0].mxu0
    %1286 = vdwg.mxu0
    %v1287 = vadd.f32 %v1128, %v1208
    %v1288 = vxor.u32 %v1287, 2147483648
    %v1289 = vmul.f32 %v1288, 1.442695
    %v1290 = vpow.pop %v1289
    %v1291 = vadd.f32 %v1290, 1.0
    %v1292 = vrcp.pop %v1291
    %v1293 = vmul.f32 1.0, %v1292
    %1295 = vrot.lane.b32.xlu0 %v1208, 96
    %v1296 = vpop.permute.xlu0 %1295
    %v1298 = vmul.f32 %v1293, %v1296
    %1300 = vrot.lane.b32.xlu0 %v1298, 32
    %v1301 = vpop.permute.xlu0 %1300
    %v1303 = vadd.f32 %v1128, %v1301
    %v1304 = vtanh.pop %v1303
    %v1305 = vmul.f32 %v1135, %v1304
    %v1306 = vsub.f32 1.0, %v1135
    %v1307 = vmul.f32 %v1306, %v1103
    %v1308 = vadd.f32 %v1305, %v1307
    %v1310 = vrot.slane %v1284, 7
    %v1312 = vadd.f32 %v1128, %v1310
    %v1313 = vxor.u32 %v1312, 2147483648
    %v1314 = vmul.f32 %v1313, 1.442695
    %v1315 = vpow.pop %v1314
    %v1316 = vadd.f32 %v1315, 1.0
    %v1317 = vrcp.pop %v1316
    %v1318 = vmul.f32 1.0, %v1317
    %1319 = vrot.lane.b32.xlu0 %v1310, 96
    %v1320 = vpop.permute.xlu0 %1319
    %v1322 = vmul.f32 %v1318, %v1320
    %1324 = vrot.lane.b32.xlu0 %v1322, 32
    %v1325 = vpop.permute.xlu0 %1324
    %v1327 = vadd.f32 %v1128, %v1325
    %v1328 = vtanh.pop %v1327
    %v1329 = vmul.f32 %v1135, %v1328
    %v1330 = vmul.f32 %v1306, %v1126
    %v1331 = vadd.f32 %v1329, %v1330
    %s1332 = scalar_lea.vmem [#allocation2], 8
    %v1333 = vld [vmem:[%s1332] sm:$0x3]
    %vm1334 = vcmp.eq.s32.totalorder %v358, 4
    %v1335 = vsel %vm1334, 1, 0
    %vm1336 = vcmp.eq.s32.totalorder %v1335, 1
    %v1337 = vsel %vm1336, %v595, 0.0
    %v1338 = vsel %vm370, %v1337, 0.0
    %1339 = vadd.xlane.f32.xlu0 %v1338
    %v1340 = vpop.xlane.xlu0 %1339
    %1342 = vrot.lane.b32.xlu0 %v1308, 96
    %v1343 = vpop.permute.xlu0 %1342
    %v1344 = vsel %vm157, %v1343, 0
    %1346 = vmatprep.subr.mxu0 0.0
    %1347 = vmatpush1.msra.mxu0 %v571
    %1348 = vmatprep.subr.mxu0 0.0
    %1349 = vmatpush1.msra.mxu0 %v572
    %1350 = vmatprep.subr.mxu0 0.0
    %1351 = vmatpush1.msra.mxu0 %v573
    %1352 = vmatprep.subr.mxu0 0.0
    %1353 = vmatpush1.msra.mxu0 %v574
    %1354 = vmatprep.subr.mxu0 0.0
    %1355 = vmatpush1.msra.mxu0 0.0
    %1356 = vmatprep.subr.mxu0 0.0
    %1357 = vmatpush1.msra.mxu0 0.0
    %1358 = vmatprep.subr.mxu0 0.0
    %1359 = vmatpush1.msra.mxu0 0.0
    %1360 = vmatprep.subr.mxu0 0.0
    %1361 = vmatpush1.msra.mxu0 0.0
    %1362 = vmatprep.subr.mxu0 0.0
    %1363 = vmatpush1.msra.mxu0 0.0
    %1364 = vmatprep.subr.mxu0 0.0
    %1365 = vmatpush1.msra.mxu0 0.0
    %1366 = vmatprep.subr.mxu0 0.0
    %1367 = vmatpush1.msra.mxu0 0.0
    %1368 = vmatprep.subr.mxu0 0.0
    %1369 = vmatpush1.msra.mxu0 0.0
    %1370 = vmatprep.subr.mxu0 0.0
    %1371 = vmatpush1.msra.mxu0 0.0
    %1372 = vmatprep.subr.mxu0 0.0
    %1373 = vmatpush1.msra.mxu0 0.0
    %1374 = vmatprep.subr.mxu0 0.0
    %1375 = vmatpush1.msra.mxu0 0.0
    %1376 = vmatprep.subr.mxu0 0.0
    %1377 = vmatpush1.msra.mxu0 0.0
    %1378 = vmatprep.subr.mxu0 0.0
    %1379 = vmatpush1.msra.mxu0 0.0
    %1380 = vmatprep.subr.mxu0 0.0
    %1381 = vmatpush1.msra.mxu0 0.0
    %1382 = vmatprep.subr.mxu0 0.0
    %1383 = vmatpush1.msra.mxu0 0.0
    %1384 = vmatprep.subr.mxu0 0.0
    %1385 = vmatpush1.msra.mxu0 0.0
    %1386 = vmatprep.subr.mxu0 0.0
    %1387 = vmatpush1.msra.mxu0 0.0
    %1388 = vmatprep.subr.mxu0 0.0
    %1389 = vmatpush1.msra.mxu0 0.0
    %1390 = vmatprep.subr.mxu0 0.0
    %1391 = vmatpush1.msra.mxu0 0.0
    %1392 = vmatprep.subr.mxu0 0.0
    %1393 = vmatpush1.msra.mxu0 0.0
    %1394 = vmatprep.subr.mxu0 0.0
    %1395 = vmatpush1.msra.mxu0 0.0
    %1396 = vmatprep.subr.mxu0 0.0
    %1397 = vmatpush1.msra.mxu0 0.0
    %1398 = vmatprep.subr.mxu0 0.0
    %1399 = vmatpush1.msra.mxu0 0.0
    %1400 = vmatprep.subr.mxu0 0.0
    %1401 = vmatpush1.msra.mxu0 0.0
    %1402 = vmatprep.subr.mxu0 0.0
    %1403 = vmatpush1.msra.mxu0 0.0
    %1404 = vmatprep.subr.mxu0 0.0
    %1405 = vmatpush1.msra.mxu0 0.0
    %1406 = vmatprep.subr.mxu0 0.0
    %1407 = vmatpush1.msra.mxu0 0.0
    %1408 = vmatprep.subr.mxu0 0.0
    %1409 = vmatpush1.msra.mxu0 0.0
    %1410 = vmatprep.mubr.f32.mxu0 0.0
    %1411 = vmatmul.mubr.f32.gmra.mrb[0].mxu0 %v1344
    %v1412 = vpop.f32.mrb[0].mxu0
    %v1413 = vadd.f32 %v143, %v1412
    %v1414 = vpop.f32.mrb[0].mxu0
    %1415 = vdwg.mxu0
    %v1417 = vrot.slane %v1331, 1
    %1418 = vrot.lane.b32.xlu0 %v1417, 96
    %v1419 = vpop.permute.xlu0 %1418
    %v1420 = vsel %vm157, %v1419, 0
    %1422 = vmatprep.subr.mxu0 0.0
    %1423 = vmatpush1.msra.mxu0 %v571
    %1424 = vmatprep.subr.mxu0 0.0
    %1425 = vmatpush1.msra.mxu0 %v572
    %1426 = vmatprep.subr.mxu0 0.0
    %1427 = vmatpush1.msra.mxu0 %v573
    %1428 = vmatprep.subr.mxu0 0.0
    %1429 = vmatpush1.msra.mxu0 %v574
    %1430 = vmatprep.subr.mxu0 0.0
    %1431 = vmatpush1.msra.mxu0 0.0
    %1432 = vmatprep.subr.mxu0 0.0
    %1433 = vmatpush1.msra.mxu0 0.0
    %1434 = vmatprep.subr.mxu0 0.0
    %1435 = vmatpush1.msra.mxu0 0.0
    %1436 = vmatprep.subr.mxu0 0.0
    %1437 = vmatpush1.msra.mxu0 0.0
    %1438 = vmatprep.subr.mxu0 0.0
    %1439 = vmatpush1.msra.mxu0 0.0
    %1440 = vmatprep.subr.mxu0 0.0
    %1441 = vmatpush1.msra.mxu0 0.0
    %1442 = vmatprep.subr.mxu0 0.0
    %1443 = vmatpush1.msra.mxu0 0.0
    %1444 = vmatprep.subr.mxu0 0.0
    %1445 = vmatpush1.msra.mxu0 0.0
    %1446 = vmatprep.subr.mxu0 0.0
    %1447 = vmatpush1.msra.mxu0 0.0
    %1448 = vmatprep.subr.mxu0 0.0
    %1449 = vmatpush1.msra.mxu0 0.0
    %1450 = vmatprep.subr.mxu0 0.0
    %1451 = vmatpush1.msra.mxu0 0.0
    %1452 = vmatprep.subr.mxu0 0.0
    %1453 = vmatpush1.msra.mxu0 0.0
    %1454 = vmatprep.subr.mxu0 0.0
    %1455 = vmatpush1.msra.mxu0 0.0
    %1456 = vmatprep.subr.mxu0 0.0
    %1457 = vmatpush1.msra.mxu0 0.0
    %1458 = vmatprep.subr.mxu0 0.0
    %1459 = vmatpush1.msra.mxu0 0.0
    %1460 = vmatprep.subr.mxu0 0.0
    %1461 = vmatpush1.msra.mxu0 0.0
    %1462 = vmatprep.subr.mxu0 0.0
    %1463 = vmatpush1.msra.mxu0 0.0
    %1464 = vmatprep.subr.mxu0 0.0
    %1465 = vmatpush1.msra.mxu0 0.0
    %1466 = vmatprep.subr.mxu0 0.0
    %1467 = vmatpush1.msra.mxu0 0.0
    %1468 = vmatprep.subr.mxu0 0.0
    %1469 = vmatpush1.msra.mxu0 0.0
    %1470 = vmatprep.subr.mxu0 0.0
    %1471 = vmatpush1.msra.mxu0 0.0
    %1472 = vmatprep.subr.mxu0 0.0
    %1473 = vmatpush1.msra.mxu0 0.0
    %1474 = vmatprep.subr.mxu0 0.0
    %1475 = vmatpush1.msra.mxu0 0.0
    %1476 = vmatprep.subr.mxu0 0.0
    %1477 = vmatpush1.msra.mxu0 0.0
    %1478 = vmatprep.subr.mxu0 0.0
    %1479 = vmatpush1.msra.mxu0 0.0
    %1480 = vmatprep.subr.mxu0 0.0
    %1481 = vmatpush1.msra.mxu0 0.0
    %1482 = vmatprep.subr.mxu0 0.0
    %1483 = vmatpush1.msra.mxu0 0.0
    %1484 = vmatprep.subr.mxu0 0.0
    %1485 = vmatpush1.msra.mxu0 0.0
    %1486 = vmatprep.mubr.f32.mxu0 0.0
    %1487 = vmatmul.mubr.f32.gmra.mrb[0].mxu0 %v1420
    %v1488 = vpop.f32.mrb[0].mxu0
    %v1489 = vadd.f32 %v143, %v1488
    %v1490 = vpop.f32.mrb[0].mxu0
    %1491 = vdwg.mxu0
    %v1492 = vadd.f32 %v1333, %v1413
    %v1493 = vxor.u32 %v1492, 2147483648
    %v1494 = vmul.f32 %v1493, 1.442695
    %v1495 = vpow.pop %v1494
    %v1496 = vadd.f32 %v1495, 1.0
    %v1497 = vrcp.pop %v1496
    %v1498 = vmul.f32 1.0, %v1497
    %1500 = vrot.lane.b32.xlu0 %v1413, 96
    %v1501 = vpop.permute.xlu0 %1500
    %v1503 = vmul.f32 %v1498, %v1501
    %1505 = vrot.lane.b32.xlu0 %v1503, 32
    %v1506 = vpop.permute.xlu0 %1505
    %v1508 = vadd.f32 %v1333, %v1506
    %v1509 = vtanh.pop %v1508
    %v1510 = vmul.f32 %v1340, %v1509
    %v1511 = vsub.f32 1.0, %v1340
    %v1512 = vmul.f32 %v1511, %v1308
    %v1513 = vadd.f32 %v1510, %v1512
    %v1515 = vrot.slane %v1489, 7
    %v1517 = vadd.f32 %v1333, %v1515
    %v1518 = vxor.u32 %v1517, 2147483648
    %v1519 = vmul.f32 %v1518, 1.442695
    %v1520 = vpow.pop %v1519
    %v1521 = vadd.f32 %v1520, 1.0
    %v1522 = vrcp.pop %v1521
    %v1523 = vmul.f32 1.0, %v1522
    %1524 = vrot.lane.b32.xlu0 %v1515, 96
    %v1525 = vpop.permute.xlu0 %1524
    %v1527 = vmul.f32 %v1523, %v1525
    %1529 = vrot.lane.b32.xlu0 %v1527, 32
    %v1530 = vpop.permute.xlu0 %1529
    %v1532 = vadd.f32 %v1333, %v1530
    %v1533 = vtanh.pop %v1532
    %v1534 = vmul.f32 %v1340, %v1533
    %v1535 = vmul.f32 %v1511, %v1331
    %v1536 = vadd.f32 %v1534, %v1535
    %s1537 = scalar_lea.vmem [#allocation2], 10
    %v1538 = vld [vmem:[%s1537] sm:$0x3]
    %vm1539 = vcmp.eq.s32.totalorder %v358, 5
    %v1540 = vsel %vm1539, 1, 0
    %vm1541 = vcmp.eq.s32.totalorder %v1540, 1
    %v1542 = vsel %vm1541, %v595, 0.0
    %v1543 = vsel %vm370, %v1542, 0.0
    %1544 = vadd.xlane.f32.xlu0 %v1543
    %v1545 = vpop.xlane.xlu0 %1544
    %1547 = vrot.lane.b32.xlu0 %v1513, 96
    %v1548 = vpop.permute.xlu0 %1547
    %v1549 = vsel %vm157, %v1548, 0
    %1551 = vmatprep.subr.mxu0 0.0
    %1552 = vmatpush1.msra.mxu0 %v571
    %1553 = vmatprep.subr.mxu0 0.0
    %1554 = vmatpush1.msra.mxu0 %v572
    %1555 = vmatprep.subr.mxu0 0.0
    %1556 = vmatpush1.msra.mxu0 %v573
    %1557 = vmatprep.subr.mxu0 0.0
    %1558 = vmatpush1.msra.mxu0 %v574
    %1559 = vmatprep.subr.mxu0 0.0
    %1560 = vmatpush1.msra.mxu0 0.0
    %1561 = vmatprep.subr.mxu0 0.0
    %1562 = vmatpush1.msra.mxu0 0.0
    %1563 = vmatprep.subr.mxu0 0.0
    %1564 = vmatpush1.msra.mxu0 0.0
    %1565 = vmatprep.subr.mxu0 0.0
    %1566 = vmatpush1.msra.mxu0 0.0
    %1567 = vmatprep.subr.mxu0 0.0
    %1568 = vmatpush1.msra.mxu0 0.0
    %1569 = vmatprep.subr.mxu0 0.0
    %1570 = vmatpush1.msra.mxu0 0.0
    %1571 = vmatprep.subr.mxu0 0.0
    %1572 = vmatpush1.msra.mxu0 0.0
    %1573 = vmatprep.subr.mxu0 0.0
    %1574 = vmatpush1.msra.mxu0 0.0
    %1575 = vmatprep.subr.mxu0 0.0
    %1576 = vmatpush1.msra.mxu0 0.0
    %1577 = vmatprep.subr.mxu0 0.0
    %1578 = vmatpush1.msra.mxu0 0.0
    %1579 = vmatprep.subr.mxu0 0.0
    %1580 = vmatpush1.msra.mxu0 0.0
    %1581 = vmatprep.subr.mxu0 0.0
    %1582 = vmatpush1.msra.mxu0 0.0
    %1583 = vmatprep.subr.mxu0 0.0
    %1584 = vmatpush1.msra.mxu0 0.0
    %1585 = vmatprep.subr.mxu0 0.0
    %1586 = vmatpush1.msra.mxu0 0.0
    %1587 = vmatprep.subr.mxu0 0.0
    %1588 = vmatpush1.msra.mxu0 0.0
    %1589 = vmatprep.subr.mxu0 0.0
    %1590 = vmatpush1.msra.mxu0 0.0
    %1591 = vmatprep.subr.mxu0 0.0
    %1592 = vmatpush1.msra.mxu0 0.0
    %1593 = vmatprep.subr.mxu0 0.0
    %1594 = vmatpush1.msra.mxu0 0.0
    %1595 = vmatprep.subr.mxu0 0.0
    %1596 = vmatpush1.msra.mxu0 0.0
    %1597 = vmatprep.subr.mxu0 0.0
    %1598 = vmatpush1.msra.mxu0 0.0
    %1599 = vmatprep.subr.mxu0 0.0
    %1600 = vmatpush1.msra.mxu0 0.0
    %1601 = vmatprep.subr.mxu0 0.0
    %1602 = vmatpush1.msra.mxu0 0.0
    %1603 = vmatprep.subr.mxu0 0.0
    %1604 = vmatpush1.msra.mxu0 0.0
    %1605 = vmatprep.subr.mxu0 0.0
    %1606 = vmatpush1.msra.mxu0 0.0
    %1607 = vmatprep.subr.mxu0 0.0
    %1608 = vmatpush1.msra.mxu0 0.0
    %1609 = vmatprep.subr.mxu0 0.0
    %1610 = vmatpush1.msra.mxu0 0.0
    %1611 = vmatprep.subr.mxu0 0.0
    %1612 = vmatpush1.msra.mxu0 0.0
    %1613 = vmatprep.subr.mxu0 0.0
    %1614 = vmatpush1.msra.mxu0 0.0
    %1615 = vmatprep.mubr.f32.mxu0 0.0
    %1616 = vmatmul.mubr.f32.gmra.mrb[0].mxu0 %v1549
    %v1617 = vpop.f32.mrb[0].mxu0
    %v1618 = vadd.f32 %v143, %v1617
    %v1619 = vpop.f32.mrb[0].mxu0
    %1620 = vdwg.mxu0
    %v1622 = vrot.slane %v1536, 1
    %1623 = vrot.lane.b32.xlu0 %v1622, 96
    %v1624 = vpop.permute.xlu0 %1623
    %v1625 = vsel %vm157, %v1624, 0
    %1627 = vmatprep.subr.mxu0 0.0
    %1628 = vmatpush1.msra.mxu0 %v571
    %1629 = vmatprep.subr.mxu0 0.0
    %1630 = vmatpush1.msra.mxu0 %v572
    %1631 = vmatprep.subr.mxu0 0.0
    %1632 = vmatpush1.msra.mxu0 %v573
    %1633 = vmatprep.subr.mxu0 0.0
    %1634 = vmatpush1.msra.mxu0 %v574
    %1635 = vmatprep.subr.mxu0 0.0
    %1636 = vmatpush1.msra.mxu0 0.0
    %1637 = vmatprep.subr.mxu0 0.0
    %1638 = vmatpush1.msra.mxu0 0.0
    %1639 = vmatprep.subr.mxu0 0.0
    %1640 = vmatpush1.msra.mxu0 0.0
    %1641 = vmatprep.subr.mxu0 0.0
    %1642 = vmatpush1.msra.mxu0 0.0
    %1643 = vmatprep.subr.mxu0 0.0
    %1644 = vmatpush1.msra.mxu0 0.0
    %1645 = vmatprep.subr.mxu0 0.0
    %1646 = vmatpush1.msra.mxu0 0.0
    %1647 = vmatprep.subr.mxu0 0.0
    %1648 = vmatpush1.msra.mxu0 0.0
    %1649 = vmatprep.subr.mxu0 0.0
    %1650 = vmatpush1.msra.mxu0 0.0
    %1651 = vmatprep.subr.mxu0 0.0
    %1652 = vmatpush1.msra.mxu0 0.0
    %1653 = vmatprep.subr.mxu0 0.0
    %1654 = vmatpush1.msra.mxu0 0.0
    %1655 = vmatprep.subr.mxu0 0.0
    %1656 = vmatpush1.msra.mxu0 0.0
    %1657 = vmatprep.subr.mxu0 0.0
    %1658 = vmatpush1.msra.mxu0 0.0
    %1659 = vmatprep.subr.mxu0 0.0
    %1660 = vmatpush1.msra.mxu0 0.0
    %1661 = vmatprep.subr.mxu0 0.0
    %1662 = vmatpush1.msra.mxu0 0.0
    %1663 = vmatprep.subr.mxu0 0.0
    %1664 = vmatpush1.msra.mxu0 0.0
    %1665 = vmatprep.subr.mxu0 0.0
    %1666 = vmatpush1.msra.mxu0 0.0
    %1667 = vmatprep.subr.mxu0 0.0
    %1668 = vmatpush1.msra.mxu0 0.0
    %1669 = vmatprep.subr.mxu0 0.0
    %1670 = vmatpush1.msra.mxu0 0.0
    %1671 = vmatprep.subr.mxu0 0.0
    %1672 = vmatpush1.msra.mxu0 0.0
    %1673 = vmatprep.subr.mxu0 0.0
    %1674 = vmatpush1.msra.mxu0 0.0
    %1675 = vmatprep.subr.mxu0 0.0
    %1676 = vmatpush1.msra.mxu0 0.0
    %1677 = vmatprep.subr.mxu0 0.0
    %1678 = vmatpush1.msra.mxu0 0.0
    %1679 = vmatprep.subr.mxu0 0.0
    %1680 = vmatpush1.msra.mxu0 0.0
    %1681 = vmatprep.subr.mxu0 0.0
    %1682 = vmatpush1.msra.mxu0 0.0
    %1683 = vmatprep.subr.mxu0 0.0
    %1684 = vmatpush1.msra.mxu0 0.0
    %1685 = vmatprep.subr.mxu0 0.0
    %1686 = vmatpush1.msra.mxu0 0.0
    %1687 = vmatprep.subr.mxu0 0.0
    %1688 = vmatpush1.msra.mxu0 0.0
    %1689 = vmatprep.subr.mxu0 0.0
    %1690 = vmatpush1.msra.mxu0 0.0
    %1691 = vmatprep.mubr.f32.mxu0 0.0
    %1692 = vmatmul.mubr.f32.gmra.mrb[0].mxu0 %v1625
    %v1693 = vpop.f32.mrb[0].mxu0
    %v1694 = vadd.f32 %v143, %v1693
    %v1695 = vpop.f32.mrb[0].mxu0
    %1696 = vdwg.mxu0
    %v1697 = vadd.f32 %v1538, %v1618
    %v1698 = vxor.u32 %v1697, 2147483648
    %v1699 = vmul.f32 %v1698, 1.442695
    %v1700 = vpow.pop %v1699
    %v1701 = vadd.f32 %v1700, 1.0
    %v1702 = vrcp.pop %v1701
    %v1703 = vmul.f32 1.0, %v1702
    %1705 = vrot.lane.b32.xlu0 %v1618, 96
    %v1706 = vpop.permute.xlu0 %1705
    %v1708 = vmul.f32 %v1703, %v1706
    %1710 = vrot.lane.b32.xlu0 %v1708, 32
    %v1711 = vpop.permute.xlu0 %1710
    %v1713 = vadd.f32 %v1538, %v1711
    %v1714 = vtanh.pop %v1713
    %v1715 = vmul.f32 %v1545, %v1714
    %v1716 = vsub.f32 1.0, %v1545
    %v1717 = vmul.f32 %v1716, %v1513
    %v1718 = vadd.f32 %v1715, %v1717
    %v1720 = vrot.slane %v1694, 7
    %v1722 = vadd.f32 %v1538, %v1720
    %v1723 = vxor.u32 %v1722, 2147483648
    %v1724 = vmul.f32 %v1723, 1.442695
    %v1725 = vpow.pop %v1724
    %v1726 = vadd.f32 %v1725, 1.0
    %v1727 = vrcp.pop %v1726
    %v1728 = vmul.f32 1.0, %v1727
    %1729 = vrot.lane.b32.xlu0 %v1720, 96
    %v1730 = vpop.permute.xlu0 %1729
    %v1732 = vmul.f32 %v1728, %v1730
    %1734 = vrot.lane.b32.xlu0 %v1732, 32
    %v1735 = vpop.permute.xlu0 %1734
    %v1737 = vadd.f32 %v1538, %v1735
    %v1738 = vtanh.pop %v1737
    %v1739 = vmul.f32 %v1545, %v1738
    %v1740 = vmul.f32 %v1716, %v1536
    %v1741 = vadd.f32 %v1739, %v1740
    %s1742 = scalar_lea.vmem [#allocation2], 12
    %v1743 = vld [vmem:[%s1742] sm:$0x3]
    %vm1744 = vcmp.eq.s32.totalorder %v358, 6
    %v1745 = vsel %vm1744, 1, 0
    %vm1746 = vcmp.eq.s32.totalorder %v1745, 1
    %v1747 = vsel %vm1746, %v595, 0.0
    %v1748 = vsel %vm370, %v1747, 0.0
    %1749 = vadd.xlane.f32.xlu0 %v1748
    %v1750 = vpop.xlane.xlu0 %1749
    %1752 = vrot.lane.b32.xlu0 %v1718, 96
    %v1753 = vpop.permute.xlu0 %1752
    %v1754 = vsel %vm157, %v1753, 0
    %1756 = vmatprep.subr.mxu0 0.0
    %1757 = vmatpush1.msra.mxu0 %v571
    %1758 = vmatprep.subr.mxu0 0.0
    %1759 = vmatpush1.msra.mxu0 %v572
    %1760 = vmatprep.subr.mxu0 0.0
    %1761 = vmatpush1.msra.mxu0 %v573
    %1762 = vmatprep.subr.mxu0 0.0
    %1763 = vmatpush1.msra.mxu0 %v574
    %1764 = vmatprep.subr.mxu0 0.0
    %1765 = vmatpush1.msra.mxu0 0.0
    %1766 = vmatprep.subr.mxu0 0.0
    %1767 = vmatpush1.msra.mxu0 0.0
    %1768 = vmatprep.subr.mxu0 0.0
    %1769 = vmatpush1.msra.mxu0 0.0
    %1770 = vmatprep.subr.mxu0 0.0
    %1771 = vmatpush1.msra.mxu0 0.0
    %1772 = vmatprep.subr.mxu0 0.0
    %1773 = vmatpush1.msra.mxu0 0.0
    %1774 = vmatprep.subr.mxu0 0.0
    %1775 = vmatpush1.msra.mxu0 0.0
    %1776 = vmatprep.subr.mxu0 0.0
    %1777 = vmatpush1.msra.mxu0 0.0
    %1778 = vmatprep.subr.mxu0 0.0
    %1779 = vmatpush1.msra.mxu0 0.0
    %1780 = vmatprep.subr.mxu0 0.0
    %1781 = vmatpush1.msra.mxu0 0.0
    %1782 = vmatprep.subr.mxu0 0.0
    %1783 = vmatpush1.msra.mxu0 0.0
    %1784 = vmatprep.subr.mxu0 0.0
    %1785 = vmatpush1.msra.mxu0 0.0
    %1786 = vmatprep.subr.mxu0 0.0
    %1787 = vmatpush1.msra.mxu0 0.0
    %1788 = vmatprep.subr.mxu0 0.0
    %1789 = vmatpush1.msra.mxu0 0.0
    %1790 = vmatprep.subr.mxu0 0.0
    %1791 = vmatpush1.msra.mxu0 0.0
    %1792 = vmatprep.subr.mxu0 0.0
    %1793 = vmatpush1.msra.mxu0 0.0
    %1794 = vmatprep.subr.mxu0 0.0
    %1795 = vmatpush1.msra.mxu0 0.0
    %1796 = vmatprep.subr.mxu0 0.0
    %1797 = vmatpush1.msra.mxu0 0.0
    %1798 = vmatprep.subr.mxu0 0.0
    %1799 = vmatpush1.msra.mxu0 0.0
    %1800 = vmatprep.subr.mxu0 0.0
    %1801 = vmatpush1.msra.mxu0 0.0
    %1802 = vmatprep.subr.mxu0 0.0
    %1803 = vmatpush1.msra.mxu0 0.0
    %1804 = vmatprep.subr.mxu0 0.0
    %1805 = vmatpush1.msra.mxu0 0.0
    %1806 = vmatprep.subr.mxu0 0.0
    %1807 = vmatpush1.msra.mxu0 0.0
    %1808 = vmatprep.subr.mxu0 0.0
    %1809 = vmatpush1.msra.mxu0 0.0
    %1810 = vmatprep.subr.mxu0 0.0
    %1811 = vmatpush1.msra.mxu0 0.0
    %1812 = vmatprep.subr.mxu0 0.0
    %1813 = vmatpush1.msra.mxu0 0.0
    %1814 = vmatprep.subr.mxu0 0.0
    %1815 = vmatpush1.msra.mxu0 0.0
    %1816 = vmatprep.subr.mxu0 0.0
    %1817 = vmatpush1.msra.mxu0 0.0
    %1818 = vmatprep.subr.mxu0 0.0
    %1819 = vmatpush1.msra.mxu0 0.0
    %1820 = vmatprep.mubr.f32.mxu0 0.0
    %1821 = vmatmul.mubr.f32.gmra.mrb[0].mxu0 %v1754
    %v1822 = vpop.f32.mrb[0].mxu0
    %v1823 = vadd.f32 %v143, %v1822
    %v1824 = vpop.f32.mrb[0].mxu0
    %1825 = vdwg.mxu0
    %v1827 = vrot.slane %v1741, 1
    %1828 = vrot.lane.b32.xlu0 %v1827, 96
    %v1829 = vpop.permute.xlu0 %1828
    %v1830 = vsel %vm157, %v1829, 0
    %1832 = vmatprep.subr.mxu0 0.0
    %1833 = vmatpush1.msra.mxu0 %v571
    %1834 = vmatprep.subr.mxu0 0.0
    %1835 = vmatpush1.msra.mxu0 %v572
    %1836 = vmatprep.subr.mxu0 0.0
    %1837 = vmatpush1.msra.mxu0 %v573
    %1838 = vmatprep.subr.mxu0 0.0
    %1839 = vmatpush1.msra.mxu0 %v574
    %1840 = vmatprep.subr.mxu0 0.0
    %1841 = vmatpush1.msra.mxu0 0.0
    %1842 = vmatprep.subr.mxu0 0.0
    %1843 = vmatpush1.msra.mxu0 0.0
    %1844 = vmatprep.subr.mxu0 0.0
    %1845 = vmatpush1.msra.mxu0 0.0
    %1846 = vmatprep.subr.mxu0 0.0
    %1847 = vmatpush1.msra.mxu0 0.0
    %1848 = vmatprep.subr.mxu0 0.0
    %1849 = vmatpush1.msra.mxu0 0.0
    %1850 = vmatprep.subr.mxu0 0.0
    %1851 = vmatpush1.msra.mxu0 0.0
    %1852 = vmatprep.subr.mxu0 0.0
    %1853 = vmatpush1.msra.mxu0 0.0
    %1854 = vmatprep.subr.mxu0 0.0
    %1855 = vmatpush1.msra.mxu0 0.0
    %1856 = vmatprep.subr.mxu0 0.0
    %1857 = vmatpush1.msra.mxu0 0.0
    %1858 = vmatprep.subr.mxu0 0.0
    %1859 = vmatpush1.msra.mxu0 0.0
    %1860 = vmatprep.subr.mxu0 0.0
    %1861 = vmatpush1.msra.mxu0 0.0
    %1862 = vmatprep.subr.mxu0 0.0
    %1863 = vmatpush1.msra.mxu0 0.0
    %1864 = vmatprep.subr.mxu0 0.0
    %1865 = vmatpush1.msra.mxu0 0.0
    %1866 = vmatprep.subr.mxu0 0.0
    %1867 = vmatpush1.msra.mxu0 0.0
    %1868 = vmatprep.subr.mxu0 0.0
    %1869 = vmatpush1.msra.mxu0 0.0
    %1870 = vmatprep.subr.mxu0 0.0
    %1871 = vmatpush1.msra.mxu0 0.0
    %1872 = vmatprep.subr.mxu0 0.0
    %1873 = vmatpush1.msra.mxu0 0.0
    %1874 = vmatprep.subr.mxu0 0.0
    %1875 = vmatpush1.msra.mxu0 0.0
    %1876 = vmatprep.subr.mxu0 0.0
    %1877 = vmatpush1.msra.mxu0 0.0
    %1878 = vmatprep.subr.mxu0 0.0
    %1879 = vmatpush1.msra.mxu0 0.0
    %1880 = vmatprep.subr.mxu0 0.0
    %1881 = vmatpush1.msra.mxu0 0.0
    %1882 = vmatprep.subr.mxu0 0.0
    %1883 = vmatpush1.msra.mxu0 0.0
    %1884 = vmatprep.subr.mxu0 0.0
    %1885 = vmatpush1.msra.mxu0 0.0
    %1886 = vmatprep.subr.mxu0 0.0
    %1887 = vmatpush1.msra.mxu0 0.0
    %1888 = vmatprep.subr.mxu0 0.0
    %1889 = vmatpush1.msra.mxu0 0.0
    %1890 = vmatprep.subr.mxu0 0.0
    %1891 = vmatpush1.msra.mxu0 0.0
    %1892 = vmatprep.subr.mxu0 0.0
    %1893 = vmatpush1.msra.mxu0 0.0
    %1894 = vmatprep.subr.mxu0 0.0
    %1895 = vmatpush1.msra.mxu0 0.0
    %1896 = vmatprep.mubr.f32.mxu0 0.0
    %1897 = vmatmul.mubr.f32.gmra.mrb[0].mxu0 %v1830
    %v1898 = vpop.f32.mrb[0].mxu0
    %v1899 = vadd.f32 %v143, %v1898
    %v1900 = vpop.f32.mrb[0].mxu0
    %1901 = vdwg.mxu0
    %v1902 = vadd.f32 %v1743, %v1823
    %v1903 = vxor.u32 %v1902, 2147483648
    %v1904 = vmul.f32 %v1903, 1.442695
    %v1905 = vpow.pop %v1904
    %v1906 = vadd.f32 %v1905, 1.0
    %v1907 = vrcp.pop %v1906
    %v1908 = vmul.f32 1.0, %v1907
    %1910 = vrot.lane.b32.xlu0 %v1823, 96
    %v1911 = vpop.permute.xlu0 %1910
    %v1913 = vmul.f32 %v1908, %v1911
    %1915 = vrot.lane.b32.xlu0 %v1913, 32
    %v1916 = vpop.permute.xlu0 %1915
    %v1918 = vadd.f32 %v1743, %v1916
    %v1919 = vtanh.pop %v1918
    %v1920 = vmul.f32 %v1750, %v1919
    %v1921 = vsub.f32 1.0, %v1750
    %v1922 = vmul.f32 %v1921, %v1718
    %v1923 = vadd.f32 %v1920, %v1922
    %v1925 = vrot.slane %v1899, 7
    %v1927 = vadd.f32 %v1743, %v1925
    %v1928 = vxor.u32 %v1927, 2147483648
    %v1929 = vmul.f32 %v1928, 1.442695
    %v1930 = vpow.pop %v1929
    %v1931 = vadd.f32 %v1930, 1.0
    %v1932 = vrcp.pop %v1931
    %v1933 = vmul.f32 1.0, %v1932
    %1934 = vrot.lane.b32.xlu0 %v1925, 96
    %v1935 = vpop.permute.xlu0 %1934
    %v1937 = vmul.f32 %v1933, %v1935
    %1939 = vrot.lane.b32.xlu0 %v1937, 32
    %v1940 = vpop.permute.xlu0 %1939
    %v1942 = vadd.f32 %v1743, %v1940
    %v1943 = vtanh.pop %v1942
    %v1944 = vmul.f32 %v1750, %v1943
    %v1945 = vmul.f32 %v1921, %v1741
    %v1946 = vadd.f32 %v1944, %v1945
    %s1947 = scalar_lea.vmem [#allocation2], 14
    %v1948 = vld [vmem:[%s1947] sm:$0x3]
    %vm1949 = vcmp.eq.s32.totalorder %v358, 7
    %v1950 = vsel %vm1949, 1, 0
    %vm1951 = vcmp.eq.s32.totalorder %v1950, 1
    %v1952 = vsel %vm1951, %v595, 0.0
    %v1953 = vsel %vm370, %v1952, 0.0
    %1954 = vadd.xlane.f32.xlu0 %v1953
    %v1955 = vpop.xlane.xlu0 %1954
    %1957 = vrot.lane.b32.xlu0 %v1923, 96
    %v1958 = vpop.permute.xlu0 %1957
    %v1959 = vsel %vm157, %v1958, 0
    %1961 = vmatprep.subr.mxu0 0.0
    %1962 = vmatpush1.msra.mxu0 %v571
    %1963 = vmatprep.subr.mxu0 0.0
    %1964 = vmatpush1.msra.mxu0 %v572
    %1965 = vmatprep.subr.mxu0 0.0
    %1966 = vmatpush1.msra.mxu0 %v573
    %1967 = vmatprep.subr.mxu0 0.0
    %1968 = vmatpush1.msra.mxu0 %v574
    %1969 = vmatprep.subr.mxu0 0.0
    %1970 = vmatpush1.msra.mxu0 0.0
    %1971 = vmatprep.subr.mxu0 0.0
    %1972 = vmatpush1.msra.mxu0 0.0
    %1973 = vmatprep.subr.mxu0 0.0
    %1974 = vmatpush1.msra.mxu0 0.0
    %1975 = vmatprep.subr.mxu0 0.0
    %1976 = vmatpush1.msra.mxu0 0.0
    %1977 = vmatprep.subr.mxu0 0.0
    %1978 = vmatpush1.msra.mxu0 0.0
    %1979 = vmatprep.subr.mxu0 0.0
    %1980 = vmatpush1.msra.mxu0 0.0
    %1981 = vmatprep.subr.mxu0 0.0
    %1982 = vmatpush1.msra.mxu0 0.0
    %1983 = vmatprep.subr.mxu0 0.0
    %1984 = vmatpush1.msra.mxu0 0.0
    %1985 = vmatprep.subr.mxu0 0.0
    %1986 = vmatpush1.msra.mxu0 0.0
    %1987 = vmatprep.subr.mxu0 0.0
    %1988 = vmatpush1.msra.mxu0 0.0
    %1989 = vmatprep.subr.mxu0 0.0
    %1990 = vmatpush1.msra.mxu0 0.0
    %1991 = vmatprep.subr.mxu0 0.0
    %1992 = vmatpush1.msra.mxu0 0.0
    %1993 = vmatprep.subr.mxu0 0.0
    %1994 = vmatpush1.msra.mxu0 0.0
    %1995 = vmatprep.subr.mxu0 0.0
    %1996 = vmatpush1.msra.mxu0 0.0
    %1997 = vmatprep.subr.mxu0 0.0
    %1998 = vmatpush1.msra.mxu0 0.0
    %1999 = vmatprep.subr.mxu0 0.0
    %2000 = vmatpush1.msra.mxu0 0.0
    %2001 = vmatprep.subr.mxu0 0.0
    %2002 = vmatpush1.msra.mxu0 0.0
    %2003 = vmatprep.subr.mxu0 0.0
    %2004 = vmatpush1.msra.mxu0 0.0
    %2005 = vmatprep.subr.mxu0 0.0
    %2006 = vmatpush1.msra.mxu0 0.0
    %2007 = vmatprep.subr.mxu0 0.0
    %2008 = vmatpush1.msra.mxu0 0.0
    %2009 = vmatprep.subr.mxu0 0.0
    %2010 = vmatpush1.msra.mxu0 0.0
    %2011 = vmatprep.subr.mxu0 0.0
    %2012 = vmatpush1.msra.mxu0 0.0
    %2013 = vmatprep.subr.mxu0 0.0
    %2014 = vmatpush1.msra.mxu0 0.0
    %2015 = vmatprep.subr.mxu0 0.0
    %2016 = vmatpush1.msra.mxu0 0.0
    %2017 = vmatprep.subr.mxu0 0.0
    %2018 = vmatpush1.msra.mxu0 0.0
    %2019 = vmatprep.subr.mxu0 0.0
    %2020 = vmatpush1.msra.mxu0 0.0
    %2021 = vmatprep.subr.mxu0 0.0
    %2022 = vmatpush1.msra.mxu0 0.0
    %2023 = vmatprep.subr.mxu0 0.0
    %2024 = vmatpush1.msra.mxu0 0.0
    %2025 = vmatprep.mubr.f32.mxu0 0.0
    %2026 = vmatmul.mubr.f32.gmra.mrb[0].mxu0 %v1959
    %v2027 = vpop.f32.mrb[0].mxu0
    %v2028 = vadd.f32 %v143, %v2027
    %v2029 = vpop.f32.mrb[0].mxu0
    %2030 = vdwg.mxu0
    %v2032 = vrot.slane %v1946, 1
    %2033 = vrot.lane.b32.xlu0 %v2032, 96
    %v2034 = vpop.permute.xlu0 %2033
    %v2035 = vsel %vm157, %v2034, 0
    %2037 = vmatprep.subr.mxu0 0.0
    %2038 = vmatpush1.msra.mxu0 %v571
    %2039 = vmatprep.subr.mxu0 0.0
    %2040 = vmatpush1.msra.mxu0 %v572
    %2041 = vmatprep.subr.mxu0 0.0
    %2042 = vmatpush1.msra.mxu0 %v573
    %2043 = vmatprep.subr.mxu0 0.0
    %2044 = vmatpush1.msra.mxu0 %v574
    %2045 = vmatprep.subr.mxu0 0.0
    %2046 = vmatpush1.msra.mxu0 0.0
    %2047 = vmatprep.subr.mxu0 0.0
    %2048 = vmatpush1.msra.mxu0 0.0
    %2049 = vmatprep.subr.mxu0 0.0
    %2050 = vmatpush1.msra.mxu0 0.0
    %2051 = vmatprep.subr.mxu0 0.0
    %2052 = vmatpush1.msra.mxu0 0.0
    %2053 = vmatprep.subr.mxu0 0.0
    %2054 = vmatpush1.msra.mxu0 0.0
    %2055 = vmatprep.subr.mxu0 0.0
    %2056 = vmatpush1.msra.mxu0 0.0
    %2057 = vmatprep.subr.mxu0 0.0
    %2058 = vmatpush1.msra.mxu0 0.0
    %2059 = vmatprep.subr.mxu0 0.0
    %2060 = vmatpush1.msra.mxu0 0.0
    %2061 = vmatprep.subr.mxu0 0.0
    %2062 = vmatpush1.msra.mxu0 0.0
    %2063 = vmatprep.subr.mxu0 0.0
    %2064 = vmatpush1.msra.mxu0 0.0
    %2065 = vmatprep.subr.mxu0 0.0
    %2066 = vmatpush1.msra.mxu0 0.0
    %2067 = vmatprep.subr.mxu0 0.0
    %2068 = vmatpush1.msra.mxu0 0.0
    %2069 = vmatprep.subr.mxu0 0.0
    %2070 = vmatpush1.msra.mxu0 0.0
    %2071 = vmatprep.subr.mxu0 0.0
    %2072 = vmatpush1.msra.mxu0 0.0
    %2073 = vmatprep.subr.mxu0 0.0
    %2074 = vmatpush1.msra.mxu0 0.0
    %2075 = vmatprep.subr.mxu0 0.0
    %2076 = vmatpush1.msra.mxu0 0.0
    %2077 = vmatprep.subr.mxu0 0.0
    %2078 = vmatpush1.msra.mxu0 0.0
    %2079 = vmatprep.subr.mxu0 0.0
    %2080 = vmatpush1.msra.mxu0 0.0
    %2081 = vmatprep.subr.mxu0 0.0
    %2082 = vmatpush1.msra.mxu0 0.0
    %2083 = vmatprep.subr.mxu0 0.0
    %2084 = vmatpush1.msra.mxu0 0.0
    %2085 = vmatprep.subr.mxu0 0.0
    %2086 = vmatpush1.msra.mxu0 0.0
    %2087 = vmatprep.subr.mxu0 0.0
    %2088 = vmatpush1.msra.mxu0 0.0
    %2089 = vmatprep.subr.mxu0 0.0
    %2090 = vmatpush1.msra.mxu0 0.0
    %2091 = vmatprep.subr.mxu0 0.0
    %2092 = vmatpush1.msra.mxu0 0.0
    %2093 = vmatprep.subr.mxu0 0.0
    %2094 = vmatpush1.msra.mxu0 0.0
    %2095 = vmatprep.subr.mxu0 0.0
    %2096 = vmatpush1.msra.mxu0 0.0
    %2097 = vmatprep.subr.mxu0 0.0
    %2098 = vmatpush1.msra.mxu0 0.0
    %2099 = vmatprep.subr.mxu0 0.0
    %2100 = vmatpush1.msra.mxu0 0.0
    %2101 = vmatprep.mubr.f32.mxu0 0.0
    %2102 = vmatmul.mubr.f32.gmra.mrb[0].mxu0 %v2035
    %v2103 = vpop.f32.mrb[0].mxu0
    %v2104 = vadd.f32 %v143, %v2103
    %v2105 = vpop.f32.mrb[0].mxu0
    %2106 = vdwg.mxu0
    %v2107 = vadd.f32 %v1948, %v2028
    %v2108 = vxor.u32 %v2107, 2147483648
    %v2109 = vmul.f32 %v2108, 1.442695
    %v2110 = vpow.pop %v2109
    %v2111 = vadd.f32 %v2110, 1.0
    %v2112 = vrcp.pop %v2111
    %v2113 = vmul.f32 1.0, %v2112
    %2115 = vrot.lane.b32.xlu0 %v2028, 96
    %v2116 = vpop.permute.xlu0 %2115
    %v2118 = vmul.f32 %v2113, %v2116
    %2120 = vrot.lane.b32.xlu0 %v2118, 32
    %v2121 = vpop.permute.xlu0 %2120
    %v2123 = vadd.f32 %v1948, %v2121
    %v2124 = vtanh.pop %v2123
    %v2125 = vmul.f32 %v1955, %v2124
    %v2126 = vsub.f32 1.0, %v1955
    %v2127 = vmul.f32 %v2126, %v1923
    %v2128 = vadd.f32 %v2125, %v2127
    %v2130 = vrot.slane %v2104, 7
    %v2132 = vadd.f32 %v1948, %v2130
    %v2133 = vxor.u32 %v2132, 2147483648
    %v2134 = vmul.f32 %v2133, 1.442695
    %v2135 = vpow.pop %v2134
    %v2136 = vadd.f32 %v2135, 1.0
    %v2137 = vrcp.pop %v2136
    %v2138 = vmul.f32 1.0, %v2137
    %2139 = vrot.lane.b32.xlu0 %v2130, 96
    %v2140 = vpop.permute.xlu0 %2139
    %v2142 = vmul.f32 %v2138, %v2140
    %2144 = vrot.lane.b32.xlu0 %v2142, 32
    %v2145 = vpop.permute.xlu0 %2144
    %v2147 = vadd.f32 %v1948, %v2145
    %v2148 = vtanh.pop %v2147
    %v2149 = vmul.f32 %v1955, %v2148
    %v2150 = vmul.f32 %v2126, %v1946
    %v2151 = vadd.f32 %v2149, %v2150
    %vm2152 = vcmask 1040384
    %v2153 = vsel %vm2152, %v2128, %v2151
    %v2154 = vld [vmem:[%s7] sm:$0xff]
    %v2155 = vld [vmem:[%s7 + $0x8] sm:$0xff]
    %v2156 = vld [vmem:[%s7 + $0x10] sm:$0xff]
    %v2157 = vld [vmem:[%s7 + $0x18] sm:$0xff]
    %v2158 = vld [vmem:[%s8] sm:$0xff]
    %v2159 = vld [vmem:[%s8 + $0x8] sm:$0xff]
    %v2160 = vld [vmem:[%s8 + $0x10] sm:$0xff]
    %v2161 = vld [vmem:[%s8 + $0x18] sm:$0xff]
    %2163 = vrot.lane.b32.xlu0 %v2153, 96
    %v2164 = vpop.permute.xlu0 %2163
    %v2165 = vsel %vm157, %v2164, 0
    %2167 = vmatprep.subr.mxu0 0.0
    %2168 = vmatpush1.msra.mxu0 %v2158
    %2169 = vmatprep.subr.mxu0 0.0
    %2170 = vmatpush1.msra.mxu0 %v2159
    %2171 = vmatprep.subr.mxu0 0.0
    %2172 = vmatpush1.msra.mxu0 %v2160
    %2173 = vmatprep.subr.mxu0 0.0
    %2174 = vmatpush1.msra.mxu0 %v2161
    %2175 = vmatprep.subr.mxu0 0.0
    %2176 = vmatpush1.msra.mxu0 0.0
    %2177 = vmatprep.subr.mxu0 0.0
    %2178 = vmatpush1.msra.mxu0 0.0
    %2179 = vmatprep.subr.mxu0 0.0
    %2180 = vmatpush1.msra.mxu0 0.0
    %2181 = vmatprep.subr.mxu0 0.0
    %2182 = vmatpush1.msra.mxu0 0.0
    %2183 = vmatprep.subr.mxu0 0.0
    %2184 = vmatpush1.msra.mxu0 0.0
    %2185 = vmatprep.subr.mxu0 0.0
    %2186 = vmatpush1.msra.mxu0 0.0
    %2187 = vmatprep.subr.mxu0 0.0
    %2188 = vmatpush1.msra.mxu0 0.0
    %2189 = vmatprep.subr.mxu0 0.0
    %2190 = vmatpush1.msra.mxu0 0.0
    %2191 = vmatprep.subr.mxu0 0.0
    %2192 = vmatpush1.msra.mxu0 0.0
    %2193 = vmatprep.subr.mxu0 0.0
    %2194 = vmatpush1.msra.mxu0 0.0
    %2195 = vmatprep.subr.mxu0 0.0
    %2196 = vmatpush1.msra.mxu0 0.0
    %2197 = vmatprep.subr.mxu0 0.0
    %2198 = vmatpush1.msra.mxu0 0.0
    %2199 = vmatprep.subr.mxu0 0.0
    %2200 = vmatpush1.msra.mxu0 0.0
    %2201 = vmatprep.subr.mxu0 0.0
    %2202 = vmatpush1.msra.mxu0 0.0
    %2203 = vmatprep.subr.mxu0 0.0
    %2204 = vmatpush1.msra.mxu0 0.0
    %2205 = vmatprep.subr.mxu0 0.0
    %2206 = vmatpush1.msra.mxu0 0.0
    %2207 = vmatprep.subr.mxu0 0.0
    %2208 = vmatpush1.msra.mxu0 0.0
    %2209 = vmatprep.subr.mxu0 0.0
    %2210 = vmatpush1.msra.mxu0 0.0
    %2211 = vmatprep.subr.mxu0 0.0
    %2212 = vmatpush1.msra.mxu0 0.0
    %2213 = vmatprep.subr.mxu0 0.0
    %2214 = vmatpush1.msra.mxu0 0.0
    %2215 = vmatprep.subr.mxu0 0.0
    %2216 = vmatpush1.msra.mxu0 0.0
    %2217 = vmatprep.subr.mxu0 0.0
    %2218 = vmatpush1.msra.mxu0 0.0
    %2219 = vmatprep.subr.mxu0 0.0
    %2220 = vmatpush1.msra.mxu0 0.0
    %2221 = vmatprep.subr.mxu0 0.0
    %2222 = vmatpush1.msra.mxu0 0.0
    %2223 = vmatprep.subr.mxu0 0.0
    %2224 = vmatpush1.msra.mxu0 0.0
    %2225 = vmatprep.subr.mxu0 0.0
    %2226 = vmatpush1.msra.mxu0 0.0
    %2227 = vmatprep.subr.mxu0 0.0
    %2228 = vmatpush1.msra.mxu0 0.0
    %2229 = vmatprep.subr.mxu0 0.0
    %2230 = vmatpush1.msra.mxu0 0.0
    %2231 = vmatprep.mubr.f32.mxu0 0.0
    %2232 = vmatmul.mubr.f32.gmra.mrb[0].mxu0 %v2165
    %v2233 = vpop.f32.mrb[0].mxu0
    %v2234 = vadd.f32 0.0, %v2233
    %v2235 = vpop.f32.mrb[0].mxu0
    %2236 = vdwg.mxu0
    %v2238 = vsel %vm157, %v43, 0
    %2240 = vmatprep.subr.mxu0 0.0
    %2241 = vmatpush1.msra.mxu0 %v2154
    %2242 = vmatprep.subr.mxu0 0.0
    %2243 = vmatpush1.msra.mxu0 %v2155
    %2244 = vmatprep.subr.mxu0 0.0
    %2245 = vmatpush1.msra.mxu0 %v2156
    %2246 = vmatprep.subr.mxu0 0.0
    %2247 = vmatpush1.msra.mxu0 %v2157
    %2248 = vmatprep.subr.mxu0 0.0
    %2249 = vmatpush1.msra.mxu0 0.0
    %2250 = vmatprep.subr.mxu0 0.0
    %2251 = vmatpush1.msra.mxu0 0.0
    %2252 = vmatprep.subr.mxu0 0.0
    %2253 = vmatpush1.msra.mxu0 0.0
    %2254 = vmatprep.subr.mxu0 0.0
    %2255 = vmatpush1.msra.mxu0 0.0
    %2256 = vmatprep.subr.mxu0 0.0
    %2257 = vmatpush1.msra.mxu0 0.0
    %2258 = vmatprep.subr.mxu0 0.0
    %2259 = vmatpush1.msra.mxu0 0.0
    %2260 = vmatprep.subr.mxu0 0.0
    %2261 = vmatpush1.msra.mxu0 0.0
    %2262 = vmatprep.subr.mxu0 0.0
    %2263 = vmatpush1.msra.mxu0 0.0
    %2264 = vmatprep.subr.mxu0 0.0
    %2265 = vmatpush1.msra.mxu0 0.0
    %2266 = vmatprep.subr.mxu0 0.0
    %2267 = vmatpush1.msra.mxu0 0.0
    %2268 = vmatprep.subr.mxu0 0.0
    %2269 = vmatpush1.msra.mxu0 0.0
    %2270 = vmatprep.subr.mxu0 0.0
    %2271 = vmatpush1.msra.mxu0 0.0
    %2272 = vmatprep.subr.mxu0 0.0
    %2273 = vmatpush1.msra.mxu0 0.0
    %2274 = vmatprep.subr.mxu0 0.0
    %2275 = vmatpush1.msra.mxu0 0.0
    %2276 = vmatprep.subr.mxu0 0.0
    %2277 = vmatpush1.msra.mxu0 0.0
    %2278 = vmatprep.subr.mxu0 0.0
    %2279 = vmatpush1.msra.mxu0 0.0
    %2280 = vmatprep.subr.mxu0 0.0
    %2281 = vmatpush1.msra.mxu0 0.0
    %2282 = vmatprep.subr.mxu0 0.0
    %2283 = vmatpush1.msra.mxu0 0.0
    %2284 = vmatprep.subr.mxu0 0.0
    %2285 = vmatpush1.msra.mxu0 0.0
    %2286 = vmatprep.subr.mxu0 0.0
    %2287 = vmatpush1.msra.mxu0 0.0
    %2288 = vmatprep.subr.mxu0 0.0
    %2289 = vmatpush1.msra.mxu0 0.0
    %2290 = vmatprep.subr.mxu0 0.0
    %2291 = vmatpush1.msra.mxu0 0.0
    %2292 = vmatprep.subr.mxu0 0.0
    %2293 = vmatpush1.msra.mxu0 0.0
    %2294 = vmatprep.subr.mxu0 0.0
    %2295 = vmatpush1.msra.mxu0 0.0
    %2296 = vmatprep.subr.mxu0 0.0
    %2297 = vmatpush1.msra.mxu0 0.0
    %2298 = vmatprep.subr.mxu0 0.0
    %2299 = vmatpush1.msra.mxu0 0.0
    %2300 = vmatprep.subr.mxu0 0.0
    %2301 = vmatpush1.msra.mxu0 0.0
    %2302 = vmatprep.subr.mxu0 0.0
    %2303 = vmatpush1.msra.mxu0 0.0
    %2304 = vmatprep.mubr.f32.mxu0 0.0
    %2305 = vmatmul.mubr.f32.gmra.mrb[0].mxu0 %v2238
    %v2306 = vpop.f32.mrb[0].mxu0
    %v2307 = vadd.f32 %v2234, %v2306
    %v2308 = vpop.f32.mrb[0].mxu0
    %2309 = vdwg.mxu0
    %v2310 = vld [vmem:[%s9] sm:$0xff]
    %v2311 = vld [vmem:[%s9 + $0x8] sm:$0xff]
    %v2312 = vld [vmem:[%s9 + $0x10] sm:$0xff]
    %v2313 = vld [vmem:[%s9 + $0x18] sm:$0xff]
    %v2315 = vsel %vm157, %v42, 0
    %2317 = vmatprep.subr.mxu0 0.0
    %2318 = vmatpush1.msra.mxu0 %v2310
    %2319 = vmatprep.subr.mxu0 0.0
    %2320 = vmatpush1.msra.mxu0 %v2311
    %2321 = vmatprep.subr.mxu0 0.0
    %2322 = vmatpush1.msra.mxu0 %v2312
    %2323 = vmatprep.subr.mxu0 0.0
    %2324 = vmatpush1.msra.mxu0 %v2313
    %2325 = vmatprep.subr.mxu0 0.0
    %2326 = vmatpush1.msra.mxu0 0.0
    %2327 = vmatprep.subr.mxu0 0.0
    %2328 = vmatpush1.msra.mxu0 0.0
    %2329 = vmatprep.subr.mxu0 0.0
    %2330 = vmatpush1.msra.mxu0 0.0
    %2331 = vmatprep.subr.mxu0 0.0
    %2332 = vmatpush1.msra.mxu0 0.0
    %2333 = vmatprep.subr.mxu0 0.0
    %2334 = vmatpush1.msra.mxu0 0.0
    %2335 = vmatprep.subr.mxu0 0.0
    %2336 = vmatpush1.msra.mxu0 0.0
    %2337 = vmatprep.subr.mxu0 0.0
    %2338 = vmatpush1.msra.mxu0 0.0
    %2339 = vmatprep.subr.mxu0 0.0
    %2340 = vmatpush1.msra.mxu0 0.0
    %2341 = vmatprep.subr.mxu0 0.0
    %2342 = vmatpush1.msra.mxu0 0.0
    %2343 = vmatprep.subr.mxu0 0.0
    %2344 = vmatpush1.msra.mxu0 0.0
    %2345 = vmatprep.subr.mxu0 0.0
    %2346 = vmatpush1.msra.mxu0 0.0
    %2347 = vmatprep.subr.mxu0 0.0
    %2348 = vmatpush1.msra.mxu0 0.0
    %2349 = vmatprep.subr.mxu0 0.0
    %2350 = vmatpush1.msra.mxu0 0.0
    %2351 = vmatprep.subr.mxu0 0.0
    %2352 = vmatpush1.msra.mxu0 0.0
    %2353 = vmatprep.subr.mxu0 0.0
    %2354 = vmatpush1.msra.mxu0 0.0
    %2355 = vmatprep.subr.mxu0 0.0
    %2356 = vmatpush1.msra.mxu0 0.0
    %2357 = vmatprep.subr.mxu0 0.0
    %2358 = vmatpush1.msra.mxu0 0.0
    %2359 = vmatprep.subr.mxu0 0.0
    %2360 = vmatpush1.msra.mxu0 0.0
    %2361 = vmatprep.subr.mxu0 0.0
    %2362 = vmatpush1.msra.mxu0 0.0
    %2363 = vmatprep.subr.mxu0 0.0
    %2364 = vmatpush1.msra.mxu0 0.0
    %2365 = vmatprep.subr.mxu0 0.0
    %2366 = vmatpush1.msra.mxu0 0.0
    %2367 = vmatprep.subr.mxu0 0.0
    %2368 = vmatpush1.msra.mxu0 0.0
    %2369 = vmatprep.subr.mxu0 0.0
    %2370 = vmatpush1.msra.mxu0 0.0
    %2371 = vmatprep.subr.mxu0 0.0
    %2372 = vmatpush1.msra.mxu0 0.0
    %2373 = vmatprep.subr.mxu0 0.0
    %2374 = vmatpush1.msra.mxu0 0.0
    %2375 = vmatprep.subr.mxu0 0.0
    %2376 = vmatpush1.msra.mxu0 0.0
    %2377 = vmatprep.subr.mxu0 0.0
    %2378 = vmatpush1.msra.mxu0 0.0
    %2379 = vmatprep.subr.mxu0 0.0
    %2380 = vmatpush1.msra.mxu0 0.0
    %2381 = vmatprep.mubr.f32.mxu0 0.0
    %2382 = vmatmul.mubr.f32.gmra.mrb[0].mxu0 %v2315
    %v2383 = vpop.f32.mrb[0].mxu0
    %v2384 = vadd.f32 0.0, %v2383
    %v2385 = vpop.f32.mrb[0].mxu0
    %2386 = vdwg.mxu0
    %v2387 = vadd.f32 %v2307, %v2384
    %v2388 = vlaneseq
    %v2389 = vshrl.u32 %v2388, 7
    %v2390 = vsub.s32 0, %v2389
    %v2391 = vrot.slane %v144, %v2390
    %v2392 = vadd.f32 %v2387, %v2391
    %v2393 = vmax.f32 %v2392, 0.0
    %vm2394 = vcmask 254976
    %2395 = vst.msk [vmem:[#allocation3] sm:$0x3] %vm2394, %v2393
    // Predicated region
    $region46: #{episodic_memory.1} parent=1 // pred_check
      _
    $region47: #{episodic_memory.1} parent=1 // pred_check_branch
      %2397 = sbr.rel (0) target = $region49
    $region48: #{episodic_memory.1} parent=1 // pred_region
      %s2399 = ssub.s32 32, 32
      %2400 = vsyncadd [#allocation4], %s2399
      %s2402 = sshll.u32 [#allocation3], 4
      %s2403 = int_to_ptr.vmem [resolvable:$true] %s2402
      %2405 = dma.vmem_to_hbm [thread:$0]  %s2403, 32, %s11, [#allocation4]
    $region49: #{episodic_memory.1} parent=1 // pred_fallthru
      _
    // Predicated region
    $region50: #{episodic_memory.1} parent=1 // pred_check
      _
    $region51: #{episodic_memory.1} parent=1 // pred_check_branch
      %2407 = sbr.rel (0) target = $region53
    $region52: #{episodic_memory.1} parent=1 // pred_region
      %2408 = dma.done [#allocation4], 32
    $region53: #{episodic_memory.1} parent=1 // pred_fallthru
      _
    %2409 = vsyncpa [#allocation4], 1

</llo_original>
